<compile_context>
chip_gen: v6e
topology: v6e:2x2x1
jax: 0.10.0
libtpu: 0.0.40
codegen_flags: <defaults>
</compile_context>

<pallas_src>
import functools

import numpy as np
import jax
import jax.numpy as jnp
from jax import lax
from jax.experimental import pallas as pl
from jax.experimental.pallas import tpu as pltpu

# bf16 MXU operands (native on v5e/v6e/v7x); accumulation is always f32.
MXU_INPUT_DTYPE = jnp.bfloat16

NEG_INF = -1e30


# ----------------------------- configs ------------------------------------- #
class Config:
    hidden_size = 32
    num_attention_heads = 2
    intermediate_size = 64
    num_hidden_layers = 2
    image_size = 16
    patch_size = 4
    attention_dropout = 0.0          # inference: dropout is identity
    hidden_act = "quick_gelu"        # CLIP default activation
    layer_norm_eps = 1e-5


class AdditionalVisionConfig:
    temporal_size = 2
    if_use_temporal_embed = True
    add_cls_num = 3


def _round_up(x, m):
    return ((x + m - 1) // m) * m


# ----------------------------- Pallas kernel -------------------------------- #
def _encoder_kernel(x_ref, mask_ref, gln_ref,
                    wqkv_ref, wo_ref, w1_ref, w2_ref, vec_ref,
                    hs_ref, pooled_ref,
                    *, n_layers, num_heads, hp, d_valid, eps, batch, sp, mxu_dtype):
    """Fused CLIP-ViP encoder: pre-LN -> [LN1 -> masked ViP attention -> residual -> LN2 ->
    quick-GELU MLP -> residual] x n_layers -> pooled post-LN, all in one grid step.

    Rows are the sublane-stacked batch (B*Sp); the additive mask is block-diagonal over
    batches and reproduces CLIP-ViP forward2 within each batch block. Per-head q/k/v live in
    128-lane-aligned slabs; weight slabs are bf16, accumulation f32. Padded feature lanes stay
    exactly zero (zero-padded params + masked LN centering)."""
    Dp = x_ref.shape[-1]
    Ip = w1_ref.shape[-1]
    HHp = num_heads * hp
    inv_d = 1.0 / float(d_valid)
    lane_valid = lax.broadcasted_iota(jnp.int32, (1, Dp), 1) < d_valid

    def layernorm(x, g, b):
        # mean over the valid D lanes (padded lanes of x are exactly zero);
        # center is masked so padded lanes contribute nothing to the variance.
        mu = jnp.sum(x, axis=-1, keepdims=True) * inv_d
        c = jnp.where(lane_valid, x - mu, 0.0)
        var = jnp.sum(c * c, axis=-1, keepdims=True) * inv_d
        return c * lax.rsqrt(var + eps) * g + b

    def mm(a, b):
        return jnp.dot(a.astype(mxu_dtype), b.astype(mxu_dtype),
                       preferred_element_type=jnp.float32)

    bias = mask_ref[...]                                   # (BSp, BSp) additive block mask

    # ---- pre_layernorm on the embeddings (= hidden_states[0]) ----
    h = layernorm(x_ref[...], gln_ref[0:1, :], gln_ref[1:2, :])
    hs_ref[0] = h

    for l in range(n_layers):                              # layers unrolled in-kernel
        vec = vec_ref[l]                                   # (16, W) biases / LN params (f32)

        # ---- layer_norm1 ----
        xn = layernorm(h, vec[6:7, :Dp], vec[7:8, :Dp])

        # ---- fused QKV projection (attention scale folded into q weights/bias) ----
        qkv = mm(xn, wqkv_ref[l])                          # (BSp, 3*H*128), f32 accum
        q = (qkv[:, 0:HHp] + vec[0:1, :HHp]).astype(mxu_dtype)
        k = (qkv[:, HHp:2 * HHp] + vec[1:2, :HHp]).astype(mxu_dtype)
        v = (qkv[:, 2 * HHp:3 * HHp] + vec[2:3, :HHp]).astype(mxu_dtype)

        # ---- CLIP-ViP attention (forward2) as full masked attention ----
        ctx_heads = []
        for hidx in range(num_heads):                      # tiny static loop over heads
            sl = slice(hidx * hp, (hidx + 1) * hp)         # 128-lane-aligned slab (free slice)
            s = jnp.einsum('qd,kd->qk', q[:, sl], k[:, sl],
                           preferred_element_type=jnp.float32) + bias
            m = jnp.max(s, axis=-1, keepdims=True)
            e = jnp.exp(s - m)
            p = e * pl.reciprocal(jnp.sum(e, axis=-1, keepdims=True), approx=True)
            ctx_heads.append(mm(p, v[:, sl]))              # (BSp, 128), lanes >= head_dim are 0
        ctx = jnp.concatenate(ctx_heads, axis=-1)          # (BSp, H*128), 128-aligned concat
        attn = mm(ctx, wo_ref[l]) + vec[3:4, :Dp]          # single (H*128)-deep out_proj

        h1 = h + attn                                      # residual 1

        # ---- layer_norm2 + MLP (quick_gelu) ----
        h1n = layernorm(h1, vec[8:9, :Dp], vec[9:10, :Dp])
        y = mm(h1n, w1_ref[l]) + vec[4:5, :Ip]
        y = y * jax.nn.sigmoid(1.702 * y)                  # quick_gelu
        y = mm(y, w2_ref[l]) + vec[5:6, :Dp]
        h = h1 + y                                         # residual 2
        hs_ref[l + 1] = h

    # ---- post_layernorm on the CLS token of each batch (pooled output) ----
    cls_rows = jnp.concatenate([h[b * sp:b * sp + 1, :] for b in range(batch)], axis=0)
    pooled_ref[...] = layernorm(cls_rows, gln_ref[2:3, :], gln_ref[3:4, :])


def encoder_forward(x_in, mask, gln, enc, *, batch, sp, num_heads, head_pad,
                    d_valid, n_layers, eps):
    BSp, Dp = x_in.shape

    kernel = functools.partial(
        _encoder_kernel, n_layers=n_layers, num_heads=num_heads, hp=head_pad,
        d_valid=d_valid, eps=eps, batch=batch, sp=sp, mxu_dtype=MXU_INPUT_DTYPE)

    def spec2(a):
        return pl.BlockSpec(a.shape, lambda i: (0, 0))

    def spec3(a):
        return pl.BlockSpec(a.shape, lambda i: (0, 0, 0))

    return pl.pallas_call(
        kernel,
        out_shape=(jax.ShapeDtypeStruct((n_layers + 1, BSp, Dp), jnp.float32),  # hidden states
                   jax.ShapeDtypeStruct((batch, Dp), jnp.float32)),             # pooled
        grid=(1,),
        in_specs=[spec2(x_in), spec2(mask), spec2(gln),
                  spec3(enc["wqkv"]), spec3(enc["wo"]),
                  spec3(enc["w1"]), spec3(enc["w2"]), spec3(enc["vec"])],
        out_specs=(pl.BlockSpec((n_layers + 1, BSp, Dp), lambda i: (0, 0, 0)),
                   pl.BlockSpec((batch, Dp), lambda i: (0, 0))),
        compiler_params=pltpu.CompilerParams(
            dimension_semantics=("arbitrary",)),
    )(x_in, mask, gln, enc["wqkv"], enc["wo"], enc["w1"], enc["w2"], enc["vec"])


# ----------------------------- params --------------------------------------- #
def init_params(key, cfg, acfg):
    """Parameters in the PyTorch layout (nn.Linear weight = (out, in))."""
    D, I = cfg.hidden_size, cfg.intermediate_size
    p = cfg.patch_size
    nP = (cfg.image_size // p) ** 2
    keys = iter(jax.random.split(key, 64))

    def rnd(shape, s=0.05):
        return s * jax.random.normal(next(keys), shape, jnp.float32)

    params = {
        "patch_weight": rnd((D, 3, p, p)),                   # Conv2d weight (no bias)
        "class_embedding": rnd((D,)),
        "added_cls": rnd((acfg.add_cls_num, D)),
        "position_embedding": rnd((nP + 1, D)),
        "temporal_embedding": rnd((1, acfg.temporal_size, D)),
        "pre_ln_g": jnp.ones((D,), jnp.float32), "pre_ln_b": jnp.zeros((D,), jnp.float32),
        "post_ln_g": jnp.ones((D,), jnp.float32), "post_ln_b": jnp.zeros((D,), jnp.float32),
        "layers": [],
    }
    for _ in range(cfg.num_hidden_layers):
        params["layers"].append({
            "wq": rnd((D, D)), "bq": rnd((D,)),
            "wk": rnd((D, D)), "bk": rnd((D,)),
            "wv": rnd((D, D)), "bv": rnd((D,)),
            "wo": rnd((D, D)), "bo": rnd((D,)),
            "ln1g": jnp.ones((D,), jnp.float32), "ln1b": jnp.zeros((D,), jnp.float32),
            "ln2g": jnp.ones((D,), jnp.float32), "ln2b": jnp.zeros((D,), jnp.float32),
            "w1": rnd((I, D)), "b1": rnd((I,)),
            "w2": rnd((D, I)), "b2": rnd((D,)),
        })
    return params


def prepare_encoder_params(params, cfg, Dp, Ip, Hp):
    """Pack / pad per-layer weights into a few stacked, lane-padded, bf16 slabs.

    Per-head 128-lane slab layout: q/k/v output feature (h, d) -> slab column h*Hp + d; the
    out_proj contraction row (h, d) -> slab row h*Hp + d. Attention scale is folded into the
    q weights/bias host-side. All padded entries are zero so padded lanes stay exactly zero."""
    D = cfg.hidden_size
    H = cfg.num_attention_heads
    hd = D // H
    scale = float(hd) ** -0.5
    HHp = H * Hp
    W = max(HHp, Ip, Dp)

    def pad1(v, n):
        return jnp.pad(v, (0, n - v.shape[0]))

    def pad2(w, r, c):
        return jnp.pad(w, ((0, r - w.shape[0]), (0, c - w.shape[1])))

    def head_cols(wT):   # (D, D) "x @ M" matrix -> (Dp, H*Hp) per-head 128-lane column slabs
        w = wT.reshape(D, H, hd)
        w = jnp.pad(w, ((0, Dp - D), (0, 0), (0, Hp - hd)))
        return w.reshape(Dp, HHp)

    def head_rows(wT):   # (D, D) out_proj "x @ M" matrix -> (H*Hp, Dp) per-head block rows
        w = wT.reshape(H, hd, D)
        w = jnp.pad(w, ((0, 0), (0, Hp - hd), (0, Dp - D)))
        return w.reshape(HHp, Dp)

    def head_bias(b):    # (D,) -> (H*Hp,)
        b = b.reshape(H, hd)
        b = jnp.pad(b, ((0, 0), (0, Hp - hd)))
        return b.reshape(HHp)

    wqkv, wo, w1, w2, vec = [], [], [], [], []
    for lp in params["layers"]:
        wqkv.append(jnp.concatenate([head_cols((lp["wq"] * scale).T),
                                     head_cols(lp["wk"].T),
                                     head_cols(lp["wv"].T)], axis=1))      # (Dp, 3*H*Hp)
        wo.append(head_rows(lp["wo"].T))                                    # (H*Hp, Dp)
        w1.append(pad2(lp["w1"].T, Dp, Ip))                                 # (Dp, Ip)
        w2.append(pad2(lp["w2"].T, Ip, Dp))                                 # (Ip, Dp)
        rows = jnp.stack([pad1(head_bias(lp["bq"] * scale), W),
                          pad1(head_bias(lp["bk"]), W),
                          pad1(head_bias(lp["bv"]), W),
                          pad1(lp["bo"], W), pad1(lp["b1"], W), pad1(lp["b2"], W),
                          pad1(lp["ln1g"], W), pad1(lp["ln1b"], W),
                          pad1(lp["ln2g"], W), pad1(lp["ln2b"], W)], axis=0)
        vec.append(jnp.pad(rows, ((0, 16 - rows.shape[0]), (0, 0))))        # (16, W), f32

    enc = {"wqkv": jnp.stack(wqkv).astype(MXU_INPUT_DTYPE),
           "wo": jnp.stack(wo).astype(MXU_INPUT_DTYPE),
           "w1": jnp.stack(w1).astype(MXU_INPUT_DTYPE),
           "w2": jnp.stack(w2).astype(MXU_INPUT_DTYPE),
           "vec": jnp.stack(vec)}

    gln = jnp.stack([pad1(params["pre_ln_g"], Dp), pad1(params["pre_ln_b"], Dp),
                     pad1(params["post_ln_g"], Dp), pad1(params["post_ln_b"], Dp)], axis=0)
    gln = jnp.pad(gln, ((0, 8 - gln.shape[0]), (0, 0)))                     # (8, Dp), f32
    return gln, enc


def build_vip_attention_bias(M, N, L, S, Sp, B):
    """Block-diagonal (over batches) additive mask reproducing CLIP-ViP forward2 within each
    batch block: CLS rows attend everything; frame-n rows attend CLS tokens + their own L
    patches. Padded key columns are always masked; padded query rows attend their batch's CLS
    columns only (keeps softmax finite, stripped afterwards). Cross-batch entries are masked."""
    allow_b = np.zeros((Sp, Sp), dtype=bool)
    allow_b[:M, :S] = True
    for n in range(N):
        lo = M + n * L
        allow_b[lo:lo + L, :M] = True
        allow_b[lo:lo + L, lo:lo + L] = True
    allow_b[S:, :M] = True
    allow = np.zeros((B * Sp, B * Sp), dtype=bool)
    for b in range(B):
        allow[b * Sp:(b + 1) * Sp, b * Sp:(b + 1) * Sp] = allow_b
    return jnp.asarray(np.where(allow, 0.0, NEG_INF).astype(np.float32))


# ----------------------------- model glue ----------------------------------- #
def embeddings_forward(params, pixel_values, cfg, acfg, Dp):
    B, T, C, H, W = pixel_values.shape
    p = cfg.patch_size
    D = cfg.hidden_size
    nP = (H // p) * (W // p)

    # Conv2d(3, D, kernel=p, stride=p, bias=False) == patchify + matmul. Tiny (~0.4 MFLOP):
    # done in plain XLA (one jnp.dot fused with the embedding adds), directly in the
    # lane-padded (Dp) feature layout (padded weight cols are zero).
    x = pixel_values.reshape(B * T, C, H // p, p, W // p, p)
    x = x.transpose(0, 2, 4, 1, 3, 5).reshape(B * T * nP, C * p * p)
    wpT = jnp.pad(params["patch_weight"].reshape(D, C * p * p).T, ((0, 0), (0, Dp - D)))
    patch_embeds = jnp.dot(x, wpT).reshape(B, T, nP, Dp)

    def pad_feat(a):
        return jnp.pad(a, [(0, 0)] * (a.ndim - 1) + [(0, Dp - D)])

    if acfg.if_use_temporal_embed:
        # TODO(synk): F.interpolate(mode='linear') resize path when T != temporal_size.
        assert T == acfg.temporal_size, "only T == temporal_size supported"
        patch_embeds = patch_embeds + pad_feat(params["temporal_embedding"])[:, :, None, :]

    pos = pad_feat(params["position_embedding"])                    # (nP+1, Dp)
    patch_embeds = patch_embeds + pos[1:][None, None]
    class_embeds = pad_feat(params["class_embedding"])[None, None] + pos[0:1][None]
    class_embeds = jnp.broadcast_to(class_embeds, (B, 1, Dp))
    added_cls = pad_feat(params["added_cls"])[None] + pos[0:1][None]
    added_cls = jnp.broadcast_to(added_cls, (B, acfg.add_cls_num, Dp))
    embeds = jnp.concatenate(
        [class_embeds, added_cls, patch_embeds.reshape(B, T * nP, Dp)], axis=1)
    M = 1 + acfg.add_cls_num
    return embeds, (M, T, nP)


def clip_vision_transformer_forward(params, pixel_values, cfg, acfg):
    D = cfg.hidden_size
    H = cfg.num_attention_heads
    Dp = _round_up(D, 128)
    Ip = _round_up(cfg.intermediate_size, 128)
    Hp = _round_up(D // H, 128)

    embeds, (M, N, L) = embeddings_forward(params, pixel_values, cfg, acfg, Dp)
    B, S, _ = embeds.shape
    Sp = _round_up(S, 8)
    # Batch rows stacked along sublanes: (B*Sp, Dp).
    x_in = jnp.pad(embeds, ((0, 0), (0, Sp - S), (0, 0))).reshape(B * Sp, Dp)

    mask = build_vip_attention_bias(M, N, L, S, Sp, B)
    gln, enc = prepare_encoder_params(params, cfg, Dp, Ip, Hp)

    hs, pooled = encoder_forward(
        x_in, mask, gln, enc,
        batch=B, sp=Sp, num_heads=H, head_pad=Hp, d_valid=D,
        n_layers=cfg.num_hidden_layers, eps=cfg.layer_norm_eps)

    # Strip lane / sublane / batch-stacking padding (layout plumbing only).
    hs = hs.reshape(cfg.num_hidden_layers + 1, B, Sp, Dp)[:, :, :S, :D]
    all_hidden_states = tuple(hs[i] for i in range(cfg.num_hidden_layers + 1))
    last_hidden_state = all_hidden_states[-1]
    pooled_output = pooled[:, :D]
    return last_hidden_state, pooled_output, all_hidden_states


# ----------------------------- main ----------------------------------------- #
if __name__ == "__main__":
    cfg = Config()
    acfg = AdditionalVisionConfig()

    root = jax.random.PRNGKey(0)
    k_params, k_pix = jax.random.split(root)
    params = init_params(k_params, cfg, acfg)

    B, T, C = 2, acfg.temporal_size, 3
    Himg = Wimg = cfg.image_size
    pixel_values = jax.random.normal(k_pix, (B, T, C, Himg, Wimg), jnp.float32)

    last_hidden_state, pooled_output, hidden_states = clip_vision_transformer_forward(
        params, pixel_values, cfg, acfg)

    jax.block_until_ready(last_hidden_state)
    jax.block_until_ready(pooled_output)

    # sanity: S = (1 + add_cls_num) + T * (image_size//patch)^2 = 4 + 2*16 = 36
    assert last_hidden_state.shape == (B, 36, cfg.hidden_size)
    assert pooled_output.shape == (B, cfg.hidden_size)
    assert len(hidden_states) == cfg.num_hidden_layers + 1
    assert all(h.shape == (B, 36, cfg.hidden_size) for h in hidden_states)
    assert bool(jnp.all(jnp.isfinite(last_hidden_state)))
    assert bool(jnp.all(jnp.isfinite(pooled_output)))

    print("KERNEL_OK")
</pallas_src>

<mosaic_0001>
module attributes {stable_mosaic.version = 11 : i64} {
  func.func @_encoder_kernel(%arg0: i32, %arg1: memref<80x128xf32, #tpu.memory_space<vmem>>, %arg2: memref<80x80xf32, #tpu.memory_space<vmem>>, %arg3: memref<8x128xf32, #tpu.memory_space<vmem>>, %arg4: memref<2x128x768xbf16, #tpu.memory_space<vmem>>, %arg5: memref<2x256x128xbf16, #tpu.memory_space<vmem>>, %arg6: memref<2x128x128xbf16, #tpu.memory_space<vmem>>, %arg7: memref<2x128x128xbf16, #tpu.memory_space<vmem>>, %arg8: memref<2x16x256xf32, #tpu.memory_space<vmem>>, %arg9: memref<3x80x128xf32, #tpu.memory_space<vmem>>, %arg10: memref<2x128xf32, #tpu.memory_space<vmem>>) attributes {dimension_semantics = [#tpu.dimension_semantics<arbitrary>], iteration_bounds = array<i64: 1>, scalar_prefetch = 0 : i64, scratch_operands = 0 : i64, tpu.core_type = #tpu.core_type<tc>, window_params = [{pipeline_mode = #tpu.pipeline_mode<synchronous>, transform_indices = @transform_0, window_bounds = array<i64: 80, 128>}, {pipeline_mode = #tpu.pipeline_mode<synchronous>, transform_indices = @transform_1, window_bounds = array<i64: 80, 80>}, {pipeline_mode = #tpu.pipeline_mode<synchronous>, transform_indices = @transform_2, window_bounds = array<i64: 8, 128>}, {pipeline_mode = #tpu.pipeline_mode<synchronous>, transform_indices = @transform_3, window_bounds = array<i64: 2, 128, 768>}, {pipeline_mode = #tpu.pipeline_mode<synchronous>, transform_indices = @transform_4, window_bounds = array<i64: 2, 256, 128>}, {pipeline_mode = #tpu.pipeline_mode<synchronous>, transform_indices = @transform_5, window_bounds = array<i64: 2, 128, 128>}, {pipeline_mode = #tpu.pipeline_mode<synchronous>, transform_indices = @transform_6, window_bounds = array<i64: 2, 128, 128>}, {pipeline_mode = #tpu.pipeline_mode<synchronous>, transform_indices = @transform_7, window_bounds = array<i64: 2, 16, 256>}, {pipeline_mode = #tpu.pipeline_mode<synchronous>, transform_indices = @transform_8, window_bounds = array<i64: 3, 80, 128>}, {pipeline_mode = #tpu.pipeline_mode<synchronous>, transform_indices = @transform_9, window_bounds = array<i64: 2, 128>}]} {
    %0 = tpu.iota {dimensions = array<i32: 1>} : vector<1x128xi32>
    %c32_i32 = arith.constant 32 : i32
    %1 = vector.broadcast %c32_i32 : i32 to vector<1x128xi32>
    %2 = arith.cmpi slt, %0, %1 : vector<1x128xi32>
    %c0 = arith.constant 0 : index
    %c0_0 = arith.constant 0 : index
    %3 = vector.load %arg2[%c0, %c0_0] : memref<80x80xf32, #tpu.memory_space<vmem>>, vector<80x80xf32>
    %c0_1 = arith.constant 0 : index
    %c0_2 = arith.constant 0 : index
    %4 = vector.load %arg1[%c0_1, %c0_2] : memref<80x128xf32, #tpu.memory_space<vmem>>, vector<80x128xf32>
    %c0_3 = arith.constant 0 : index
    %c0_4 = arith.constant 0 : index
    %5 = vector.load %arg3[%c0_3, %c0_4] : memref<8x128xf32, #tpu.memory_space<vmem>>, vector<1x128xf32>
    %c1 = arith.constant 1 : index
    %c0_5 = arith.constant 0 : index
    %6 = vector.load %arg3[%c1, %c0_5] : memref<8x128xf32, #tpu.memory_space<vmem>>, vector<1x128xf32>
    %cst = arith.constant dense<0.000000e+00> : vector<80xf32>
    %7 = vector.multi_reduction <add>, %4, %cst [1] : vector<80x128xf32> to vector<80xf32>
    %8 = vector.shape_cast %7 : vector<80xf32> to vector<80x1xf32>
    %cst_6 = arith.constant 3.125000e-02 : f32
    %9 = vector.broadcast %cst_6 : f32 to vector<80x1xf32>
    %10 = arith.mulf %8, %9 : vector<80x1xf32>
    %11 = vector.broadcast %10 : vector<80x1xf32> to vector<80x128xf32>
    %12 = arith.subf %4, %11 : vector<80x128xf32>
    %cst_7 = arith.constant 0.000000e+00 : f32
    %13 = vector.shape_cast %2 : vector<1x128xi1> to vector<1x128xi1>
    %14 = vector.broadcast %13 : vector<1x128xi1> to vector<80x128xi1>
    %15 = vector.broadcast %cst_7 : f32 to vector<80x128xf32>
    %16 = arith.select %14, %12, %15 : vector<80x128xi1>, vector<80x128xf32>
    %17 = arith.mulf %16, %16 : vector<80x128xf32>
    %cst_8 = arith.constant dense<0.000000e+00> : vector<80xf32>
    %18 = vector.multi_reduction <add>, %17, %cst_8 [1] : vector<80x128xf32> to vector<80xf32>
    %19 = vector.shape_cast %18 : vector<80xf32> to vector<80x1xf32>
    %cst_9 = arith.constant 3.125000e-02 : f32
    %20 = vector.broadcast %cst_9 : f32 to vector<80x1xf32>
    %21 = arith.mulf %19, %20 : vector<80x1xf32>
    %cst_10 = arith.constant 9.99999974E-6 : f32
    %22 = vector.broadcast %cst_10 : f32 to vector<80x1xf32>
    %23 = arith.addf %21, %22 : vector<80x1xf32>
    %24 = math.rsqrt %23 : vector<80x1xf32>
    %25 = vector.broadcast %24 : vector<80x1xf32> to vector<80x128xf32>
    %26 = arith.mulf %16, %25 : vector<80x128xf32>
    %27 = vector.broadcast %5 : vector<1x128xf32> to vector<80x128xf32>
    %28 = arith.mulf %26, %27 : vector<80x128xf32>
    %29 = vector.broadcast %6 : vector<1x128xf32> to vector<80x128xf32>
    %30 = arith.addf %28, %29 : vector<80x128xf32>
    %c0_11 = arith.constant 0 : index
    %c0_12 = arith.constant 0 : index
    %c0_13 = arith.constant 0 : index
    %31 = vector.load %arg9[%c0_11, %c0_12, %c0_13] : memref<3x80x128xf32, #tpu.memory_space<vmem>>, vector<1x80x128xf32>
    %32 = vector.shape_cast %31 : vector<1x80x128xf32> to vector<80x128xf32>
    %33 = vector.shape_cast %30 : vector<80x128xf32> to vector<1x80x128xf32>
    tpu.vector_store %arg9[%c0_11, %c0_12, %c0_13], %33 {strides = array<i32>} : memref<3x80x128xf32, #tpu.memory_space<vmem>>, vector<1x80x128xf32>,
    %c0_14 = arith.constant 0 : index
    %c0_15 = arith.constant 0 : index
    %c0_16 = arith.constant 0 : index
    %34 = vector.load %arg8[%c0_14, %c0_15, %c0_16] : memref<2x16x256xf32, #tpu.memory_space<vmem>>, vector<1x16x256xf32>
    %35 = vector.shape_cast %34 : vector<1x16x256xf32> to vector<16x256xf32>
    %36 = vector.extract_strided_slice %35 {offsets = [6, 0], sizes = [1, 128], strides = [1, 1]} : vector<16x256xf32> to vector<1x128xf32>
    %37 = vector.extract_strided_slice %35 {offsets = [7, 0], sizes = [1, 128], strides = [1, 1]} : vector<16x256xf32> to vector<1x128xf32>
    %cst_17 = arith.constant dense<0.000000e+00> : vector<80xf32>
    %38 = vector.multi_reduction <add>, %30, %cst_17 [1] : vector<80x128xf32> to vector<80xf32>
    %39 = vector.shape_cast %38 : vector<80xf32> to vector<80x1xf32>
    %cst_18 = arith.constant 3.125000e-02 : f32
    %40 = vector.broadcast %cst_18 : f32 to vector<80x1xf32>
    %41 = arith.mulf %39, %40 : vector<80x1xf32>
    %42 = vector.broadcast %41 : vector<80x1xf32> to vector<80x128xf32>
    %43 = arith.subf %30, %42 : vector<80x128xf32>
    %cst_19 = arith.constant 0.000000e+00 : f32
    %44 = vector.shape_cast %2 : vector<1x128xi1> to vector<1x128xi1>
    %45 = vector.broadcast %44 : vector<1x128xi1> to vector<80x128xi1>
    %46 = vector.broadcast %cst_19 : f32 to vector<80x128xf32>
    %47 = arith.select %45, %43, %46 : vector<80x128xi1>, vector<80x128xf32>
    %48 = arith.mulf %47, %47 : vector<80x128xf32>
    %cst_20 = arith.constant dense<0.000000e+00> : vector<80xf32>
    %49 = vector.multi_reduction <add>, %48, %cst_20 [1] : vector<80x128xf32> to vector<80xf32>
    %50 = vector.shape_cast %49 : vector<80xf32> to vector<80x1xf32>
    %cst_21 = arith.constant 3.125000e-02 : f32
    %51 = vector.broadcast %cst_21 : f32 to vector<80x1xf32>
    %52 = arith.mulf %50, %51 : vector<80x1xf32>
    %cst_22 = arith.constant 9.99999974E-6 : f32
    %53 = vector.broadcast %cst_22 : f32 to vector<80x1xf32>
    %54 = arith.addf %52, %53 : vector<80x1xf32>
    %55 = math.rsqrt %54 : vector<80x1xf32>
    %56 = vector.broadcast %55 : vector<80x1xf32> to vector<80x128xf32>
    %57 = arith.mulf %47, %56 : vector<80x128xf32>
    %58 = vector.broadcast %36 : vector<1x128xf32> to vector<80x128xf32>
    %59 = arith.mulf %57, %58 : vector<80x128xf32>
    %60 = vector.broadcast %37 : vector<1x128xf32> to vector<80x128xf32>
    %61 = arith.addf %59, %60 : vector<80x128xf32>
    %c0_23 = arith.constant 0 : index
    %c0_24 = arith.constant 0 : index
    %c0_25 = arith.constant 0 : index
    %62 = vector.load %arg4[%c0_23, %c0_24, %c0_25] : memref<2x128x768xbf16, #tpu.memory_space<vmem>>, vector<1x128x768xbf16>
    %63 = vector.shape_cast %62 : vector<1x128x768xbf16> to vector<128x768xbf16>
    %64 = arith.truncf %61 : vector<80x128xf32> to vector<80x128xbf16>
    %cst_26 = arith.constant dense<0.000000e+00> : vector<80x768xf32>
    %65 = tpu.matmul %64, %63, %cst_26 {dimension_numbers = #tpu.dot_dimension_numbers<[1], [0], [0], [1], [0, 0, 1, 1], [], []>} : vector<80x128xbf16>, vector<128x768xbf16>, vector<80x768xf32> -> vector<80x768xf32>
    %66 = vector.extract_strided_slice %65 {offsets = [0, 0], sizes = [80, 256], strides = [1, 1]} : vector<80x768xf32> to vector<80x256xf32>
    %67 = vector.extract_strided_slice %35 {offsets = [0, 0], sizes = [1, 256], strides = [1, 1]} : vector<16x256xf32> to vector<1x256xf32>
    %68 = vector.broadcast %67 : vector<1x256xf32> to vector<80x256xf32>
    %69 = arith.addf %66, %68 : vector<80x256xf32>
    %70 = arith.truncf %69 : vector<80x256xf32> to vector<80x256xbf16>
    %71 = vector.extract_strided_slice %65 {offsets = [0, 256], sizes = [80, 256], strides = [1, 1]} : vector<80x768xf32> to vector<80x256xf32>
    %72 = vector.extract_strided_slice %35 {offsets = [1, 0], sizes = [1, 256], strides = [1, 1]} : vector<16x256xf32> to vector<1x256xf32>
    %73 = vector.broadcast %72 : vector<1x256xf32> to vector<80x256xf32>
    %74 = arith.addf %71, %73 : vector<80x256xf32>
    %75 = arith.truncf %74 : vector<80x256xf32> to vector<80x256xbf16>
    %76 = vector.extract_strided_slice %65 {offsets = [0, 512], sizes = [80, 256], strides = [1, 1]} : vector<80x768xf32> to vector<80x256xf32>
    %77 = vector.extract_strided_slice %35 {offsets = [2, 0], sizes = [1, 256], strides = [1, 1]} : vector<16x256xf32> to vector<1x256xf32>
    %78 = vector.broadcast %77 : vector<1x256xf32> to vector<80x256xf32>
    %79 = arith.addf %76, %78 : vector<80x256xf32>
    %80 = arith.truncf %79 : vector<80x256xf32> to vector<80x256xbf16>
    %81 = vector.extract_strided_slice %70 {offsets = [0, 0], sizes = [80, 128], strides = [1, 1]} : vector<80x256xbf16> to vector<80x128xbf16>
    %82 = vector.extract_strided_slice %75 {offsets = [0, 0], sizes = [80, 128], strides = [1, 1]} : vector<80x256xbf16> to vector<80x128xbf16>
    "tpu.trace_start"() <{level = 10 : i32, message = "qd,kd->qk"}> : () -> ()
    %cst_27 = arith.constant dense<0.000000e+00> : vector<80x80xf32>
    %83 = tpu.matmul %81, %82, %cst_27 {dimension_numbers = #tpu.dot_dimension_numbers<[1], [1], [0], [0], [0, 0, 1, 0], [], []>} : vector<80x128xbf16>, vector<80x128xbf16>, vector<80x80xf32> -> vector<80x80xf32>
    "tpu.trace_stop"() : () -> ()
    %84 = arith.addf %83, %3 : vector<80x80xf32>
    %cst_28 = arith.constant dense<0xFF800000> : vector<80xf32>
    %85 = vector.multi_reduction <maximumf>, %84, %cst_28 [1] : vector<80x80xf32> to vector<80xf32>
    %86 = vector.shape_cast %85 : vector<80xf32> to vector<80x1xf32>
    %87 = vector.broadcast %86 : vector<80x1xf32> to vector<80x80xf32>
    %88 = arith.subf %84, %87 : vector<80x80xf32>
    %89 = math.exp %88 : vector<80x80xf32>
    %cst_29 = arith.constant dense<0.000000e+00> : vector<80xf32>
    %90 = vector.multi_reduction <add>, %89, %cst_29 [1] : vector<80x80xf32> to vector<80xf32>
    %91 = vector.shape_cast %90 : vector<80xf32> to vector<80x1xf32>
    %92 = tpu.reciprocal %91 {approx = true} : vector<80x1xf32> -> vector<80x1xf32>
    %93 = vector.broadcast %92 : vector<80x1xf32> to vector<80x80xf32>
    %94 = arith.mulf %89, %93 : vector<80x80xf32>
    %95 = vector.extract_strided_slice %80 {offsets = [0, 0], sizes = [80, 128], strides = [1, 1]} : vector<80x256xbf16> to vector<80x128xbf16>
    %96 = arith.truncf %94 : vector<80x80xf32> to vector<80x80xbf16>
    %cst_30 = arith.constant dense<0.000000e+00> : vector<80x128xf32>
    %97 = tpu.matmul %96, %95, %cst_30 {dimension_numbers = #tpu.dot_dimension_numbers<[1], [0], [0], [1], [0, 0, 1, 1], [], []>} : vector<80x80xbf16>, vector<80x128xbf16>, vector<80x128xf32> -> vector<80x128xf32>
    %98 = vector.extract_strided_slice %70 {offsets = [0, 128], sizes = [80, 128], strides = [1, 1]} : vector<80x256xbf16> to vector<80x128xbf16>
    %99 = vector.extract_strided_slice %75 {offsets = [0, 128], sizes = [80, 128], strides = [1, 1]} : vector<80x256xbf16> to vector<80x128xbf16>
    "tpu.trace_start"() <{level = 10 : i32, message = "qd,kd->qk"}> : () -> ()
    %cst_31 = arith.constant dense<0.000000e+00> : vector<80x80xf32>
    %100 = tpu.matmul %98, %99, %cst_31 {dimension_numbers = #tpu.dot_dimension_numbers<[1], [1], [0], [0], [0, 0, 1, 0], [], []>} : vector<80x128xbf16>, vector<80x128xbf16>, vector<80x80xf32> -> vector<80x80xf32>
    "tpu.trace_stop"() : () -> ()
    %101 = arith.addf %100, %3 : vector<80x80xf32>
    %cst_32 = arith.constant dense<0xFF800000> : vector<80xf32>
    %102 = vector.multi_reduction <maximumf>, %101, %cst_32 [1] : vector<80x80xf32> to vector<80xf32>
    %103 = vector.shape_cast %102 : vector<80xf32> to vector<80x1xf32>
    %104 = vector.broadcast %103 : vector<80x1xf32> to vector<80x80xf32>
    %105 = arith.subf %101, %104 : vector<80x80xf32>
    %106 = math.exp %105 : vector<80x80xf32>
    %cst_33 = arith.constant dense<0.000000e+00> : vector<80xf32>
    %107 = vector.multi_reduction <add>, %106, %cst_33 [1] : vector<80x80xf32> to vector<80xf32>
    %108 = vector.shape_cast %107 : vector<80xf32> to vector<80x1xf32>
    %109 = tpu.reciprocal %108 {approx = true} : vector<80x1xf32> -> vector<80x1xf32>
    %110 = vector.broadcast %109 : vector<80x1xf32> to vector<80x80xf32>
    %111 = arith.mulf %106, %110 : vector<80x80xf32>
    %112 = vector.extract_strided_slice %80 {offsets = [0, 128], sizes = [80, 128], strides = [1, 1]} : vector<80x256xbf16> to vector<80x128xbf16>
    %113 = arith.truncf %111 : vector<80x80xf32> to vector<80x80xbf16>
    %cst_34 = arith.constant dense<0.000000e+00> : vector<80x128xf32>
    %114 = tpu.matmul %113, %112, %cst_34 {dimension_numbers = #tpu.dot_dimension_numbers<[1], [0], [0], [1], [0, 0, 1, 1], [], []>} : vector<80x80xbf16>, vector<80x128xbf16>, vector<80x128xf32> -> vector<80x128xf32>
    %115 = tpu.concatenate %97, %114 in 1 : vector<80x128xf32>, vector<80x128xf32> -> vector<80x256xf32>
    %c0_35 = arith.constant 0 : index
    %c0_36 = arith.constant 0 : index
    %c0_37 = arith.constant 0 : index
    %116 = vector.load %arg5[%c0_35, %c0_36, %c0_37] : memref<2x256x128xbf16, #tpu.memory_space<vmem>>, vector<1x256x128xbf16>
    %117 = vector.shape_cast %116 : vector<1x256x128xbf16> to vector<256x128xbf16>
    %118 = arith.truncf %115 : vector<80x256xf32> to vector<80x256xbf16>
    %cst_38 = arith.constant dense<0.000000e+00> : vector<80x128xf32>
    %119 = tpu.matmul %118, %117, %cst_38 {dimension_numbers = #tpu.dot_dimension_numbers<[1], [0], [0], [1], [0, 0, 1, 1], [], []>} : vector<80x256xbf16>, vector<256x128xbf16>, vector<80x128xf32> -> vector<80x128xf32>
    %120 = vector.extract_strided_slice %35 {offsets = [3, 0], sizes = [1, 128], strides = [1, 1]} : vector<16x256xf32> to vector<1x128xf32>
    %121 = vector.broadcast %120 : vector<1x128xf32> to vector<80x128xf32>
    %122 = arith.addf %119, %121 : vector<80x128xf32>
    %123 = arith.addf %30, %122 : vector<80x128xf32>
    %124 = vector.extract_strided_slice %35 {offsets = [8, 0], sizes = [1, 128], strides = [1, 1]} : vector<16x256xf32> to vector<1x128xf32>
    %125 = vector.extract_strided_slice %35 {offsets = [9, 0], sizes = [1, 128], strides = [1, 1]} : vector<16x256xf32> to vector<1x128xf32>
    %cst_39 = arith.constant dense<0.000000e+00> : vector<80xf32>
    %126 = vector.multi_reduction <add>, %123, %cst_39 [1] : vector<80x128xf32> to vector<80xf32>
    %127 = vector.shape_cast %126 : vector<80xf32> to vector<80x1xf32>
    %cst_40 = arith.constant 3.125000e-02 : f32
    %128 = vector.broadcast %cst_40 : f32 to vector<80x1xf32>
    %129 = arith.mulf %127, %128 : vector<80x1xf32>
    %130 = vector.broadcast %129 : vector<80x1xf32> to vector<80x128xf32>
    %131 = arith.subf %123, %130 : vector<80x128xf32>
    %cst_41 = arith.constant 0.000000e+00 : f32
    %132 = vector.shape_cast %2 : vector<1x128xi1> to vector<1x128xi1>
    %133 = vector.broadcast %132 : vector<1x128xi1> to vector<80x128xi1>
    %134 = vector.broadcast %cst_41 : f32 to vector<80x128xf32>
    %135 = arith.select %133, %131, %134 : vector<80x128xi1>, vector<80x128xf32>
    %136 = arith.mulf %135, %135 : vector<80x128xf32>
    %cst_42 = arith.constant dense<0.000000e+00> : vector<80xf32>
    %137 = vector.multi_reduction <add>, %136, %cst_42 [1] : vector<80x128xf32> to vector<80xf32>
    %138 = vector.shape_cast %137 : vector<80xf32> to vector<80x1xf32>
    %cst_43 = arith.constant 3.125000e-02 : f32
    %139 = vector.broadcast %cst_43 : f32 to vector<80x1xf32>
    %140 = arith.mulf %138, %139 : vector<80x1xf32>
    %cst_44 = arith.constant 9.99999974E-6 : f32
    %141 = vector.broadcast %cst_44 : f32 to vector<80x1xf32>
    %142 = arith.addf %140, %141 : vector<80x1xf32>
    %143 = math.rsqrt %142 : vector<80x1xf32>
    %144 = vector.broadcast %143 : vector<80x1xf32> to vector<80x128xf32>
    %145 = arith.mulf %135, %144 : vector<80x128xf32>
    %146 = vector.broadcast %124 : vector<1x128xf32> to vector<80x128xf32>
    %147 = arith.mulf %145, %146 : vector<80x128xf32>
    %148 = vector.broadcast %125 : vector<1x128xf32> to vector<80x128xf32>
    %149 = arith.addf %147, %148 : vector<80x128xf32>
    %c0_45 = arith.constant 0 : index
    %c0_46 = arith.constant 0 : index
    %c0_47 = arith.constant 0 : index
    %150 = vector.load %arg6[%c0_45, %c0_46, %c0_47] : memref<2x128x128xbf16, #tpu.memory_space<vmem>>, vector<1x128x128xbf16>
    %151 = vector.shape_cast %150 : vector<1x128x128xbf16> to vector<128x128xbf16>
    %152 = arith.truncf %149 : vector<80x128xf32> to vector<80x128xbf16>
    %cst_48 = arith.constant dense<0.000000e+00> : vector<80x128xf32>
    %153 = tpu.matmul %152, %151, %cst_48 {dimension_numbers = #tpu.dot_dimension_numbers<[1], [0], [0], [1], [0, 0, 1, 1], [], []>} : vector<80x128xbf16>, vector<128x128xbf16>, vector<80x128xf32> -> vector<80x128xf32>
    %154 = vector.extract_strided_slice %35 {offsets = [4, 0], sizes = [1, 128], strides = [1, 1]} : vector<16x256xf32> to vector<1x128xf32>
    %155 = vector.broadcast %154 : vector<1x128xf32> to vector<80x128xf32>
    %156 = arith.addf %153, %155 : vector<80x128xf32>
    %cst_49 = arith.constant 1.702000e+00 : f32
    %157 = vector.broadcast %cst_49 : f32 to vector<80x128xf32>
    %158 = arith.mulf %157, %156 : vector<80x128xf32>
    %159 = arith.negf %158 : vector<80x128xf32>
    %160 = math.exp %159 : vector<80x128xf32>
    %cst_50 = arith.constant 1.000000e+00 : f32
    %161 = vector.broadcast %cst_50 : f32 to vector<80x128xf32>
    %162 = arith.addf %161, %160 : vector<80x128xf32>
    %163 = arith.divf %161, %162 : vector<80x128xf32>
    %164 = arith.mulf %156, %163 : vector<80x128xf32>
    %c0_51 = arith.constant 0 : index
    %c0_52 = arith.constant 0 : index
    %c0_53 = arith.constant 0 : index
    %165 = vector.load %arg7[%c0_51, %c0_52, %c0_53] : memref<2x128x128xbf16, #tpu.memory_space<vmem>>, vector<1x128x128xbf16>
    %166 = vector.shape_cast %165 : vector<1x128x128xbf16> to vector<128x128xbf16>
    %167 = arith.truncf %164 : vector<80x128xf32> to vector<80x128xbf16>
    %cst_54 = arith.constant dense<0.000000e+00> : vector<80x128xf32>
    %168 = tpu.matmul %167, %166, %cst_54 {dimension_numbers = #tpu.dot_dimension_numbers<[1], [0], [0], [1], [0, 0, 1, 1], [], []>} : vector<80x128xbf16>, vector<128x128xbf16>, vector<80x128xf32> -> vector<80x128xf32>
    %169 = vector.extract_strided_slice %35 {offsets = [5, 0], sizes = [1, 128], strides = [1, 1]} : vector<16x256xf32> to vector<1x128xf32>
    %170 = vector.broadcast %169 : vector<1x128xf32> to vector<80x128xf32>
    %171 = arith.addf %168, %170 : vector<80x128xf32>
    %172 = arith.addf %123, %171 : vector<80x128xf32>
    %c1_55 = arith.constant 1 : index
    %c0_56 = arith.constant 0 : index
    %c0_57 = arith.constant 0 : index
    %173 = vector.load %arg9[%c1_55, %c0_56, %c0_57] : memref<3x80x128xf32, #tpu.memory_space<vmem>>, vector<1x80x128xf32>
    %174 = vector.shape_cast %173 : vector<1x80x128xf32> to vector<80x128xf32>
    %175 = vector.shape_cast %172 : vector<80x128xf32> to vector<1x80x128xf32>
    tpu.vector_store %arg9[%c1_55, %c0_56, %c0_57], %175 {strides = array<i32>} : memref<3x80x128xf32, #tpu.memory_space<vmem>>, vector<1x80x128xf32>,
    %c1_58 = arith.constant 1 : index
    %c0_59 = arith.constant 0 : index
    %c0_60 = arith.constant 0 : index
    %176 = vector.load %arg8[%c1_58, %c0_59, %c0_60] : memref<2x16x256xf32, #tpu.memory_space<vmem>>, vector<1x16x256xf32>
    %177 = vector.shape_cast %176 : vector<1x16x256xf32> to vector<16x256xf32>
    %178 = vector.extract_strided_slice %177 {offsets = [6, 0], sizes = [1, 128], strides = [1, 1]} : vector<16x256xf32> to vector<1x128xf32>
    %179 = vector.extract_strided_slice %177 {offsets = [7, 0], sizes = [1, 128], strides = [1, 1]} : vector<16x256xf32> to vector<1x128xf32>
    %cst_61 = arith.constant dense<0.000000e+00> : vector<80xf32>
    %180 = vector.multi_reduction <add>, %172, %cst_61 [1] : vector<80x128xf32> to vector<80xf32>
    %181 = vector.shape_cast %180 : vector<80xf32> to vector<80x1xf32>
    %cst_62 = arith.constant 3.125000e-02 : f32
    %182 = vector.broadcast %cst_62 : f32 to vector<80x1xf32>
    %183 = arith.mulf %181, %182 : vector<80x1xf32>
    %184 = vector.broadcast %183 : vector<80x1xf32> to vector<80x128xf32>
    %185 = arith.subf %172, %184 : vector<80x128xf32>
    %cst_63 = arith.constant 0.000000e+00 : f32
    %186 = vector.shape_cast %2 : vector<1x128xi1> to vector<1x128xi1>
    %187 = vector.broadcast %186 : vector<1x128xi1> to vector<80x128xi1>
    %188 = vector.broadcast %cst_63 : f32 to vector<80x128xf32>
    %189 = arith.select %187, %185, %188 : vector<80x128xi1>, vector<80x128xf32>
    %190 = arith.mulf %189, %189 : vector<80x128xf32>
    %cst_64 = arith.constant dense<0.000000e+00> : vector<80xf32>
    %191 = vector.multi_reduction <add>, %190, %cst_64 [1] : vector<80x128xf32> to vector<80xf32>
    %192 = vector.shape_cast %191 : vector<80xf32> to vector<80x1xf32>
    %cst_65 = arith.constant 3.125000e-02 : f32
    %193 = vector.broadcast %cst_65 : f32 to vector<80x1xf32>
    %194 = arith.mulf %192, %193 : vector<80x1xf32>
    %cst_66 = arith.constant 9.99999974E-6 : f32
    %195 = vector.broadcast %cst_66 : f32 to vector<80x1xf32>
    %196 = arith.addf %194, %195 : vector<80x1xf32>
    %197 = math.rsqrt %196 : vector<80x1xf32>
    %198 = vector.broadcast %197 : vector<80x1xf32> to vector<80x128xf32>
    %199 = arith.mulf %189, %198 : vector<80x128xf32>
    %200 = vector.broadcast %178 : vector<1x128xf32> to vector<80x128xf32>
    %201 = arith.mulf %199, %200 : vector<80x128xf32>
    %202 = vector.broadcast %179 : vector<1x128xf32> to vector<80x128xf32>
    %203 = arith.addf %201, %202 : vector<80x128xf32>
    %c1_67 = arith.constant 1 : index
    %c0_68 = arith.constant 0 : index
    %c0_69 = arith.constant 0 : index
    %204 = vector.load %arg4[%c1_67, %c0_68, %c0_69] : memref<2x128x768xbf16, #tpu.memory_space<vmem>>, vector<1x128x768xbf16>
    %205 = vector.shape_cast %204 : vector<1x128x768xbf16> to vector<128x768xbf16>
    %206 = arith.truncf %203 : vector<80x128xf32> to vector<80x128xbf16>
    %cst_70 = arith.constant dense<0.000000e+00> : vector<80x768xf32>
    %207 = tpu.matmul %206, %205, %cst_70 {dimension_numbers = #tpu.dot_dimension_numbers<[1], [0], [0], [1], [0, 0, 1, 1], [], []>} : vector<80x128xbf16>, vector<128x768xbf16>, vector<80x768xf32> -> vector<80x768xf32>
    %208 = vector.extract_strided_slice %207 {offsets = [0, 0], sizes = [80, 256], strides = [1, 1]} : vector<80x768xf32> to vector<80x256xf32>
    %209 = vector.extract_strided_slice %177 {offsets = [0, 0], sizes = [1, 256], strides = [1, 1]} : vector<16x256xf32> to vector<1x256xf32>
    %210 = vector.broadcast %209 : vector<1x256xf32> to vector<80x256xf32>
    %211 = arith.addf %208, %210 : vector<80x256xf32>
    %212 = arith.truncf %211 : vector<80x256xf32> to vector<80x256xbf16>
    %213 = vector.extract_strided_slice %207 {offsets = [0, 256], sizes = [80, 256], strides = [1, 1]} : vector<80x768xf32> to vector<80x256xf32>
    %214 = vector.extract_strided_slice %177 {offsets = [1, 0], sizes = [1, 256], strides = [1, 1]} : vector<16x256xf32> to vector<1x256xf32>
    %215 = vector.broadcast %214 : vector<1x256xf32> to vector<80x256xf32>
    %216 = arith.addf %213, %215 : vector<80x256xf32>
    %217 = arith.truncf %216 : vector<80x256xf32> to vector<80x256xbf16>
    %218 = vector.extract_strided_slice %207 {offsets = [0, 512], sizes = [80, 256], strides = [1, 1]} : vector<80x768xf32> to vector<80x256xf32>
    %219 = vector.extract_strided_slice %177 {offsets = [2, 0], sizes = [1, 256], strides = [1, 1]} : vector<16x256xf32> to vector<1x256xf32>
    %220 = vector.broadcast %219 : vector<1x256xf32> to vector<80x256xf32>
    %221 = arith.addf %218, %220 : vector<80x256xf32>
    %222 = arith.truncf %221 : vector<80x256xf32> to vector<80x256xbf16>
    %223 = vector.extract_strided_slice %212 {offsets = [0, 0], sizes = [80, 128], strides = [1, 1]} : vector<80x256xbf16> to vector<80x128xbf16>
    %224 = vector.extract_strided_slice %217 {offsets = [0, 0], sizes = [80, 128], strides = [1, 1]} : vector<80x256xbf16> to vector<80x128xbf16>
    "tpu.trace_start"() <{level = 10 : i32, message = "qd,kd->qk"}> : () -> ()
    %cst_71 = arith.constant dense<0.000000e+00> : vector<80x80xf32>
    %225 = tpu.matmul %223, %224, %cst_71 {dimension_numbers = #tpu.dot_dimension_numbers<[1], [1], [0], [0], [0, 0, 1, 0], [], []>} : vector<80x128xbf16>, vector<80x128xbf16>, vector<80x80xf32> -> vector<80x80xf32>
    "tpu.trace_stop"() : () -> ()
    %226 = arith.addf %225, %3 : vector<80x80xf32>
    %cst_72 = arith.constant dense<0xFF800000> : vector<80xf32>
    %227 = vector.multi_reduction <maximumf>, %226, %cst_72 [1] : vector<80x80xf32> to vector<80xf32>
    %228 = vector.shape_cast %227 : vector<80xf32> to vector<80x1xf32>
    %229 = vector.broadcast %228 : vector<80x1xf32> to vector<80x80xf32>
    %230 = arith.subf %226, %229 : vector<80x80xf32>
    %231 = math.exp %230 : vector<80x80xf32>
    %cst_73 = arith.constant dense<0.000000e+00> : vector<80xf32>
    %232 = vector.multi_reduction <add>, %231, %cst_73 [1] : vector<80x80xf32> to vector<80xf32>
    %233 = vector.shape_cast %232 : vector<80xf32> to vector<80x1xf32>
    %234 = tpu.reciprocal %233 {approx = true} : vector<80x1xf32> -> vector<80x1xf32>
    %235 = vector.broadcast %234 : vector<80x1xf32> to vector<80x80xf32>
    %236 = arith.mulf %231, %235 : vector<80x80xf32>
    %237 = vector.extract_strided_slice %222 {offsets = [0, 0], sizes = [80, 128], strides = [1, 1]} : vector<80x256xbf16> to vector<80x128xbf16>
    %238 = arith.truncf %236 : vector<80x80xf32> to vector<80x80xbf16>
    %cst_74 = arith.constant dense<0.000000e+00> : vector<80x128xf32>
    %239 = tpu.matmul %238, %237, %cst_74 {dimension_numbers = #tpu.dot_dimension_numbers<[1], [0], [0], [1], [0, 0, 1, 1], [], []>} : vector<80x80xbf16>, vector<80x128xbf16>, vector<80x128xf32> -> vector<80x128xf32>
    %240 = vector.extract_strided_slice %212 {offsets = [0, 128], sizes = [80, 128], strides = [1, 1]} : vector<80x256xbf16> to vector<80x128xbf16>
    %241 = vector.extract_strided_slice %217 {offsets = [0, 128], sizes = [80, 128], strides = [1, 1]} : vector<80x256xbf16> to vector<80x128xbf16>
    "tpu.trace_start"() <{level = 10 : i32, message = "qd,kd->qk"}> : () -> ()
    %cst_75 = arith.constant dense<0.000000e+00> : vector<80x80xf32>
    %242 = tpu.matmul %240, %241, %cst_75 {dimension_numbers = #tpu.dot_dimension_numbers<[1], [1], [0], [0], [0, 0, 1, 0], [], []>} : vector<80x128xbf16>, vector<80x128xbf16>, vector<80x80xf32> -> vector<80x80xf32>
    "tpu.trace_stop"() : () -> ()
    %243 = arith.addf %242, %3 : vector<80x80xf32>
    %cst_76 = arith.constant dense<0xFF800000> : vector<80xf32>
    %244 = vector.multi_reduction <maximumf>, %243, %cst_76 [1] : vector<80x80xf32> to vector<80xf32>
    %245 = vector.shape_cast %244 : vector<80xf32> to vector<80x1xf32>
    %246 = vector.broadcast %245 : vector<80x1xf32> to vector<80x80xf32>
    %247 = arith.subf %243, %246 : vector<80x80xf32>
    %248 = math.exp %247 : vector<80x80xf32>
    %cst_77 = arith.constant dense<0.000000e+00> : vector<80xf32>
    %249 = vector.multi_reduction <add>, %248, %cst_77 [1] : vector<80x80xf32> to vector<80xf32>
    %250 = vector.shape_cast %249 : vector<80xf32> to vector<80x1xf32>
    %251 = tpu.reciprocal %250 {approx = true} : vector<80x1xf32> -> vector<80x1xf32>
    %252 = vector.broadcast %251 : vector<80x1xf32> to vector<80x80xf32>
    %253 = arith.mulf %248, %252 : vector<80x80xf32>
    %254 = vector.extract_strided_slice %222 {offsets = [0, 128], sizes = [80, 128], strides = [1, 1]} : vector<80x256xbf16> to vector<80x128xbf16>
    %255 = arith.truncf %253 : vector<80x80xf32> to vector<80x80xbf16>
    %cst_78 = arith.constant dense<0.000000e+00> : vector<80x128xf32>
    %256 = tpu.matmul %255, %254, %cst_78 {dimension_numbers = #tpu.dot_dimension_numbers<[1], [0], [0], [1], [0, 0, 1, 1], [], []>} : vector<80x80xbf16>, vector<80x128xbf16>, vector<80x128xf32> -> vector<80x128xf32>
    %257 = tpu.concatenate %239, %256 in 1 : vector<80x128xf32>, vector<80x128xf32> -> vector<80x256xf32>
    %c1_79 = arith.constant 1 : index
    %c0_80 = arith.constant 0 : index
    %c0_81 = arith.constant 0 : index
    %258 = vector.load %arg5[%c1_79, %c0_80, %c0_81] : memref<2x256x128xbf16, #tpu.memory_space<vmem>>, vector<1x256x128xbf16>
    %259 = vector.shape_cast %258 : vector<1x256x128xbf16> to vector<256x128xbf16>
    %260 = arith.truncf %257 : vector<80x256xf32> to vector<80x256xbf16>
    %cst_82 = arith.constant dense<0.000000e+00> : vector<80x128xf32>
    %261 = tpu.matmul %260, %259, %cst_82 {dimension_numbers = #tpu.dot_dimension_numbers<[1], [0], [0], [1], [0, 0, 1, 1], [], []>} : vector<80x256xbf16>, vector<256x128xbf16>, vector<80x128xf32> -> vector<80x128xf32>
    %262 = vector.extract_strided_slice %177 {offsets = [3, 0], sizes = [1, 128], strides = [1, 1]} : vector<16x256xf32> to vector<1x128xf32>
    %263 = vector.broadcast %262 : vector<1x128xf32> to vector<80x128xf32>
    %264 = arith.addf %261, %263 : vector<80x128xf32>
    %265 = arith.addf %172, %264 : vector<80x128xf32>
    %266 = vector.extract_strided_slice %177 {offsets = [8, 0], sizes = [1, 128], strides = [1, 1]} : vector<16x256xf32> to vector<1x128xf32>
    %267 = vector.extract_strided_slice %177 {offsets = [9, 0], sizes = [1, 128], strides = [1, 1]} : vector<16x256xf32> to vector<1x128xf32>
    %cst_83 = arith.constant dense<0.000000e+00> : vector<80xf32>
    %268 = vector.multi_reduction <add>, %265, %cst_83 [1] : vector<80x128xf32> to vector<80xf32>
    %269 = vector.shape_cast %268 : vector<80xf32> to vector<80x1xf32>
    %cst_84 = arith.constant 3.125000e-02 : f32
    %270 = vector.broadcast %cst_84 : f32 to vector<80x1xf32>
    %271 = arith.mulf %269, %270 : vector<80x1xf32>
    %272 = vector.broadcast %271 : vector<80x1xf32> to vector<80x128xf32>
    %273 = arith.subf %265, %272 : vector<80x128xf32>
    %cst_85 = arith.constant 0.000000e+00 : f32
    %274 = vector.shape_cast %2 : vector<1x128xi1> to vector<1x128xi1>
    %275 = vector.broadcast %274 : vector<1x128xi1> to vector<80x128xi1>
    %276 = vector.broadcast %cst_85 : f32 to vector<80x128xf32>
    %277 = arith.select %275, %273, %276 : vector<80x128xi1>, vector<80x128xf32>
    %278 = arith.mulf %277, %277 : vector<80x128xf32>
    %cst_86 = arith.constant dense<0.000000e+00> : vector<80xf32>
    %279 = vector.multi_reduction <add>, %278, %cst_86 [1] : vector<80x128xf32> to vector<80xf32>
    %280 = vector.shape_cast %279 : vector<80xf32> to vector<80x1xf32>
    %cst_87 = arith.constant 3.125000e-02 : f32
    %281 = vector.broadcast %cst_87 : f32 to vector<80x1xf32>
    %282 = arith.mulf %280, %281 : vector<80x1xf32>
    %cst_88 = arith.constant 9.99999974E-6 : f32
    %283 = vector.broadcast %cst_88 : f32 to vector<80x1xf32>
    %284 = arith.addf %282, %283 : vector<80x1xf32>
    %285 = math.rsqrt %284 : vector<80x1xf32>
    %286 = vector.broadcast %285 : vector<80x1xf32> to vector<80x128xf32>
    %287 = arith.mulf %277, %286 : vector<80x128xf32>
    %288 = vector.broadcast %266 : vector<1x128xf32> to vector<80x128xf32>
    %289 = arith.mulf %287, %288 : vector<80x128xf32>
    %290 = vector.broadcast %267 : vector<1x128xf32> to vector<80x128xf32>
    %291 = arith.addf %289, %290 : vector<80x128xf32>
    %c1_89 = arith.constant 1 : index
    %c0_90 = arith.constant 0 : index
    %c0_91 = arith.constant 0 : index
    %292 = vector.load %arg6[%c1_89, %c0_90, %c0_91] : memref<2x128x128xbf16, #tpu.memory_space<vmem>>, vector<1x128x128xbf16>
    %293 = vector.shape_cast %292 : vector<1x128x128xbf16> to vector<128x128xbf16>
    %294 = arith.truncf %291 : vector<80x128xf32> to vector<80x128xbf16>
    %cst_92 = arith.constant dense<0.000000e+00> : vector<80x128xf32>
    %295 = tpu.matmul %294, %293, %cst_92 {dimension_numbers = #tpu.dot_dimension_numbers<[1], [0], [0], [1], [0, 0, 1, 1], [], []>} : vector<80x128xbf16>, vector<128x128xbf16>, vector<80x128xf32> -> vector<80x128xf32>
    %296 = vector.extract_strided_slice %177 {offsets = [4, 0], sizes = [1, 128], strides = [1, 1]} : vector<16x256xf32> to vector<1x128xf32>
    %297 = vector.broadcast %296 : vector<1x128xf32> to vector<80x128xf32>
    %298 = arith.addf %295, %297 : vector<80x128xf32>
    %cst_93 = arith.constant 1.702000e+00 : f32
    %299 = vector.broadcast %cst_93 : f32 to vector<80x128xf32>
    %300 = arith.mulf %299, %298 : vector<80x128xf32>
    %301 = arith.negf %300 : vector<80x128xf32>
    %302 = math.exp %301 : vector<80x128xf32>
    %cst_94 = arith.constant 1.000000e+00 : f32
    %303 = vector.broadcast %cst_94 : f32 to vector<80x128xf32>
    %304 = arith.addf %303, %302 : vector<80x128xf32>
    %305 = arith.divf %303, %304 : vector<80x128xf32>
    %306 = arith.mulf %298, %305 : vector<80x128xf32>
    %c1_95 = arith.constant 1 : index
    %c0_96 = arith.constant 0 : index
    %c0_97 = arith.constant 0 : index
    %307 = vector.load %arg7[%c1_95, %c0_96, %c0_97] : memref<2x128x128xbf16, #tpu.memory_space<vmem>>, vector<1x128x128xbf16>
    %308 = vector.shape_cast %307 : vector<1x128x128xbf16> to vector<128x128xbf16>
    %309 = arith.truncf %306 : vector<80x128xf32> to vector<80x128xbf16>
    %cst_98 = arith.constant dense<0.000000e+00> : vector<80x128xf32>
    %310 = tpu.matmul %309, %308, %cst_98 {dimension_numbers = #tpu.dot_dimension_numbers<[1], [0], [0], [1], [0, 0, 1, 1], [], []>} : vector<80x128xbf16>, vector<128x128xbf16>, vector<80x128xf32> -> vector<80x128xf32>
    %311 = vector.extract_strided_slice %177 {offsets = [5, 0], sizes = [1, 128], strides = [1, 1]} : vector<16x256xf32> to vector<1x128xf32>
    %312 = vector.broadcast %311 : vector<1x128xf32> to vector<80x128xf32>
    %313 = arith.addf %310, %312 : vector<80x128xf32>
    %314 = arith.addf %265, %313 : vector<80x128xf32>
    %c2 = arith.constant 2 : index
    %c0_99 = arith.constant 0 : index
    %c0_100 = arith.constant 0 : index
    %315 = vector.load %arg9[%c2, %c0_99, %c0_100] : memref<3x80x128xf32, #tpu.memory_space<vmem>>, vector<1x80x128xf32>
    %316 = vector.shape_cast %315 : vector<1x80x128xf32> to vector<80x128xf32>
    %317 = vector.shape_cast %314 : vector<80x128xf32> to vector<1x80x128xf32>
    tpu.vector_store %arg9[%c2, %c0_99, %c0_100], %317 {strides = array<i32>} : memref<3x80x128xf32, #tpu.memory_space<vmem>>, vector<1x80x128xf32>,
    %318 = vector.extract_strided_slice %314 {offsets = [0, 0], sizes = [1, 128], strides = [1, 1]} : vector<80x128xf32> to vector<1x128xf32>
    %319 = vector.extract_strided_slice %314 {offsets = [40, 0], sizes = [1, 128], strides = [1, 1]} : vector<80x128xf32> to vector<1x128xf32>
    %320 = tpu.concatenate %318, %319 in 0 : vector<1x128xf32>, vector<1x128xf32> -> vector<2x128xf32>
    %c2_101 = arith.constant 2 : index
    %c0_102 = arith.constant 0 : index
    %321 = vector.load %arg3[%c2_101, %c0_102] : memref<8x128xf32, #tpu.memory_space<vmem>>, vector<1x128xf32>
    %c3 = arith.constant 3 : index
    %c0_103 = arith.constant 0 : index
    %322 = vector.load %arg3[%c3, %c0_103] : memref<8x128xf32, #tpu.memory_space<vmem>>, vector<1x128xf32>
    %cst_104 = arith.constant dense<0.000000e+00> : vector<2xf32>
    %323 = vector.multi_reduction <add>, %320, %cst_104 [1] : vector<2x128xf32> to vector<2xf32>
    %324 = vector.shape_cast %323 : vector<2xf32> to vector<2x1xf32>
    %cst_105 = arith.constant 3.125000e-02 : f32
    %325 = vector.broadcast %cst_105 : f32 to vector<2x1xf32>
    %326 = arith.mulf %324, %325 : vector<2x1xf32>
    %327 = vector.broadcast %326 : vector<2x1xf32> to vector<2x128xf32>
    %328 = arith.subf %320, %327 : vector<2x128xf32>
    %cst_106 = arith.constant 0.000000e+00 : f32
    %329 = vector.shape_cast %2 : vector<1x128xi1> to vector<1x128xi1>
    %330 = vector.broadcast %329 : vector<1x128xi1> to vector<2x128xi1>
    %331 = vector.broadcast %cst_106 : f32 to vector<2x128xf32>
    %332 = arith.select %330, %328, %331 : vector<2x128xi1>, vector<2x128xf32>
    %333 = arith.mulf %332, %332 : vector<2x128xf32>
    %cst_107 = arith.constant dense<0.000000e+00> : vector<2xf32>
    %334 = vector.multi_reduction <add>, %333, %cst_107 [1] : vector<2x128xf32> to vector<2xf32>
    %335 = vector.shape_cast %334 : vector<2xf32> to vector<2x1xf32>
    %cst_108 = arith.constant 3.125000e-02 : f32
    %336 = vector.broadcast %cst_108 : f32 to vector<2x1xf32>
    %337 = arith.mulf %335, %336 : vector<2x1xf32>
    %cst_109 = arith.constant 9.99999974E-6 : f32
    %338 = vector.broadcast %cst_109 : f32 to vector<2x1xf32>
    %339 = arith.addf %337, %338 : vector<2x1xf32>
    %340 = math.rsqrt %339 : vector<2x1xf32>
    %341 = vector.broadcast %340 : vector<2x1xf32> to vector<2x128xf32>
    %342 = arith.mulf %332, %341 : vector<2x128xf32>
    %343 = vector.broadcast %321 : vector<1x128xf32> to vector<2x128xf32>
    %344 = arith.mulf %342, %343 : vector<2x128xf32>
    %345 = vector.broadcast %322 : vector<1x128xf32> to vector<2x128xf32>
    %346 = arith.addf %344, %345 : vector<2x128xf32>
    %c0_110 = arith.constant 0 : index
    %c0_111 = arith.constant 0 : index
    %347 = vector.load %arg10[%c0_110, %c0_111] : memref<2x128xf32, #tpu.memory_space<vmem>>, vector<2x128xf32>
    tpu.vector_store %arg10[%c0_110, %c0_111], %346 {strides = array<i32>} : memref<2x128xf32, #tpu.memory_space<vmem>>, vector<2x128xf32>,
    return
  }
  func.func @transform_0(%arg0: i32) -> (i32, i32) {
    %c0_i32 = arith.constant 0 : i32
    %c0_i32_0 = arith.constant 0 : i32
    %c0_i32_1 = arith.constant 0 : i32
    return %c0_i32, %c0_i32_0 : i32, i32
  }
  func.func @transform_1(%arg0: i32) -> (i32, i32) {
    %c0_i32 = arith.constant 0 : i32
    %c0_i32_0 = arith.constant 0 : i32
    %c0_i32_1 = arith.constant 0 : i32
    return %c0_i32, %c0_i32_0 : i32, i32
  }
  func.func @transform_2(%arg0: i32) -> (i32, i32) {
    %c0_i32 = arith.constant 0 : i32
    %c0_i32_0 = arith.constant 0 : i32
    %c0_i32_1 = arith.constant 0 : i32
    return %c0_i32, %c0_i32_0 : i32, i32
  }
  func.func @transform_3(%arg0: i32) -> (i32, i32, i32) {
    %c0_i32 = arith.constant 0 : i32
    %c0_i32_0 = arith.constant 0 : i32
    %c0_i32_1 = arith.constant 0 : i32
    %c0_i32_2 = arith.constant 0 : i32
    return %c0_i32, %c0_i32_0, %c0_i32_1 : i32, i32, i32
  }
  func.func @transform_4(%arg0: i32) -> (i32, i32, i32) {
    %c0_i32 = arith.constant 0 : i32
    %c0_i32_0 = arith.constant 0 : i32
    %c0_i32_1 = arith.constant 0 : i32
    %c0_i32_2 = arith.constant 0 : i32
    return %c0_i32, %c0_i32_0, %c0_i32_1 : i32, i32, i32
  }
  func.func @transform_5(%arg0: i32) -> (i32, i32, i32) {
    %c0_i32 = arith.constant 0 : i32
    %c0_i32_0 = arith.constant 0 : i32
    %c0_i32_1 = arith.constant 0 : i32
    %c0_i32_2 = arith.constant 0 : i32
    return %c0_i32, %c0_i32_0, %c0_i32_1 : i32, i32, i32
  }
  func.func @transform_6(%arg0: i32) -> (i32, i32, i32) {
    %c0_i32 = arith.constant 0 : i32
    %c0_i32_0 = arith.constant 0 : i32
    %c0_i32_1 = arith.constant 0 : i32
    %c0_i32_2 = arith.constant 0 : i32
    return %c0_i32, %c0_i32_0, %c0_i32_1 : i32, i32, i32
  }
  func.func @transform_7(%arg0: i32) -> (i32, i32, i32) {
    %c0_i32 = arith.constant 0 : i32
    %c0_i32_0 = arith.constant 0 : i32
    %c0_i32_1 = arith.constant 0 : i32
    %c0_i32_2 = arith.constant 0 : i32
    return %c0_i32, %c0_i32_0, %c0_i32_1 : i32, i32, i32
  }
  func.func @transform_8(%arg0: i32) -> (i32, i32, i32) {
    %c0_i32 = arith.constant 0 : i32
    %c0_i32_0 = arith.constant 0 : i32
    %c0_i32_1 = arith.constant 0 : i32
    %c0_i32_2 = arith.constant 0 : i32
    return %c0_i32, %c0_i32_0, %c0_i32_1 : i32, i32, i32
  }
  func.func @transform_9(%arg0: i32) -> (i32, i32) {
    %c0_i32 = arith.constant 0 : i32
    %c0_i32_0 = arith.constant 0 : i32
    %c0_i32_1 = arith.constant 0 : i32
    return %c0_i32, %c0_i32_0 : i32, i32
  }
}

</mosaic_0001>

<llo_original>
// kernel: tpu_custom_call.1
$region0: #{tpu_custom_call.1}
  #allocation0 [shape = 'u32[]', space=smem, size = 0x4, offset = 0x4, fixed_abs, tag = 'smem constant byte address 0x4 - core index']
  #allocation1 [shape = 'u32[144,128]{1,0:T(1,128)}', space=vmem, size = 0x12000, scoped, tag = 'internal scratch']
  %s0 = inlined_call_operand.hbm [shape: f32[80,128], index: 0, kind: input, shape index: {}]
  %s1 = inlined_call_operand.hbm [shape: f32[80,80], index: 1, kind: input, shape index: {}]
  %s2 = inlined_call_operand.hbm [shape: f32[8,128], index: 2, kind: input, shape index: {}]
  %s3 = inlined_call_operand.hbm [shape: bf16[2,128,768], index: 3, kind: input, shape index: {}]
  %s4 = inlined_call_operand.hbm [shape: bf16[2,256,128], index: 4, kind: input, shape index: {}]
  %s5 = inlined_call_operand.hbm [shape: bf16[2,128,128], index: 5, kind: input, shape index: {}]
  %s6 = inlined_call_operand.hbm [shape: bf16[2,128,128], index: 6, kind: input, shape index: {}]
  %s7 = inlined_call_operand.hbm [shape: f32[2,16,256], index: 7, kind: input, shape index: {}]
  %s8 = inlined_call_operand.hbm [shape: f32[3,80,128], index: 8, kind: output, shape index: {0}]
  %s9 = inlined_call_operand.hbm [shape: f32[2,128], index: 9, kind: output, shape index: {1}]
  %10 = xla_tuple %s8, %s9
  %s11 = sld [smem:[#allocation0]]
  $region82: #{tpu_custom_call.1} parent=0
    _
  %s13 = ssub.s32 1, %s11
  %s14 = scalar_select 0, %s13, %s11
  $region1: #{tpu_custom_call.1} parent=0
    #allocation2 [shape = 'u8[40960]{0}', space=vmem, size = 0xa000, scoped, tag = 'input window, operand 0, single buffered']
    #allocation3 [shape = 's32[1]{0}', space=sflag, size = 0x4, scoped, tag = 'scoped memory for tpu_custom_call.1']
    #allocation4 [shape = 's32[1]{0}', space=sflag, size = 0x4, scoped, tag = 'scoped memory for tpu_custom_call.1']
    #allocation5 [shape = 'u8[40960]{0}', space=vmem, size = 0xa000, scoped, tag = 'input window, operand 1, single buffered']
    #allocation6 [shape = 's32[1]{0}', space=sflag, size = 0x4, scoped, tag = 'scoped memory for tpu_custom_call.1']
    #allocation7 [shape = 'u8[4096]{0}', space=vmem, size = 0x1000, scoped, tag = 'input window, operand 2, single buffered']
    #allocation8 [shape = 'u8[393216]{0}', space=vmem, size = 0x60000, scoped, tag = 'input window, operand 3, single buffered']
    #allocation9 [shape = 's32[1]{0}', space=sflag, size = 0x4, scoped, tag = 'scoped memory for tpu_custom_call.1']
    #allocation10 [shape = 'u8[131072]{0}', space=vmem, size = 0x20000, scoped, tag = 'input window, operand 4, single buffered']
    #allocation11 [shape = 'u8[65536]{0}', space=vmem, size = 0x10000, scoped, tag = 'input window, operand 5, single buffered']
    #allocation12 [shape = 's32[1]{0}', space=sflag, size = 0x4, scoped, tag = 'scoped memory for tpu_custom_call.1']
    #allocation13 [shape = 'u8[65536]{0}', space=vmem, size = 0x10000, scoped, tag = 'input window, operand 6, single buffered']
    #allocation14 [shape = 'u8[32768]{0}', space=vmem, size = 0x8000, scoped, tag = 'input window, operand 7, single buffered']
    #allocation15 [shape = 's32[1]{0}', space=sflag, size = 0x4, scoped, tag = 'scoped memory for tpu_custom_call.1']
    #allocation16 [shape = 'u8[122880]{0}', space=vmem, size = 0x1e000, scoped, tag = 'output window, operand 0, single buffered']
    #allocation17 [shape = 'u8[1024]{0}', space=vmem, size = 0x400, scoped, tag = 'output window, operand 1, single buffered']
    #allocation18 [shape = 's32[1]{0}', space=sflag, size = 0x4, scoped, tag = 'scoped memory for tpu_custom_call.1']
    %15 = vsyncpa [#allocation3], 0
    %16 = vsyncpa [#allocation6], 0
    %17 = vsyncpa [#allocation9], 0
    %18 = vsyncpa [#allocation12], 0
    %19 = vsyncpa [#allocation15], 0
    %20 = vsyncpa [#allocation4], 0
    %21 = vsyncpa [#allocation18], 0
    // Predicated region
    $region2: #{tpu_custom_call.1} parent=1 // pred_check
      _
    $region3: #{tpu_custom_call.1} parent=1 // pred_check_branch
      %23 = sbr.rel (0) target = $region5
    $region4: #{tpu_custom_call.1} parent=1 // pred_region
      %s25 = ssub.s32 1280, 1280
      %26 = vsyncadd [#allocation3], %s25
      %s27 = sshll.u32 [#allocation2], 4
      %s28 = int_to_ptr.vmem [resolvable:$true] %s27
      %33 = dma.hbm_to_vmem [thread:$0]  %s0, 1280, %s28, [#allocation3], 128, 128, 8
    $region5: #{tpu_custom_call.1} parent=1 // pred_fallthru
      _
    // Predicated region
    $region6: #{tpu_custom_call.1} parent=1 // pred_check
      _
    $region7: #{tpu_custom_call.1} parent=1 // pred_check_branch
      %35 = sbr.rel (0) target = $region9
    $region8: #{tpu_custom_call.1} parent=1 // pred_region
      %s37 = ssub.s32 1280, 1280
      %38 = vsyncadd [#allocation6], %s37
      %s39 = sshll.u32 [#allocation5], 4
      %s40 = int_to_ptr.vmem [resolvable:$true] %s39
      %45 = dma.hbm_to_vmem [thread:$0]  %s1, 1280, %s40, [#allocation6], 128, 128, 8
    $region9: #{tpu_custom_call.1} parent=1 // pred_fallthru
      _
    // Predicated region
    $region10: #{tpu_custom_call.1} parent=1 // pred_check
      _
    $region11: #{tpu_custom_call.1} parent=1 // pred_check_branch
      %47 = sbr.rel (0) target = $region13
    $region12: #{tpu_custom_call.1} parent=1 // pred_region
      %s49 = ssub.s32 128, 128
      %50 = vsyncadd [#allocation6], %s49
      %s52 = sshll.u32 [#allocation7], 4
      %s53 = int_to_ptr.vmem [resolvable:$true] %s52
      %55 = dma.hbm_to_vmem [thread:$0]  %s2, 128, %s53, [#allocation6]
    $region13: #{tpu_custom_call.1} parent=1 // pred_fallthru
      _
    // Predicated region
    $region14: #{tpu_custom_call.1} parent=1 // pred_check
      _
    $region15: #{tpu_custom_call.1} parent=1 // pred_check_branch
      %57 = sbr.rel (0) target = $region17
    $region16: #{tpu_custom_call.1} parent=1 // pred_region
      %s59 = ssub.s32 12288, 12288
      %60 = vsyncadd [#allocation9], %s59
      %s61 = sshll.u32 [#allocation8], 4
      %s62 = int_to_ptr.vmem [resolvable:$true] %s61
      %67 = dma.hbm_to_vmem [thread:$0]  %s3, 12288, %s62, [#allocation9], 384, 384, 24
    $region17: #{tpu_custom_call.1} parent=1 // pred_fallthru
      _
    // Predicated region
    $region18: #{tpu_custom_call.1} parent=1 // pred_check
      _
    $region19: #{tpu_custom_call.1} parent=1 // pred_check_branch
      %69 = sbr.rel (0) target = $region21
    $region20: #{tpu_custom_call.1} parent=1 // pred_region
      %s71 = ssub.s32 4096, 4096
      %72 = vsyncadd [#allocation9], %s71
      %s73 = sshll.u32 [#allocation10], 4
      %s74 = int_to_ptr.vmem [resolvable:$true] %s73
      %79 = dma.hbm_to_vmem [thread:$0]  %s4, 4096, %s74, [#allocation9], 64, 64, 4
    $region21: #{tpu_custom_call.1} parent=1 // pred_fallthru
      _
    // Predicated region
    $region22: #{tpu_custom_call.1} parent=1 // pred_check
      _
    $region23: #{tpu_custom_call.1} parent=1 // pred_check_branch
      %81 = sbr.rel (0) target = $region25
    $region24: #{tpu_custom_call.1} parent=1 // pred_region
      %s83 = ssub.s32 2048, 2048
      %84 = vsyncadd [#allocation12], %s83
      %s85 = sshll.u32 [#allocation11], 4
      %s86 = int_to_ptr.vmem [resolvable:$true] %s85
      %91 = dma.hbm_to_vmem [thread:$0]  %s5, 2048, %s86, [#allocation12], 64, 64, 4
    $region25: #{tpu_custom_call.1} parent=1 // pred_fallthru
      _
    // Predicated region
    $region26: #{tpu_custom_call.1} parent=1 // pred_check
      _
    $region27: #{tpu_custom_call.1} parent=1 // pred_check_branch
      %93 = sbr.rel (0) target = $region29
    $region28: #{tpu_custom_call.1} parent=1 // pred_region
      %s95 = ssub.s32 2048, 2048
      %96 = vsyncadd [#allocation12], %s95
      %s97 = sshll.u32 [#allocation13], 4
      %s98 = int_to_ptr.vmem [resolvable:$true] %s97
      %103 = dma.hbm_to_vmem [thread:$0]  %s6, 2048, %s98, [#allocation12], 64, 64, 4
    $region29: #{tpu_custom_call.1} parent=1 // pred_fallthru
      _
    // Predicated region
    $region30: #{tpu_custom_call.1} parent=1 // pred_check
      _
    $region31: #{tpu_custom_call.1} parent=1 // pred_check_branch
      %105 = sbr.rel (0) target = $region33
    $region32: #{tpu_custom_call.1} parent=1 // pred_region
      %s107 = ssub.s32 1024, 1024
      %108 = vsyncadd [#allocation15], %s107
      %s109 = sshll.u32 [#allocation14], 4
      %s110 = int_to_ptr.vmem [resolvable:$true] %s109
      %115 = dma.hbm_to_vmem [thread:$0]  %s7, 1024, %s110, [#allocation15], 256, 256, 16
    $region33: #{tpu_custom_call.1} parent=1 // pred_fallthru
      _
    // Predicated region
    $region34: #{tpu_custom_call.1} parent=1 // pred_check
      _
    $region35: #{tpu_custom_call.1} parent=1 // pred_check_branch
      %117 = sbr.rel (0) target = $region37
    $region36: #{tpu_custom_call.1} parent=1 // pred_region
      %118 = dma.done [#allocation3], 1280
    $region37: #{tpu_custom_call.1} parent=1 // pred_fallthru
      _
    // Predicated region
    $region38: #{tpu_custom_call.1} parent=1 // pred_check
      _
    $region39: #{tpu_custom_call.1} parent=1 // pred_check_branch
      %120 = sbr.rel (0) target = $region41
    $region40: #{tpu_custom_call.1} parent=1 // pred_region
      %121 = dma.done [#allocation6], 1280
    $region41: #{tpu_custom_call.1} parent=1 // pred_fallthru
      _
    // Predicated region
    $region42: #{tpu_custom_call.1} parent=1 // pred_check
      _
    $region43: #{tpu_custom_call.1} parent=1 // pred_check_branch
      %123 = sbr.rel (0) target = $region45
    $region44: #{tpu_custom_call.1} parent=1 // pred_region
      %124 = dma.done [#allocation6], 128
    $region45: #{tpu_custom_call.1} parent=1 // pred_fallthru
      _
    // Predicated region
    $region46: #{tpu_custom_call.1} parent=1 // pred_check
      _
    $region47: #{tpu_custom_call.1} parent=1 // pred_check_branch
      %126 = sbr.rel (0) target = $region49
    $region48: #{tpu_custom_call.1} parent=1 // pred_region
      %127 = dma.done [#allocation9], 12288
    $region49: #{tpu_custom_call.1} parent=1 // pred_fallthru
      _
    // Predicated region
    $region50: #{tpu_custom_call.1} parent=1 // pred_check
      _
    $region51: #{tpu_custom_call.1} parent=1 // pred_check_branch
      %129 = sbr.rel (0) target = $region53
    $region52: #{tpu_custom_call.1} parent=1 // pred_region
      %130 = dma.done [#allocation9], 4096
    $region53: #{tpu_custom_call.1} parent=1 // pred_fallthru
      _
    // Predicated region
    $region54: #{tpu_custom_call.1} parent=1 // pred_check
      _
    $region55: #{tpu_custom_call.1} parent=1 // pred_check_branch
      %132 = sbr.rel (0) target = $region57
    $region56: #{tpu_custom_call.1} parent=1 // pred_region
      %133 = dma.done [#allocation12], 2048
    $region57: #{tpu_custom_call.1} parent=1 // pred_fallthru
      _
    // Predicated region
    $region58: #{tpu_custom_call.1} parent=1 // pred_check
      _
    $region59: #{tpu_custom_call.1} parent=1 // pred_check_branch
      %135 = sbr.rel (0) target = $region61
    $region60: #{tpu_custom_call.1} parent=1 // pred_region
      %136 = dma.done [#allocation12], 2048
    $region61: #{tpu_custom_call.1} parent=1 // pred_fallthru
      _
    // Predicated region
    $region62: #{tpu_custom_call.1} parent=1 // pred_check
      _
    $region63: #{tpu_custom_call.1} parent=1 // pred_check_branch
      %138 = sbr.rel (0) target = $region65
    $region64: #{tpu_custom_call.1} parent=1 // pred_region
      %139 = dma.done [#allocation15], 1024
    $region65: #{tpu_custom_call.1} parent=1 // pred_fallthru
      _
    %v141 = vlaneseq
    %v142 = vand.u32 %v141, 127
    %vm143 = vcmp.lt.s32.totalorder %v142, 32
    %v144 = vld [vmem:[#allocation5] sm:$0xff]
    %v145 = vld [vmem:[#allocation5 + $0x8] sm:$0xff]
    %v146 = vld [vmem:[#allocation5 + $0x10] sm:$0xff]
    %v147 = vld [vmem:[#allocation5 + $0x18] sm:$0xff]
    %v148 = vld [vmem:[#allocation5 + $0x20] sm:$0xff]
    %v149 = vld [vmem:[#allocation5 + $0x28] sm:$0xff]
    %v150 = vld [vmem:[#allocation5 + $0x30] sm:$0xff]
    %v151 = vld [vmem:[#allocation5 + $0x38] sm:$0xff]
    %v152 = vld [vmem:[#allocation5 + $0x40] sm:$0xff]
    %v153 = vld [vmem:[#allocation5 + $0x48] sm:$0xff]
    %v154 = vld [vmem:[#allocation2] sm:$0xff]
    %v155 = vld [vmem:[#allocation2 + $0x8] sm:$0xff]
    %v156 = vld [vmem:[#allocation2 + $0x10] sm:$0xff]
    %v157 = vld [vmem:[#allocation2 + $0x18] sm:$0xff]
    %v158 = vld [vmem:[#allocation2 + $0x20] sm:$0xff]
    %v159 = vld [vmem:[#allocation2 + $0x28] sm:$0xff]
    %v160 = vld [vmem:[#allocation2 + $0x30] sm:$0xff]
    %v161 = vld [vmem:[#allocation2 + $0x38] sm:$0xff]
    %v162 = vld [vmem:[#allocation2 + $0x40] sm:$0xff]
    %v163 = vld [vmem:[#allocation2 + $0x48] sm:$0xff]
    %v164 = vld [vmem:[#allocation7] sm:$0x1]
    %v165 = vld [vmem:[#allocation7 + $0x1] sm:$0x1]
    %166 = vadd.xlane.f32.xlu0 %v154
    %v167 = vpop.xlane.xlu0 %166
    %168 = vadd.xlane.f32.xlu0 %v155
    %v169 = vpop.xlane.xlu0 %168
    %170 = vadd.xlane.f32.xlu0 %v156
    %v171 = vpop.xlane.xlu0 %170
    %172 = vadd.xlane.f32.xlu0 %v157
    %v173 = vpop.xlane.xlu0 %172
    %174 = vadd.xlane.f32.xlu0 %v158
    %v175 = vpop.xlane.xlu0 %174
    %176 = vadd.xlane.f32.xlu0 %v159
    %v177 = vpop.xlane.xlu0 %176
    %178 = vadd.xlane.f32.xlu0 %v160
    %v179 = vpop.xlane.xlu0 %178
    %180 = vadd.xlane.f32.xlu0 %v161
    %v181 = vpop.xlane.xlu0 %180
    %182 = vadd.xlane.f32.xlu0 %v162
    %v183 = vpop.xlane.xlu0 %182
    %184 = vadd.xlane.f32.xlu0 %v163
    %v185 = vpop.xlane.xlu0 %184
    %v186 = vmul.f32 %v167, 0.03125
    %v187 = vmul.f32 %v169, 0.03125
    %v188 = vmul.f32 %v171, 0.03125
    %v189 = vmul.f32 %v173, 0.03125
    %v190 = vmul.f32 %v175, 0.03125
    %v191 = vmul.f32 %v177, 0.03125
    %v192 = vmul.f32 %v179, 0.03125
    %v193 = vmul.f32 %v181, 0.03125
    %v194 = vmul.f32 %v183, 0.03125
    %v195 = vmul.f32 %v185, 0.03125
    %v196 = vsub.f32 %v154, %v186
    %v197 = vsub.f32 %v155, %v187
    %v198 = vsub.f32 %v156, %v188
    %v199 = vsub.f32 %v157, %v189
    %v200 = vsub.f32 %v158, %v190
    %v201 = vsub.f32 %v159, %v191
    %v202 = vsub.f32 %v160, %v192
    %v203 = vsub.f32 %v161, %v193
    %v204 = vsub.f32 %v162, %v194
    %v205 = vsub.f32 %v163, %v195
    %v206 = vsel %vm143, 1, 0
    %vm207 = vcmp.eq.s32.totalorder %v206, 1
    %v208 = vsel %vm207, %v196, 0.0
    %v209 = vsel %vm207, %v197, 0.0
    %v210 = vsel %vm207, %v198, 0.0
    %v211 = vsel %vm207, %v199, 0.0
    %v212 = vsel %vm207, %v200, 0.0
    %v213 = vsel %vm207, %v201, 0.0
    %v214 = vsel %vm207, %v202, 0.0
    %v215 = vsel %vm207, %v203, 0.0
    %v216 = vsel %vm207, %v204, 0.0
    %v217 = vsel %vm207, %v205, 0.0
    %v218 = vmul.f32 %v208, %v208
    %v219 = vmul.f32 %v209, %v209
    %v220 = vmul.f32 %v210, %v210
    %v221 = vmul.f32 %v211, %v211
    %v222 = vmul.f32 %v212, %v212
    %v223 = vmul.f32 %v213, %v213
    %v224 = vmul.f32 %v214, %v214
    %v225 = vmul.f32 %v215, %v215
    %v226 = vmul.f32 %v216, %v216
    %v227 = vmul.f32 %v217, %v217
    %228 = vadd.xlane.f32.xlu0 %v218
    %v229 = vpop.xlane.xlu0 %228
    %230 = vadd.xlane.f32.xlu0 %v219
    %v231 = vpop.xlane.xlu0 %230
    %232 = vadd.xlane.f32.xlu0 %v220
    %v233 = vpop.xlane.xlu0 %232
    %234 = vadd.xlane.f32.xlu0 %v221
    %v235 = vpop.xlane.xlu0 %234
    %236 = vadd.xlane.f32.xlu0 %v222
    %v237 = vpop.xlane.xlu0 %236
    %238 = vadd.xlane.f32.xlu0 %v223
    %v239 = vpop.xlane.xlu0 %238
    %240 = vadd.xlane.f32.xlu0 %v224
    %v241 = vpop.xlane.xlu0 %240
    %242 = vadd.xlane.f32.xlu0 %v225
    %v243 = vpop.xlane.xlu0 %242
    %244 = vadd.xlane.f32.xlu0 %v226
    %v245 = vpop.xlane.xlu0 %244
    %246 = vadd.xlane.f32.xlu0 %v227
    %v247 = vpop.xlane.xlu0 %246
    %v248 = vmul.f32 %v229, 0.03125
    %v249 = vmul.f32 %v231, 0.03125
    %v250 = vmul.f32 %v233, 0.03125
    %v251 = vmul.f32 %v235, 0.03125
    %v252 = vmul.f32 %v237, 0.03125
    %v253 = vmul.f32 %v239, 0.03125
    %v254 = vmul.f32 %v241, 0.03125
    %v255 = vmul.f32 %v243, 0.03125
    %v256 = vmul.f32 %v245, 0.03125
    %v257 = vmul.f32 %v247, 0.03125
    %v258 = vadd.f32 %v248, 1e-05
    %v259 = vadd.f32 %v249, 1e-05
    %v260 = vadd.f32 %v250, 1e-05
    %v261 = vadd.f32 %v251, 1e-05
    %v262 = vadd.f32 %v252, 1e-05
    %v263 = vadd.f32 %v253, 1e-05
    %v264 = vadd.f32 %v254, 1e-05
    %v265 = vadd.f32 %v255, 1e-05
    %v266 = vadd.f32 %v256, 1e-05
    %v267 = vadd.f32 %v257, 1e-05
    %v268 = vrsqrt.pop %v258
    %v269 = vrsqrt.pop %v259
    %v270 = vrsqrt.pop %v260
    %v271 = vrsqrt.pop %v261
    %v272 = vrsqrt.pop %v262
    %v273 = vrsqrt.pop %v263
    %v274 = vrsqrt.pop %v264
    %v275 = vrsqrt.pop %v265
    %v276 = vrsqrt.pop %v266
    %v277 = vrsqrt.pop %v267
    %v278 = vmul.f32 %v208, %v268
    %v279 = vmul.f32 %v209, %v269
    %v280 = vmul.f32 %v210, %v270
    %v281 = vmul.f32 %v211, %v271
    %v282 = vmul.f32 %v212, %v272
    %v283 = vmul.f32 %v213, %v273
    %v284 = vmul.f32 %v214, %v274
    %v285 = vmul.f32 %v215, %v275
    %v286 = vmul.f32 %v216, %v276
    %v287 = vmul.f32 %v217, %v277
    %v288 = vlaneseq
    %v289 = vshrl.u32 %v288, 7
    %v290 = vsub.s32 0, %v289
    %v291 = vrot.slane %v164, %v290
    %v292 = vmul.f32 %v278, %v291
    %v293 = vmul.f32 %v279, %v291
    %v294 = vmul.f32 %v280, %v291
    %v295 = vmul.f32 %v281, %v291
    %v296 = vmul.f32 %v282, %v291
    %v297 = vmul.f32 %v283, %v291
    %v298 = vmul.f32 %v284, %v291
    %v299 = vmul.f32 %v285, %v291
    %v300 = vmul.f32 %v286, %v291
    %v301 = vmul.f32 %v287, %v291
    %v302 = vlaneseq
    %v303 = vshrl.u32 %v302, 7
    %v304 = vsub.s32 0, %v303
    %v305 = vrot.slane %v165, %v304
    %v306 = vadd.f32 %v292, %v305
    %v307 = vadd.f32 %v293, %v305
    %v308 = vadd.f32 %v294, %v305
    %v309 = vadd.f32 %v295, %v305
    %v310 = vadd.f32 %v296, %v305
    %v311 = vadd.f32 %v297, %v305
    %v312 = vadd.f32 %v298, %v305
    %v313 = vadd.f32 %v299, %v305
    %v314 = vadd.f32 %v300, %v305
    %v315 = vadd.f32 %v301, %v305
    %316 = vst [vmem:[#allocation16] sm:$0xff] %v306
    %317 = vst [vmem:[#allocation16 + $0x8] sm:$0xff] %v307
    %318 = vst [vmem:[#allocation16 + $0x10] sm:$0xff] %v308
    %319 = vst [vmem:[#allocation16 + $0x18] sm:$0xff] %v309
    %320 = vst [vmem:[#allocation16 + $0x20] sm:$0xff] %v310
    %321 = vst [vmem:[#allocation16 + $0x28] sm:$0xff] %v311
    %322 = vst [vmem:[#allocation16 + $0x30] sm:$0xff] %v312
    %323 = vst [vmem:[#allocation16 + $0x38] sm:$0xff] %v313
    %324 = vst [vmem:[#allocation16 + $0x40] sm:$0xff] %v314
    %325 = vst [vmem:[#allocation16 + $0x48] sm:$0xff] %v315
    %v326 = vld [vmem:[#allocation14] sm:$0xff]
    %v327 = vld [vmem:[#allocation14 + $0x8] sm:$0xff]
    %v328 = vld [vmem:[#allocation14 + $0x10] sm:$0xff]
    %329 = vadd.xlane.f32.xlu0 %v306
    %v330 = vpop.xlane.xlu0 %329
    %331 = vadd.xlane.f32.xlu0 %v307
    %v332 = vpop.xlane.xlu0 %331
    %333 = vadd.xlane.f32.xlu0 %v308
    %v334 = vpop.xlane.xlu0 %333
    %335 = vadd.xlane.f32.xlu0 %v309
    %v336 = vpop.xlane.xlu0 %335
    %337 = vadd.xlane.f32.xlu0 %v310
    %v338 = vpop.xlane.xlu0 %337
    %339 = vadd.xlane.f32.xlu0 %v311
    %v340 = vpop.xlane.xlu0 %339
    %341 = vadd.xlane.f32.xlu0 %v312
    %v342 = vpop.xlane.xlu0 %341
    %343 = vadd.xlane.f32.xlu0 %v313
    %v344 = vpop.xlane.xlu0 %343
    %345 = vadd.xlane.f32.xlu0 %v314
    %v346 = vpop.xlane.xlu0 %345
    %347 = vadd.xlane.f32.xlu0 %v315
    %v348 = vpop.xlane.xlu0 %347
    %v349 = vmul.f32 %v330, 0.03125
    %v350 = vmul.f32 %v332, 0.03125
    %v351 = vmul.f32 %v334, 0.03125
    %v352 = vmul.f32 %v336, 0.03125
    %v353 = vmul.f32 %v338, 0.03125
    %v354 = vmul.f32 %v340, 0.03125
    %v355 = vmul.f32 %v342, 0.03125
    %v356 = vmul.f32 %v344, 0.03125
    %v357 = vmul.f32 %v346, 0.03125
    %v358 = vmul.f32 %v348, 0.03125
    %v359 = vsub.f32 %v306, %v349
    %v360 = vsub.f32 %v307, %v350
    %v361 = vsub.f32 %v308, %v351
    %v362 = vsub.f32 %v309, %v352
    %v363 = vsub.f32 %v310, %v353
    %v364 = vsub.f32 %v311, %v354
    %v365 = vsub.f32 %v312, %v355
    %v366 = vsub.f32 %v313, %v356
    %v367 = vsub.f32 %v314, %v357
    %v368 = vsub.f32 %v315, %v358
    %v369 = vsel %vm207, %v359, 0.0
    %v370 = vsel %vm207, %v360, 0.0
    %v371 = vsel %vm207, %v361, 0.0
    %v372 = vsel %vm207, %v362, 0.0
    %v373 = vsel %vm207, %v363, 0.0
    %v374 = vsel %vm207, %v364, 0.0
    %v375 = vsel %vm207, %v365, 0.0
    %v376 = vsel %vm207, %v366, 0.0
    %v377 = vsel %vm207, %v367, 0.0
    %v378 = vsel %vm207, %v368, 0.0
    %v379 = vmul.f32 %v369, %v369
    %v380 = vmul.f32 %v370, %v370
    %v381 = vmul.f32 %v371, %v371
    %v382 = vmul.f32 %v372, %v372
    %v383 = vmul.f32 %v373, %v373
    %v384 = vmul.f32 %v374, %v374
    %v385 = vmul.f32 %v375, %v375
    %v386 = vmul.f32 %v376, %v376
    %v387 = vmul.f32 %v377, %v377
    %v388 = vmul.f32 %v378, %v378
    %389 = vadd.xlane.f32.xlu0 %v379
    %v390 = vpop.xlane.xlu0 %389
    %391 = vadd.xlane.f32.xlu0 %v380
    %v392 = vpop.xlane.xlu0 %391
    %393 = vadd.xlane.f32.xlu0 %v381
    %v394 = vpop.xlane.xlu0 %393
    %395 = vadd.xlane.f32.xlu0 %v382
    %v396 = vpop.xlane.xlu0 %395
    %397 = vadd.xlane.f32.xlu0 %v383
    %v398 = vpop.xlane.xlu0 %397
    %399 = vadd.xlane.f32.xlu0 %v384
    %v400 = vpop.xlane.xlu0 %399
    %401 = vadd.xlane.f32.xlu0 %v385
    %v402 = vpop.xlane.xlu0 %401
    %403 = vadd.xlane.f32.xlu0 %v386
    %v404 = vpop.xlane.xlu0 %403
    %405 = vadd.xlane.f32.xlu0 %v387
    %v406 = vpop.xlane.xlu0 %405
    %407 = vadd.xlane.f32.xlu0 %v388
    %v408 = vpop.xlane.xlu0 %407
    %v409 = vmul.f32 %v390, 0.03125
    %v410 = vmul.f32 %v392, 0.03125
    %v411 = vmul.f32 %v394, 0.03125
    %v412 = vmul.f32 %v396, 0.03125
    %v413 = vmul.f32 %v398, 0.03125
    %v414 = vmul.f32 %v400, 0.03125
    %v415 = vmul.f32 %v402, 0.03125
    %v416 = vmul.f32 %v404, 0.03125
    %v417 = vmul.f32 %v406, 0.03125
    %v418 = vmul.f32 %v408, 0.03125
    %v419 = vadd.f32 %v409, 1e-05
    %v420 = vadd.f32 %v410, 1e-05
    %v421 = vadd.f32 %v411, 1e-05
    %v422 = vadd.f32 %v412, 1e-05
    %v423 = vadd.f32 %v413, 1e-05
    %v424 = vadd.f32 %v414, 1e-05
    %v425 = vadd.f32 %v415, 1e-05
    %v426 = vadd.f32 %v416, 1e-05
    %v427 = vadd.f32 %v417, 1e-05
    %v428 = vadd.f32 %v418, 1e-05
    %v429 = vrsqrt.pop %v419
    %v430 = vrsqrt.pop %v420
    %v431 = vrsqrt.pop %v421
    %v432 = vrsqrt.pop %v422
    %v433 = vrsqrt.pop %v423
    %v434 = vrsqrt.pop %v424
    %v435 = vrsqrt.pop %v425
    %v436 = vrsqrt.pop %v426
    %v437 = vrsqrt.pop %v427
    %v438 = vrsqrt.pop %v428
    %v439 = vmul.f32 %v369, %v429
    %v440 = vmul.f32 %v370, %v430
    %v441 = vmul.f32 %v371, %v431
    %v442 = vmul.f32 %v372, %v432
    %v443 = vmul.f32 %v373, %v433
    %v444 = vmul.f32 %v374, %v434
    %v445 = vmul.f32 %v375, %v435
    %v446 = vmul.f32 %v376, %v436
    %v447 = vmul.f32 %v377, %v437
    %v448 = vmul.f32 %v378, %v438
    %v449 = vlaneseq
    %v450 = vshrl.u32 %v449, 7
    %v451 = vsub.s32 6, %v450
    %v452 = vrot.slane %v326, %v451
    %v453 = vmul.f32 %v439, %v452
    %v454 = vmul.f32 %v440, %v452
    %v455 = vmul.f32 %v441, %v452
    %v456 = vmul.f32 %v442, %v452
    %v457 = vmul.f32 %v443, %v452
    %v458 = vmul.f32 %v444, %v452
    %v459 = vmul.f32 %v445, %v452
    %v460 = vmul.f32 %v446, %v452
    %v461 = vmul.f32 %v447, %v452
    %v462 = vmul.f32 %v448, %v452
    %v463 = vlaneseq
    %v464 = vshrl.u32 %v463, 7
    %v465 = vsub.s32 7, %v464
    %v466 = vrot.slane %v326, %v465
    %v467 = vadd.f32 %v453, %v466
    %v468 = vadd.f32 %v454, %v466
    %v469 = vadd.f32 %v455, %v466
    %v470 = vadd.f32 %v456, %v466
    %v471 = vadd.f32 %v457, %v466
    %v472 = vadd.f32 %v458, %v466
    %v473 = vadd.f32 %v459, %v466
    %v474 = vadd.f32 %v460, %v466
    %v475 = vadd.f32 %v461, %v466
    %v476 = vadd.f32 %v462, %v466
    %v477 = vld [vmem:[#allocation8] sm:$0xff]
    %v478 = vld [vmem:[#allocation8 + $0x8] sm:$0xff]
    %v479 = vld [vmem:[#allocation8 + $0x10] sm:$0xff]
    %v480 = vld [vmem:[#allocation8 + $0x18] sm:$0xff]
    %v481 = vld [vmem:[#allocation8 + $0x20] sm:$0xff]
    %v482 = vld [vmem:[#allocation8 + $0x28] sm:$0xff]
    %v483 = vld [vmem:[#allocation8 + $0x30] sm:$0xff]
    %v484 = vld [vmem:[#allocation8 + $0x38] sm:$0xff]
    %v485 = vld [vmem:[#allocation8 + $0x40] sm:$0xff]
    %v486 = vld [vmem:[#allocation8 + $0x48] sm:$0xff]
    %v487 = vld [vmem:[#allocation8 + $0x50] sm:$0xff]
    %v488 = vld [vmem:[#allocation8 + $0x58] sm:$0xff]
    %v489 = vld [vmem:[#allocation8 + $0x60] sm:$0xff]
    %v490 = vld [vmem:[#allocation8 + $0x68] sm:$0xff]
    %v491 = vld [vmem:[#allocation8 + $0x70] sm:$0xff]
    %v492 = vld [vmem:[#allocation8 + $0x78] sm:$0xff]
    %v493 = vld [vmem:[#allocation8 + $0x80] sm:$0xff]
    %v494 = vld [vmem:[#allocation8 + $0x88] sm:$0xff]
    %v495 = vld [vmem:[#allocation8 + $0x90] sm:$0xff]
    %v496 = vld [vmem:[#allocation8 + $0x98] sm:$0xff]
    %v497 = vld [vmem:[#allocation8 + $0xa0] sm:$0xff]
    %v498 = vld [vmem:[#allocation8 + $0xa8] sm:$0xff]
    %v499 = vld [vmem:[#allocation8 + $0xb0] sm:$0xff]
    %v500 = vld [vmem:[#allocation8 + $0xb8] sm:$0xff]
    %v501 = vld [vmem:[#allocation8 + $0xc0] sm:$0xff]
    %v502 = vld [vmem:[#allocation8 + $0xc8] sm:$0xff]
    %v503 = vld [vmem:[#allocation8 + $0xd0] sm:$0xff]
    %v504 = vld [vmem:[#allocation8 + $0xd8] sm:$0xff]
    %v505 = vld [vmem:[#allocation8 + $0xe0] sm:$0xff]
    %v506 = vld [vmem:[#allocation8 + $0xe8] sm:$0xff]
    %v507 = vld [vmem:[#allocation8 + $0xf0] sm:$0xff]
    %v508 = vld [vmem:[#allocation8 + $0xf8] sm:$0xff]
    %v509 = vld [vmem:[#allocation8 + $0x100] sm:$0xff]
    %v510 = vld [vmem:[#allocation8 + $0x108] sm:$0xff]
    %v511 = vld [vmem:[#allocation8 + $0x110] sm:$0xff]
    %v512 = vld [vmem:[#allocation8 + $0x118] sm:$0xff]
    %v513 = vld [vmem:[#allocation8 + $0x120] sm:$0xff]
    %v514 = vld [vmem:[#allocation8 + $0x128] sm:$0xff]
    %v515 = vld [vmem:[#allocation8 + $0x130] sm:$0xff]
    %v516 = vld [vmem:[#allocation8 + $0x138] sm:$0xff]
    %v517 = vld [vmem:[#allocation8 + $0x140] sm:$0xff]
    %v518 = vld [vmem:[#allocation8 + $0x148] sm:$0xff]
    %v519 = vld [vmem:[#allocation8 + $0x150] sm:$0xff]
    %v520 = vld [vmem:[#allocation8 + $0x158] sm:$0xff]
    %v521 = vld [vmem:[#allocation8 + $0x160] sm:$0xff]
    %v522 = vld [vmem:[#allocation8 + $0x168] sm:$0xff]
    %v523 = vld [vmem:[#allocation8 + $0x170] sm:$0xff]
    %v524 = vld [vmem:[#allocation8 + $0x178] sm:$0xff]
    %v525 = vpack.c.bf16 %v468, %v467
    %v526 = vpack.c.bf16 %v470, %v469
    %v527 = vpack.c.bf16 %v472, %v471
    %v528 = vpack.c.bf16 %v474, %v473
    %v529 = vpack.c.bf16 %v476, %v475
    %v578 = vunpack.c.l.b16 %v477
    %v579 = vunpack.c.h.b16 %v477
    %v580 = vunpack.c.l.b16 %v478
    %v581 = vunpack.c.h.b16 %v478
    %v582 = vunpack.c.l.b16 %v479
    %v583 = vunpack.c.h.b16 %v479
    %v584 = vunpack.c.l.b16 %v480
    %v585 = vunpack.c.h.b16 %v480
    %v586 = vunpack.c.l.b16 %v481
    %v587 = vunpack.c.h.b16 %v481
    %v588 = vunpack.c.l.b16 %v482
    %v589 = vunpack.c.h.b16 %v482
    %v590 = vunpack.c.l.b16 %v483
    %v591 = vunpack.c.h.b16 %v483
    %v592 = vunpack.c.l.b16 %v484
    %v593 = vunpack.c.h.b16 %v484
    %v594 = vunpack.c.l.b16 %v485
    %v595 = vunpack.c.h.b16 %v485
    %v596 = vunpack.c.l.b16 %v486
    %v597 = vunpack.c.h.b16 %v486
    %v598 = vunpack.c.l.b16 %v487
    %v599 = vunpack.c.h.b16 %v487
    %v600 = vunpack.c.l.b16 %v488
    %v601 = vunpack.c.h.b16 %v488
    %v602 = vunpack.c.l.b16 %v489
    %v603 = vunpack.c.h.b16 %v489
    %v604 = vunpack.c.l.b16 %v490
    %v605 = vunpack.c.h.b16 %v490
    %v606 = vunpack.c.l.b16 %v491
    %v607 = vunpack.c.h.b16 %v491
    %v608 = vunpack.c.l.b16 %v492
    %v609 = vunpack.c.h.b16 %v492
    %v610 = vunpack.c.l.b16 %v493
    %v611 = vunpack.c.h.b16 %v493
    %v612 = vunpack.c.l.b16 %v494
    %v613 = vunpack.c.h.b16 %v494
    %v614 = vunpack.c.l.b16 %v495
    %v615 = vunpack.c.h.b16 %v495
    %v616 = vunpack.c.l.b16 %v496
    %v617 = vunpack.c.h.b16 %v496
    %v618 = vunpack.c.l.b16 %v497
    %v619 = vunpack.c.h.b16 %v497
    %v620 = vunpack.c.l.b16 %v498
    %v621 = vunpack.c.h.b16 %v498
    %v622 = vunpack.c.l.b16 %v499
    %v623 = vunpack.c.h.b16 %v499
    %v624 = vunpack.c.l.b16 %v500
    %v625 = vunpack.c.h.b16 %v500
    %v626 = vunpack.c.l.b16 %v501
    %v627 = vunpack.c.h.b16 %v501
    %v628 = vunpack.c.l.b16 %v502
    %v629 = vunpack.c.h.b16 %v502
    %v630 = vunpack.c.l.b16 %v503
    %v631 = vunpack.c.h.b16 %v503
    %v632 = vunpack.c.l.b16 %v504
    %v633 = vunpack.c.h.b16 %v504
    %v634 = vunpack.c.l.b16 %v505
    %v635 = vunpack.c.h.b16 %v505
    %v636 = vunpack.c.l.b16 %v506
    %v637 = vunpack.c.h.b16 %v506
    %v638 = vunpack.c.l.b16 %v507
    %v639 = vunpack.c.h.b16 %v507
    %v640 = vunpack.c.l.b16 %v508
    %v641 = vunpack.c.h.b16 %v508
    %v642 = vunpack.c.l.b16 %v509
    %v643 = vunpack.c.h.b16 %v509
    %v644 = vunpack.c.l.b16 %v510
    %v645 = vunpack.c.h.b16 %v510
    %v646 = vunpack.c.l.b16 %v511
    %v647 = vunpack.c.h.b16 %v511
    %v648 = vunpack.c.l.b16 %v512
    %v649 = vunpack.c.h.b16 %v512
    %v650 = vunpack.c.l.b16 %v513
    %v651 = vunpack.c.h.b16 %v513
    %v652 = vunpack.c.l.b16 %v514
    %v653 = vunpack.c.h.b16 %v514
    %v654 = vunpack.c.l.b16 %v515
    %v655 = vunpack.c.h.b16 %v515
    %v656 = vunpack.c.l.b16 %v516
    %v657 = vunpack.c.h.b16 %v516
    %v658 = vunpack.c.l.b16 %v517
    %v659 = vunpack.c.h.b16 %v517
    %v660 = vunpack.c.l.b16 %v518
    %v661 = vunpack.c.h.b16 %v518
    %v662 = vunpack.c.l.b16 %v519
    %v663 = vunpack.c.h.b16 %v519
    %v664 = vunpack.c.l.b16 %v520
    %v665 = vunpack.c.h.b16 %v520
    %v666 = vunpack.c.l.b16 %v521
    %v667 = vunpack.c.h.b16 %v521
    %v668 = vunpack.c.l.b16 %v522
    %v669 = vunpack.c.h.b16 %v522
    %v670 = vunpack.c.l.b16 %v523
    %v671 = vunpack.c.h.b16 %v523
    %v672 = vunpack.c.l.b16 %v524
    %v673 = vunpack.c.h.b16 %v524
    %v674 = vpack.c.b16 %v584, %v578
    %v675 = vpack.c.b16 %v585, %v579
    %v676 = vpack.c.b16 %v586, %v580
    %v677 = vpack.c.b16 %v587, %v581
    %v678 = vpack.c.b16 %v588, %v582
    %v679 = vpack.c.b16 %v589, %v583
    %v680 = vpack.c.b16 %v596, %v590
    %v681 = vpack.c.b16 %v597, %v591
    %v682 = vpack.c.b16 %v598, %v592
    %v683 = vpack.c.b16 %v599, %v593
    %v684 = vpack.c.b16 %v600, %v594
    %v685 = vpack.c.b16 %v601, %v595
    %v686 = vpack.c.b16 %v608, %v602
    %v687 = vpack.c.b16 %v609, %v603
    %v688 = vpack.c.b16 %v610, %v604
    %v689 = vpack.c.b16 %v611, %v605
    %v690 = vpack.c.b16 %v612, %v606
    %v691 = vpack.c.b16 %v613, %v607
    %v692 = vpack.c.b16 %v620, %v614
    %v693 = vpack.c.b16 %v621, %v615
    %v694 = vpack.c.b16 %v622, %v616
    %v695 = vpack.c.b16 %v623, %v617
    %v696 = vpack.c.b16 %v624, %v618
    %v697 = vpack.c.b16 %v625, %v619
    %v698 = vpack.c.b16 %v632, %v626
    %v699 = vpack.c.b16 %v633, %v627
    %v700 = vpack.c.b16 %v634, %v628
    %v701 = vpack.c.b16 %v635, %v629
    %v702 = vpack.c.b16 %v636, %v630
    %v703 = vpack.c.b16 %v637, %v631
    %v704 = vpack.c.b16 %v644, %v638
    %v705 = vpack.c.b16 %v645, %v639
    %v706 = vpack.c.b16 %v646, %v640
    %v707 = vpack.c.b16 %v647, %v641
    %v708 = vpack.c.b16 %v648, %v642
    %v709 = vpack.c.b16 %v649, %v643
    %v710 = vpack.c.b16 %v656, %v650
    %v711 = vpack.c.b16 %v657, %v651
    %v712 = vpack.c.b16 %v658, %v652
    %v713 = vpack.c.b16 %v659, %v653
    %v714 = vpack.c.b16 %v660, %v654
    %v715 = vpack.c.b16 %v661, %v655
    %v716 = vpack.c.b16 %v668, %v662
    %v717 = vpack.c.b16 %v669, %v663
    %v718 = vpack.c.b16 %v670, %v664
    %v719 = vpack.c.b16 %v671, %v665
    %v720 = vpack.c.b16 %v672, %v666
    %v721 = vpack.c.b16 %v673, %v667
    %770 = vmatprep.subr.bf16.mxu0 %v717
    %771 = vmatpush1.bf16.msra.mxu0 %v716
    %772 = vmatprep.subr.bf16.mxu0 %v711
    %773 = vmatpush1.bf16.msra.mxu0 %v710
    %774 = vmatprep.subr.bf16.mxu0 %v705
    %775 = vmatpush1.bf16.msra.mxu0 %v704
    %776 = vmatprep.subr.bf16.mxu0 %v699
    %777 = vmatpush1.bf16.msra.mxu0 %v698
    %778 = vmatprep.subr.bf16.mxu0 %v693
    %779 = vmatpush1.bf16.msra.mxu0 %v692
    %780 = vmatprep.subr.bf16.mxu0 %v687
    %781 = vmatpush1.bf16.msra.mxu0 %v686
    %782 = vmatprep.subr.bf16.mxu0 %v681
    %783 = vmatpush1.bf16.msra.mxu0 %v680
    %784 = vmatprep.subr.bf16.mxu0 %v675
    %785 = vmatpush1.bf16.msra.mxu0 %v674
    %786 = vmatprep.subr.bf16.mxu0 0
    %787 = vmatpush2.bf16.msra.mxu0 0
    %788 = vmatprep.subr.bf16.mxu0 0
    %789 = vmatpush2.bf16.msra.mxu0 0
    %790 = vmatprep.subr.bf16.mxu0 0
    %791 = vmatpush2.bf16.msra.mxu0 0
    %792 = vmatprep.subr.bf16.mxu0 0
    %793 = vmatpush2.bf16.msra.mxu0 0
    %794 = vmatprep.subr.bf16.mxu0 0
    %795 = vmatpush2.bf16.msra.mxu0 0
    %796 = vmatprep.subr.bf16.mxu0 0
    %797 = vmatpush2.bf16.msra.mxu0 0
    %798 = vmatprep.subr.bf16.mxu0 0
    %799 = vmatpush2.bf16.msra.mxu0 0
    %800 = vmatprep.subr.bf16.mxu0 0
    %801 = vmatpush2.bf16.msra.mxu0 0
    %802 = vmatprep.mubr.bf16.mxu0 0
    %803 = vmatmul.mubr.bf16.gmra.mxu0 %v525
    %v804 = vpop.f32.mrf.mxu0
    %v805 = vadd.f32 0.0, %v804
    %v806 = vpop.f32.mrf.mxu0
    %v807 = vadd.f32 0.0, %v806
    %v808 = vpop.f32.mrf.mxu0
    %v809 = vadd.f32 0.0, %v808
    %v810 = vpop.f32.mrf.mxu0
    %v811 = vadd.f32 0.0, %v810
    %812 = vmatprep.mubr.bf16.mxu0 0
    %813 = vmatmul.mubr.bf16.gmra.mxu0 %v526
    %v814 = vpop.f32.mrf.mxu0
    %v815 = vadd.f32 0.0, %v814
    %v816 = vpop.f32.mrf.mxu0
    %v817 = vadd.f32 0.0, %v816
    %v818 = vpop.f32.mrf.mxu0
    %v819 = vadd.f32 0.0, %v818
    %v820 = vpop.f32.mrf.mxu0
    %v821 = vadd.f32 0.0, %v820
    %822 = vmatprep.mubr.bf16.mxu0 0
    %823 = vmatmul.mubr.bf16.gmra.mxu0 %v527
    %v824 = vpop.f32.mrf.mxu0
    %v825 = vadd.f32 0.0, %v824
    %v826 = vpop.f32.mrf.mxu0
    %v827 = vadd.f32 0.0, %v826
    %v828 = vpop.f32.mrf.mxu0
    %v829 = vadd.f32 0.0, %v828
    %v830 = vpop.f32.mrf.mxu0
    %v831 = vadd.f32 0.0, %v830
    %832 = vmatprep.mubr.bf16.mxu0 0
    %833 = vmatmul.mubr.bf16.gmra.mxu0 %v528
    %v834 = vpop.f32.mrf.mxu0
    %v835 = vadd.f32 0.0, %v834
    %v836 = vpop.f32.mrf.mxu0
    %v837 = vadd.f32 0.0, %v836
    %v838 = vpop.f32.mrf.mxu0
    %v839 = vadd.f32 0.0, %v838
    %v840 = vpop.f32.mrf.mxu0
    %v841 = vadd.f32 0.0, %v840
    %842 = vmatprep.mubr.bf16.mxu0 0
    %843 = vmatmul.mubr.bf16.gmra.mxu0 %v529
    %v844 = vpop.f32.mrf.mxu0
    %v845 = vadd.f32 0.0, %v844
    %v846 = vpop.f32.mrf.mxu0
    %v847 = vadd.f32 0.0, %v846
    %v848 = vpop.f32.mrf.mxu0
    %v849 = vadd.f32 0.0, %v848
    %v850 = vpop.f32.mrf.mxu0
    %v851 = vadd.f32 0.0, %v850
    %852 = vdwg.mxu0
    %853 = vmatprep.subr.bf16.mxu0 %v719
    %854 = vmatpush1.bf16.msra.mxu0 %v718
    %855 = vmatprep.subr.bf16.mxu0 %v713
    %856 = vmatpush1.bf16.msra.mxu0 %v712
    %857 = vmatprep.subr.bf16.mxu0 %v707
    %858 = vmatpush1.bf16.msra.mxu0 %v706
    %859 = vmatprep.subr.bf16.mxu0 %v701
    %860 = vmatpush1.bf16.msra.mxu0 %v700
    %861 = vmatprep.subr.bf16.mxu0 %v695
    %862 = vmatpush1.bf16.msra.mxu0 %v694
    %863 = vmatprep.subr.bf16.mxu0 %v689
    %864 = vmatpush1.bf16.msra.mxu0 %v688
    %865 = vmatprep.subr.bf16.mxu0 %v683
    %866 = vmatpush1.bf16.msra.mxu0 %v682
    %867 = vmatprep.subr.bf16.mxu0 %v677
    %868 = vmatpush1.bf16.msra.mxu0 %v676
    %869 = vmatprep.subr.bf16.mxu0 0
    %870 = vmatpush2.bf16.msra.mxu0 0
    %871 = vmatprep.subr.bf16.mxu0 0
    %872 = vmatpush2.bf16.msra.mxu0 0
    %873 = vmatprep.subr.bf16.mxu0 0
    %874 = vmatpush2.bf16.msra.mxu0 0
    %875 = vmatprep.subr.bf16.mxu0 0
    %876 = vmatpush2.bf16.msra.mxu0 0
    %877 = vmatprep.subr.bf16.mxu0 0
    %878 = vmatpush2.bf16.msra.mxu0 0
    %879 = vmatprep.subr.bf16.mxu0 0
    %880 = vmatpush2.bf16.msra.mxu0 0
    %881 = vmatprep.subr.bf16.mxu0 0
    %882 = vmatpush2.bf16.msra.mxu0 0
    %883 = vmatprep.subr.bf16.mxu0 0
    %884 = vmatpush2.bf16.msra.mxu0 0
    %885 = vmatprep.mubr.bf16.mxu0 0
    %886 = vmatmul.mubr.bf16.gmra.mxu0 %v525
    %v887 = vpop.f32.mrf.mxu0
    %v888 = vadd.f32 0.0, %v887
    %v889 = vpop.f32.mrf.mxu0
    %v890 = vadd.f32 0.0, %v889
    %v891 = vpop.f32.mrf.mxu0
    %v892 = vadd.f32 0.0, %v891
    %v893 = vpop.f32.mrf.mxu0
    %v894 = vadd.f32 0.0, %v893
    %895 = vmatprep.mubr.bf16.mxu0 0
    %896 = vmatmul.mubr.bf16.gmra.mxu0 %v526
    %v897 = vpop.f32.mrf.mxu0
    %v898 = vadd.f32 0.0, %v897
    %v899 = vpop.f32.mrf.mxu0
    %v900 = vadd.f32 0.0, %v899
    %v901 = vpop.f32.mrf.mxu0
    %v902 = vadd.f32 0.0, %v901
    %v903 = vpop.f32.mrf.mxu0
    %v904 = vadd.f32 0.0, %v903
    %905 = vmatprep.mubr.bf16.mxu0 0
    %906 = vmatmul.mubr.bf16.gmra.mxu0 %v527
    %v907 = vpop.f32.mrf.mxu0
    %v908 = vadd.f32 0.0, %v907
    %v909 = vpop.f32.mrf.mxu0
    %v910 = vadd.f32 0.0, %v909
    %v911 = vpop.f32.mrf.mxu0
    %v912 = vadd.f32 0.0, %v911
    %v913 = vpop.f32.mrf.mxu0
    %v914 = vadd.f32 0.0, %v913
    %915 = vmatprep.mubr.bf16.mxu0 0
    %916 = vmatmul.mubr.bf16.gmra.mxu0 %v528
    %v917 = vpop.f32.mrf.mxu0
    %v918 = vadd.f32 0.0, %v917
    %v919 = vpop.f32.mrf.mxu0
    %v920 = vadd.f32 0.0, %v919
    %v921 = vpop.f32.mrf.mxu0
    %v922 = vadd.f32 0.0, %v921
    %v923 = vpop.f32.mrf.mxu0
    %v924 = vadd.f32 0.0, %v923
    %925 = vmatprep.mubr.bf16.mxu0 0
    %926 = vmatmul.mubr.bf16.gmra.mxu0 %v529
    %v927 = vpop.f32.mrf.mxu0
    %v928 = vadd.f32 0.0, %v927
    %v929 = vpop.f32.mrf.mxu0
    %v930 = vadd.f32 0.0, %v929
    %v931 = vpop.f32.mrf.mxu0
    %v932 = vadd.f32 0.0, %v931
    %v933 = vpop.f32.mrf.mxu0
    %v934 = vadd.f32 0.0, %v933
    %935 = vdwg.mxu0
    %936 = vmatprep.subr.bf16.mxu0 %v721
    %937 = vmatpush1.bf16.msra.mxu0 %v720
    %938 = vmatprep.subr.bf16.mxu0 %v715
    %939 = vmatpush1.bf16.msra.mxu0 %v714
    %940 = vmatprep.subr.bf16.mxu0 %v709
    %941 = vmatpush1.bf16.msra.mxu0 %v708
    %942 = vmatprep.subr.bf16.mxu0 %v703
    %943 = vmatpush1.bf16.msra.mxu0 %v702
    %944 = vmatprep.subr.bf16.mxu0 %v697
    %945 = vmatpush1.bf16.msra.mxu0 %v696
    %946 = vmatprep.subr.bf16.mxu0 %v691
    %947 = vmatpush1.bf16.msra.mxu0 %v690
    %948 = vmatprep.subr.bf16.mxu0 %v685
    %949 = vmatpush1.bf16.msra.mxu0 %v684
    %950 = vmatprep.subr.bf16.mxu0 %v679
    %951 = vmatpush1.bf16.msra.mxu0 %v678
    %952 = vmatprep.subr.bf16.mxu0 0
    %953 = vmatpush2.bf16.msra.mxu0 0
    %954 = vmatprep.subr.bf16.mxu0 0
    %955 = vmatpush2.bf16.msra.mxu0 0
    %956 = vmatprep.subr.bf16.mxu0 0
    %957 = vmatpush2.bf16.msra.mxu0 0
    %958 = vmatprep.subr.bf16.mxu0 0
    %959 = vmatpush2.bf16.msra.mxu0 0
    %960 = vmatprep.subr.bf16.mxu0 0
    %961 = vmatpush2.bf16.msra.mxu0 0
    %962 = vmatprep.subr.bf16.mxu0 0
    %963 = vmatpush2.bf16.msra.mxu0 0
    %964 = vmatprep.subr.bf16.mxu0 0
    %965 = vmatpush2.bf16.msra.mxu0 0
    %966 = vmatprep.subr.bf16.mxu0 0
    %967 = vmatpush2.bf16.msra.mxu0 0
    %968 = vmatprep.mubr.bf16.mxu0 0
    %969 = vmatmul.mubr.bf16.gmra.mxu0 %v525
    %v970 = vpop.f32.mrf.mxu0
    %v971 = vadd.f32 0.0, %v970
    %v972 = vpop.f32.mrf.mxu0
    %v973 = vadd.f32 0.0, %v972
    %v974 = vpop.f32.mrf.mxu0
    %v975 = vadd.f32 0.0, %v974
    %v976 = vpop.f32.mrf.mxu0
    %v977 = vadd.f32 0.0, %v976
    %978 = vmatprep.mubr.bf16.mxu0 0
    %979 = vmatmul.mubr.bf16.gmra.mxu0 %v526
    %v980 = vpop.f32.mrf.mxu0
    %v981 = vadd.f32 0.0, %v980
    %v982 = vpop.f32.mrf.mxu0
    %v983 = vadd.f32 0.0, %v982
    %v984 = vpop.f32.mrf.mxu0
    %v985 = vadd.f32 0.0, %v984
    %v986 = vpop.f32.mrf.mxu0
    %v987 = vadd.f32 0.0, %v986
    %988 = vmatprep.mubr.bf16.mxu0 0
    %989 = vmatmul.mubr.bf16.gmra.mxu0 %v527
    %v990 = vpop.f32.mrf.mxu0
    %v991 = vadd.f32 0.0, %v990
    %v992 = vpop.f32.mrf.mxu0
    %v993 = vadd.f32 0.0, %v992
    %v994 = vpop.f32.mrf.mxu0
    %v995 = vadd.f32 0.0, %v994
    %v996 = vpop.f32.mrf.mxu0
    %v997 = vadd.f32 0.0, %v996
    %998 = vmatprep.mubr.bf16.mxu0 0
    %999 = vmatmul.mubr.bf16.gmra.mxu0 %v528
    %v1000 = vpop.f32.mrf.mxu0
    %v1001 = vadd.f32 0.0, %v1000
    %v1002 = vpop.f32.mrf.mxu0
    %v1003 = vadd.f32 0.0, %v1002
    %v1004 = vpop.f32.mrf.mxu0
    %v1005 = vadd.f32 0.0, %v1004
    %v1006 = vpop.f32.mrf.mxu0
    %v1007 = vadd.f32 0.0, %v1006
    %1008 = vmatprep.mubr.bf16.mxu0 0
    %1009 = vmatmul.mubr.bf16.gmra.mxu0 %v529
    %v1010 = vpop.f32.mrf.mxu0
    %v1011 = vadd.f32 0.0, %v1010
    %v1012 = vpop.f32.mrf.mxu0
    %v1013 = vadd.f32 0.0, %v1012
    %v1014 = vpop.f32.mrf.mxu0
    %v1015 = vadd.f32 0.0, %v1014
    %v1016 = vpop.f32.mrf.mxu0
    %v1017 = vadd.f32 0.0, %v1016
    %1018 = vdwg.mxu0
    %v1019 = vlaneseq
    %v1020 = vshrl.u32 %v1019, 7
    %v1021 = vsub.s32 0, %v1020
    %v1022 = vrot.slane %v326, %v1021
    %v1023 = vlaneseq
    %v1024 = vshrl.u32 %v1023, 7
    %v1025 = vsub.s32 0, %v1024
    %v1026 = vrot.slane %v327, %v1025
    %v1027 = vadd.f32 %v805, %v1022
    %v1028 = vadd.f32 %v807, %v1026
    %v1029 = vadd.f32 %v809, %v1022
    %v1030 = vadd.f32 %v811, %v1026
    %v1031 = vadd.f32 %v815, %v1022
    %v1032 = vadd.f32 %v817, %v1026
    %v1033 = vadd.f32 %v819, %v1022
    %v1034 = vadd.f32 %v821, %v1026
    %v1035 = vadd.f32 %v825, %v1022
    %v1036 = vadd.f32 %v827, %v1026
    %v1037 = vadd.f32 %v829, %v1022
    %v1038 = vadd.f32 %v831, %v1026
    %v1039 = vadd.f32 %v835, %v1022
    %v1040 = vadd.f32 %v837, %v1026
    %v1041 = vadd.f32 %v839, %v1022
    %v1042 = vadd.f32 %v841, %v1026
    %v1043 = vadd.f32 %v845, %v1022
    %v1044 = vadd.f32 %v847, %v1026
    %v1045 = vadd.f32 %v849, %v1022
    %v1046 = vadd.f32 %v851, %v1026
    %v1047 = vpack.c.bf16 %v1029, %v1027
    %v1048 = vpack.c.bf16 %v1030, %v1028
    %v1049 = vpack.c.bf16 %v1033, %v1031
    %v1050 = vpack.c.bf16 %v1034, %v1032
    %v1051 = vpack.c.bf16 %v1037, %v1035
    %v1052 = vpack.c.bf16 %v1038, %v1036
    %v1053 = vpack.c.bf16 %v1041, %v1039
    %v1054 = vpack.c.bf16 %v1042, %v1040
    %v1055 = vpack.c.bf16 %v1045, %v1043
    %v1056 = vpack.c.bf16 %v1046, %v1044
    %v1057 = vlaneseq
    %v1058 = vshrl.u32 %v1057, 7
    %v1059 = vsub.s32 1, %v1058
    %v1060 = vrot.slane %v326, %v1059
    %v1061 = vlaneseq
    %v1062 = vshrl.u32 %v1061, 7
    %v1063 = vsub.s32 1, %v1062
    %v1064 = vrot.slane %v327, %v1063
    %v1065 = vadd.f32 %v888, %v1060
    %v1066 = vadd.f32 %v890, %v1064
    %v1067 = vadd.f32 %v892, %v1060
    %v1068 = vadd.f32 %v894, %v1064
    %v1069 = vadd.f32 %v898, %v1060
    %v1070 = vadd.f32 %v900, %v1064
    %v1071 = vadd.f32 %v902, %v1060
    %v1072 = vadd.f32 %v904, %v1064
    %v1073 = vadd.f32 %v908, %v1060
    %v1074 = vadd.f32 %v910, %v1064
    %v1075 = vadd.f32 %v912, %v1060
    %v1076 = vadd.f32 %v914, %v1064
    %v1077 = vadd.f32 %v918, %v1060
    %v1078 = vadd.f32 %v920, %v1064
    %v1079 = vadd.f32 %v922, %v1060
    %v1080 = vadd.f32 %v924, %v1064
    %v1081 = vadd.f32 %v928, %v1060
    %v1082 = vadd.f32 %v930, %v1064
    %v1083 = vadd.f32 %v932, %v1060
    %v1084 = vadd.f32 %v934, %v1064
    %v1085 = vpack.c.bf16 %v1067, %v1065
    %v1086 = vpack.c.bf16 %v1068, %v1066
    %v1087 = vpack.c.bf16 %v1071, %v1069
    %v1088 = vpack.c.bf16 %v1072, %v1070
    %v1089 = vpack.c.bf16 %v1075, %v1073
    %v1090 = vpack.c.bf16 %v1076, %v1074
    %v1091 = vpack.c.bf16 %v1079, %v1077
    %v1092 = vpack.c.bf16 %v1080, %v1078
    %v1093 = vpack.c.bf16 %v1083, %v1081
    %v1094 = vpack.c.bf16 %v1084, %v1082
    %v1095 = vlaneseq
    %v1096 = vshrl.u32 %v1095, 7
    %v1097 = vsub.s32 2, %v1096
    %v1098 = vrot.slane %v326, %v1097
    %v1099 = vlaneseq
    %v1100 = vshrl.u32 %v1099, 7
    %v1101 = vsub.s32 2, %v1100
    %v1102 = vrot.slane %v327, %v1101
    %v1103 = vadd.f32 %v971, %v1098
    %v1104 = vadd.f32 %v973, %v1102
    %v1105 = vadd.f32 %v975, %v1098
    %v1106 = vadd.f32 %v977, %v1102
    %v1107 = vadd.f32 %v981, %v1098
    %v1108 = vadd.f32 %v983, %v1102
    %v1109 = vadd.f32 %v985, %v1098
    %v1110 = vadd.f32 %v987, %v1102
    %v1111 = vadd.f32 %v991, %v1098
    %v1112 = vadd.f32 %v993, %v1102
    %v1113 = vadd.f32 %v995, %v1098
    %v1114 = vadd.f32 %v997, %v1102
    %v1115 = vadd.f32 %v1001, %v1098
    %v1116 = vadd.f32 %v1003, %v1102
    %v1117 = vadd.f32 %v1005, %v1098
    %v1118 = vadd.f32 %v1007, %v1102
    %v1119 = vadd.f32 %v1011, %v1098
    %v1120 = vadd.f32 %v1013, %v1102
    %v1121 = vadd.f32 %v1015, %v1098
    %v1122 = vadd.f32 %v1017, %v1102
    %v1123 = vpack.c.bf16 %v1105, %v1103
    %v1124 = vpack.c.bf16 %v1106, %v1104
    %v1125 = vpack.c.bf16 %v1109, %v1107
    %v1126 = vpack.c.bf16 %v1110, %v1108
    %v1127 = vpack.c.bf16 %v1113, %v1111
    %v1128 = vpack.c.bf16 %v1114, %v1112
    %v1129 = vpack.c.bf16 %v1117, %v1115
    %v1130 = vpack.c.bf16 %v1118, %v1116
    %v1131 = vpack.c.bf16 %v1121, %v1119
    %v1132 = vpack.c.bf16 %v1122, %v1120
    %1133 = vmatprep.subr.bf16.mxu0 0
    %1134 = vmatpush1.bf16.xpose.msra.mxu0 0
    %1135 = vmatprep.subr.bf16.mxu0 0
    %1136 = vmatpush1.bf16.xpose.msra.mxu0 0
    %1137 = vmatprep.subr.bf16.mxu0 0
    %1138 = vmatpush1.bf16.xpose.msra.mxu0 0
    %1139 = vmatprep.subr.bf16.mxu0 0
    %1140 = vmatpush1.bf16.xpose.msra.mxu0 %v1093
    %1141 = vmatprep.subr.bf16.mxu0 0
    %1142 = vmatpush1.bf16.xpose.msra.mxu0 %v1091
    %1143 = vmatprep.subr.bf16.mxu0 0
    %1144 = vmatpush1.bf16.xpose.msra.mxu0 %v1089
    %1145 = vmatprep.subr.bf16.mxu0 0
    %1146 = vmatpush1.bf16.xpose.msra.mxu0 %v1087
    %1147 = vmatprep.subr.bf16.mxu0 0
    %1148 = vmatpush1.bf16.xpose.msra.mxu0 %v1085
    %1149 = vmatprep.subr.bf16.mxu0 0
    %1150 = vmatpush2.bf16.xpose.msra.mxu0 0
    %1151 = vmatprep.subr.bf16.mxu0 0
    %1152 = vmatpush2.bf16.xpose.msra.mxu0 0
    %1153 = vmatprep.subr.bf16.mxu0 0
    %1154 = vmatpush2.bf16.xpose.msra.mxu0 0
    %1155 = vmatprep.subr.bf16.mxu0 0
    %1156 = vmatpush2.bf16.xpose.msra.mxu0 0
    %1157 = vmatprep.subr.bf16.mxu0 0
    %1158 = vmatpush2.bf16.xpose.msra.mxu0 0
    %1159 = vmatprep.subr.bf16.mxu0 0
    %1160 = vmatpush2.bf16.xpose.msra.mxu0 0
    %1161 = vmatprep.subr.bf16.mxu0 0
    %1162 = vmatpush2.bf16.xpose.msra.mxu0 0
    %1163 = vmatprep.subr.bf16.mxu0 0
    %1164 = vmatpush2.bf16.xpose.msra.mxu0 0
    %1165 = vmatprep.mubr.bf16.mxu0 0
    %1166 = vmatmul.mubr.bf16.gmra.mxu0 %v1047
    %v1167 = vpop.f32.mrf.mxu0
    %v1168 = vadd.f32 %v144, %v1167
    %v1169 = vpop.f32.mrf.mxu0
    %v1170 = vpop.f32.mrf.mxu0
    %v1171 = vadd.f32 %v145, %v1170
    %v1172 = vpop.f32.mrf.mxu0
    %1173 = vmatprep.mubr.bf16.mxu0 0
    %1174 = vmatmul.mubr.bf16.gmra.mxu0 %v1049
    %v1175 = vpop.f32.mrf.mxu0
    %v1176 = vadd.f32 %v146, %v1175
    %v1177 = vpop.f32.mrf.mxu0
    %v1178 = vpop.f32.mrf.mxu0
    %v1179 = vadd.f32 %v147, %v1178
    %v1180 = vpop.f32.mrf.mxu0
    %1181 = vmatprep.mubr.bf16.mxu0 0
    %1182 = vmatmul.mubr.bf16.gmra.mxu0 %v1051
    %v1183 = vpop.f32.mrf.mxu0
    %v1184 = vadd.f32 %v148, %v1183
    %v1185 = vpop.f32.mrf.mxu0
    %v1186 = vpop.f32.mrf.mxu0
    %v1187 = vadd.f32 %v149, %v1186
    %v1188 = vpop.f32.mrf.mxu0
    %1189 = vmatprep.mubr.bf16.mxu0 0
    %1190 = vmatmul.mubr.bf16.gmra.mxu0 %v1053
    %v1191 = vpop.f32.mrf.mxu0
    %v1192 = vadd.f32 %v150, %v1191
    %v1193 = vpop.f32.mrf.mxu0
    %v1194 = vpop.f32.mrf.mxu0
    %v1195 = vadd.f32 %v151, %v1194
    %v1196 = vpop.f32.mrf.mxu0
    %1197 = vmatprep.mubr.bf16.mxu0 0
    %1198 = vmatmul.mubr.bf16.gmra.mxu0 %v1055
    %v1199 = vpop.f32.mrf.mxu0
    %v1200 = vadd.f32 %v152, %v1199
    %v1201 = vpop.f32.mrf.mxu0
    %v1202 = vpop.f32.mrf.mxu0
    %v1203 = vadd.f32 %v153, %v1202
    %v1204 = vpop.f32.mrf.mxu0
    %1205 = vdwg.mxu0
    %vm1206 = vcmask 654336
    %v1207 = vsel %vm1206, %v1168, -inf
    %1208 = vmax.xlane.f32.xlu0 %v1207
    %v1209 = vpop.xlane.xlu0 %1208
    %v1210 = vsel %vm1206, %v1171, -inf
    %1211 = vmax.xlane.f32.xlu0 %v1210
    %v1212 = vpop.xlane.xlu0 %1211
    %v1213 = vsel %vm1206, %v1176, -inf
    %1214 = vmax.xlane.f32.xlu0 %v1213
    %v1215 = vpop.xlane.xlu0 %1214
    %v1216 = vsel %vm1206, %v1179, -inf
    %1217 = vmax.xlane.f32.xlu0 %v1216
    %v1218 = vpop.xlane.xlu0 %1217
    %v1219 = vsel %vm1206, %v1184, -inf
    %1220 = vmax.xlane.f32.xlu0 %v1219
    %v1221 = vpop.xlane.xlu0 %1220
    %v1222 = vsel %vm1206, %v1187, -inf
    %1223 = vmax.xlane.f32.xlu0 %v1222
    %v1224 = vpop.xlane.xlu0 %1223
    %v1225 = vsel %vm1206, %v1192, -inf
    %1226 = vmax.xlane.f32.xlu0 %v1225
    %v1227 = vpop.xlane.xlu0 %1226
    %v1228 = vsel %vm1206, %v1195, -inf
    %1229 = vmax.xlane.f32.xlu0 %v1228
    %v1230 = vpop.xlane.xlu0 %1229
    %v1231 = vsel %vm1206, %v1200, -inf
    %1232 = vmax.xlane.f32.xlu0 %v1231
    %v1233 = vpop.xlane.xlu0 %1232
    %v1234 = vsel %vm1206, %v1203, -inf
    %1235 = vmax.xlane.f32.xlu0 %v1234
    %v1236 = vpop.xlane.xlu0 %1235
    %v1237 = vsub.f32 %v1168, %v1209
    %v1238 = vsub.f32 %v1171, %v1212
    %v1239 = vsub.f32 %v1176, %v1215
    %v1240 = vsub.f32 %v1179, %v1218
    %v1241 = vsub.f32 %v1184, %v1221
    %v1242 = vsub.f32 %v1187, %v1224
    %v1243 = vsub.f32 %v1192, %v1227
    %v1244 = vsub.f32 %v1195, %v1230
    %v1245 = vsub.f32 %v1200, %v1233
    %v1246 = vsub.f32 %v1203, %v1236
    %v1247 = vmul.f32 %v1237, 1.442695
    %v1248 = vpow.pop %v1247
    %v1249 = vmul.f32 %v1238, 1.442695
    %v1250 = vpow.pop %v1249
    %v1251 = vmul.f32 %v1239, 1.442695
    %v1252 = vpow.pop %v1251
    %v1253 = vmul.f32 %v1240, 1.442695
    %v1254 = vpow.pop %v1253
    %v1255 = vmul.f32 %v1241, 1.442695
    %v1256 = vpow.pop %v1255
    %v1257 = vmul.f32 %v1242, 1.442695
    %v1258 = vpow.pop %v1257
    %v1259 = vmul.f32 %v1243, 1.442695
    %v1260 = vpow.pop %v1259
    %v1261 = vmul.f32 %v1244, 1.442695
    %v1262 = vpow.pop %v1261
    %v1263 = vmul.f32 %v1245, 1.442695
    %v1264 = vpow.pop %v1263
    %v1265 = vmul.f32 %v1246, 1.442695
    %v1266 = vpow.pop %v1265
    %v1267 = vsel %vm1206, %v1248, 0.0
    %1268 = vadd.xlane.f32.xlu0 %v1267
    %v1269 = vpop.xlane.xlu0 %1268
    %v1270 = vsel %vm1206, %v1250, 0.0
    %1271 = vadd.xlane.f32.xlu0 %v1270
    %v1272 = vpop.xlane.xlu0 %1271
    %v1273 = vsel %vm1206, %v1252, 0.0
    %1274 = vadd.xlane.f32.xlu0 %v1273
    %v1275 = vpop.xlane.xlu0 %1274
    %v1276 = vsel %vm1206, %v1254, 0.0
    %1277 = vadd.xlane.f32.xlu0 %v1276
    %v1278 = vpop.xlane.xlu0 %1277
    %v1279 = vsel %vm1206, %v1256, 0.0
    %1280 = vadd.xlane.f32.xlu0 %v1279
    %v1281 = vpop.xlane.xlu0 %1280
    %v1282 = vsel %vm1206, %v1258, 0.0
    %1283 = vadd.xlane.f32.xlu0 %v1282
    %v1284 = vpop.xlane.xlu0 %1283
    %v1285 = vsel %vm1206, %v1260, 0.0
    %1286 = vadd.xlane.f32.xlu0 %v1285
    %v1287 = vpop.xlane.xlu0 %1286
    %v1288 = vsel %vm1206, %v1262, 0.0
    %1289 = vadd.xlane.f32.xlu0 %v1288
    %v1290 = vpop.xlane.xlu0 %1289
    %v1291 = vsel %vm1206, %v1264, 0.0
    %1292 = vadd.xlane.f32.xlu0 %v1291
    %v1293 = vpop.xlane.xlu0 %1292
    %v1294 = vsel %vm1206, %v1266, 0.0
    %1295 = vadd.xlane.f32.xlu0 %v1294
    %v1296 = vpop.xlane.xlu0 %1295
    %v1297 = vrcp.pop %v1269
    %v1298 = vrcp.pop %v1272
    %v1299 = vrcp.pop %v1275
    %v1300 = vrcp.pop %v1278
    %v1301 = vrcp.pop %v1281
    %v1302 = vrcp.pop %v1284
    %v1303 = vrcp.pop %v1287
    %v1304 = vrcp.pop %v1290
    %v1305 = vrcp.pop %v1293
    %v1306 = vrcp.pop %v1296
    %v1307 = vmul.f32 %v1248, %v1297
    %v1308 = vmul.f32 %v1250, %v1298
    %v1309 = vmul.f32 %v1252, %v1299
    %v1310 = vmul.f32 %v1254, %v1300
    %v1311 = vmul.f32 %v1256, %v1301
    %v1312 = vmul.f32 %v1258, %v1302
    %v1313 = vmul.f32 %v1260, %v1303
    %v1314 = vmul.f32 %v1262, %v1304
    %v1315 = vmul.f32 %v1264, %v1305
    %v1316 = vmul.f32 %v1266, %v1306
    %v1317 = vpack.c.bf16 %v1308, %v1307
    %v1318 = vpack.c.bf16 %v1310, %v1309
    %v1319 = vpack.c.bf16 %v1312, %v1311
    %v1320 = vpack.c.bf16 %v1314, %v1313
    %v1321 = vpack.c.bf16 %v1316, %v1315
    %v1323 = vsel %vm1206, %v1317, 0
    %v1326 = vsel %vm1206, %v1318, 0
    %v1329 = vsel %vm1206, %v1319, 0
    %v1332 = vsel %vm1206, %v1320, 0
    %v1335 = vsel %vm1206, %v1321, 0
    %1337 = vmatprep.subr.bf16.mxu0 0
    %1338 = vmatpush1.bf16.msra.mxu0 0
    %1339 = vmatprep.subr.bf16.mxu0 0
    %1340 = vmatpush1.bf16.msra.mxu0 0
    %1341 = vmatprep.subr.bf16.mxu0 0
    %1342 = vmatpush1.bf16.msra.mxu0 0
    %1343 = vmatprep.subr.bf16.mxu0 0
    %1344 = vmatpush1.bf16.msra.mxu0 %v1131
    %1345 = vmatprep.subr.bf16.mxu0 0
    %1346 = vmatpush1.bf16.msra.mxu0 %v1129
    %1347 = vmatprep.subr.bf16.mxu0 0
    %1348 = vmatpush1.bf16.msra.mxu0 %v1127
    %1349 = vmatprep.subr.bf16.mxu0 0
    %1350 = vmatpush1.bf16.msra.mxu0 %v1125
    %1351 = vmatprep.subr.bf16.mxu0 0
    %1352 = vmatpush1.bf16.msra.mxu0 %v1123
    %1353 = vmatprep.subr.bf16.mxu0 0
    %1354 = vmatpush2.bf16.msra.mxu0 0
    %1355 = vmatprep.subr.bf16.mxu0 0
    %1356 = vmatpush2.bf16.msra.mxu0 0
    %1357 = vmatprep.subr.bf16.mxu0 0
    %1358 = vmatpush2.bf16.msra.mxu0 0
    %1359 = vmatprep.subr.bf16.mxu0 0
    %1360 = vmatpush2.bf16.msra.mxu0 0
    %1361 = vmatprep.subr.bf16.mxu0 0
    %1362 = vmatpush2.bf16.msra.mxu0 0
    %1363 = vmatprep.subr.bf16.mxu0 0
    %1364 = vmatpush2.bf16.msra.mxu0 0
    %1365 = vmatprep.subr.bf16.mxu0 0
    %1366 = vmatpush2.bf16.msra.mxu0 0
    %1367 = vmatprep.subr.bf16.mxu0 0
    %1368 = vmatpush2.bf16.msra.mxu0 0
    %1369 = vmatprep.mubr.bf16.mxu0 0
    %1370 = vmatmul.mubr.bf16.gmra.mxu0 %v1323
    %v1371 = vpop.f32.mrf.mxu0
    %v1372 = vadd.f32 0.0, %v1371
    %v1373 = vpop.f32.mrf.mxu0
    %v1374 = vpop.f32.mrf.mxu0
    %v1375 = vadd.f32 0.0, %v1374
    %v1376 = vpop.f32.mrf.mxu0
    %1377 = vmatprep.mubr.bf16.mxu0 0
    %1378 = vmatmul.mubr.bf16.gmra.mxu0 %v1326
    %v1379 = vpop.f32.mrf.mxu0
    %v1380 = vadd.f32 0.0, %v1379
    %v1381 = vpop.f32.mrf.mxu0
    %v1382 = vpop.f32.mrf.mxu0
    %v1383 = vadd.f32 0.0, %v1382
    %v1384 = vpop.f32.mrf.mxu0
    %1385 = vmatprep.mubr.bf16.mxu0 0
    %1386 = vmatmul.mubr.bf16.gmra.mxu0 %v1329
    %v1387 = vpop.f32.mrf.mxu0
    %v1388 = vadd.f32 0.0, %v1387
    %v1389 = vpop.f32.mrf.mxu0
    %v1390 = vpop.f32.mrf.mxu0
    %v1391 = vadd.f32 0.0, %v1390
    %v1392 = vpop.f32.mrf.mxu0
    %1393 = vmatprep.mubr.bf16.mxu0 0
    %1394 = vmatmul.mubr.bf16.gmra.mxu0 %v1332
    %v1395 = vpop.f32.mrf.mxu0
    %v1396 = vadd.f32 0.0, %v1395
    %v1397 = vpop.f32.mrf.mxu0
    %v1398 = vpop.f32.mrf.mxu0
    %v1399 = vadd.f32 0.0, %v1398
    %v1400 = vpop.f32.mrf.mxu0
    %1401 = vmatprep.mubr.bf16.mxu0 0
    %1402 = vmatmul.mubr.bf16.gmra.mxu0 %v1335
    %v1403 = vpop.f32.mrf.mxu0
    %v1404 = vadd.f32 0.0, %v1403
    %v1405 = vpop.f32.mrf.mxu0
    %v1406 = vpop.f32.mrf.mxu0
    %v1407 = vadd.f32 0.0, %v1406
    %v1408 = vpop.f32.mrf.mxu0
    %1409 = vdwg.mxu0
    %1410 = vmatprep.subr.bf16.mxu0 0
    %1411 = vmatpush1.bf16.xpose.msra.mxu0 0
    %1412 = vmatprep.subr.bf16.mxu0 0
    %1413 = vmatpush1.bf16.xpose.msra.mxu0 0
    %1414 = vmatprep.subr.bf16.mxu0 0
    %1415 = vmatpush1.bf16.xpose.msra.mxu0 0
    %1416 = vmatprep.subr.bf16.mxu0 0
    %1417 = vmatpush1.bf16.xpose.msra.mxu0 %v1094
    %1418 = vmatprep.subr.bf16.mxu0 0
    %1419 = vmatpush1.bf16.xpose.msra.mxu0 %v1092
    %1420 = vmatprep.subr.bf16.mxu0 0
    %1421 = vmatpush1.bf16.xpose.msra.mxu0 %v1090
    %1422 = vmatprep.subr.bf16.mxu0 0
    %1423 = vmatpush1.bf16.xpose.msra.mxu0 %v1088
    %1424 = vmatprep.subr.bf16.mxu0 0
    %1425 = vmatpush1.bf16.xpose.msra.mxu0 %v1086
    %1426 = vmatprep.subr.bf16.mxu0 0
    %1427 = vmatpush2.bf16.xpose.msra.mxu0 0
    %1428 = vmatprep.subr.bf16.mxu0 0
    %1429 = vmatpush2.bf16.xpose.msra.mxu0 0
    %1430 = vmatprep.subr.bf16.mxu0 0
    %1431 = vmatpush2.bf16.xpose.msra.mxu0 0
    %1432 = vmatprep.subr.bf16.mxu0 0
    %1433 = vmatpush2.bf16.xpose.msra.mxu0 0
    %1434 = vmatprep.subr.bf16.mxu0 0
    %1435 = vmatpush2.bf16.xpose.msra.mxu0 0
    %1436 = vmatprep.subr.bf16.mxu0 0
    %1437 = vmatpush2.bf16.xpose.msra.mxu0 0
    %1438 = vmatprep.subr.bf16.mxu0 0
    %1439 = vmatpush2.bf16.xpose.msra.mxu0 0
    %1440 = vmatprep.subr.bf16.mxu0 0
    %1441 = vmatpush2.bf16.xpose.msra.mxu0 0
    %1442 = vmatprep.mubr.bf16.mxu0 0
    %1443 = vmatmul.mubr.bf16.gmra.mxu0 %v1048
    %v1444 = vpop.f32.mrf.mxu0
    %v1445 = vadd.f32 %v144, %v1444
    %v1446 = vpop.f32.mrf.mxu0
    %v1447 = vpop.f32.mrf.mxu0
    %v1448 = vadd.f32 %v145, %v1447
    %v1449 = vpop.f32.mrf.mxu0
    %1450 = vmatprep.mubr.bf16.mxu0 0
    %1451 = vmatmul.mubr.bf16.gmra.mxu0 %v1050
    %v1452 = vpop.f32.mrf.mxu0
    %v1453 = vadd.f32 %v146, %v1452
    %v1454 = vpop.f32.mrf.mxu0
    %v1455 = vpop.f32.mrf.mxu0
    %v1456 = vadd.f32 %v147, %v1455
    %v1457 = vpop.f32.mrf.mxu0
    %1458 = vmatprep.mubr.bf16.mxu0 0
    %1459 = vmatmul.mubr.bf16.gmra.mxu0 %v1052
    %v1460 = vpop.f32.mrf.mxu0
    %v1461 = vadd.f32 %v148, %v1460
    %v1462 = vpop.f32.mrf.mxu0
    %v1463 = vpop.f32.mrf.mxu0
    %v1464 = vadd.f32 %v149, %v1463
    %v1465 = vpop.f32.mrf.mxu0
    %1466 = vmatprep.mubr.bf16.mxu0 0
    %1467 = vmatmul.mubr.bf16.gmra.mxu0 %v1054
    %v1468 = vpop.f32.mrf.mxu0
    %v1469 = vadd.f32 %v150, %v1468
    %v1470 = vpop.f32.mrf.mxu0
    %v1471 = vpop.f32.mrf.mxu0
    %v1472 = vadd.f32 %v151, %v1471
    %v1473 = vpop.f32.mrf.mxu0
    %1474 = vmatprep.mubr.bf16.mxu0 0
    %1475 = vmatmul.mubr.bf16.gmra.mxu0 %v1056
    %v1476 = vpop.f32.mrf.mxu0
    %v1477 = vadd.f32 %v152, %v1476
    %v1478 = vpop.f32.mrf.mxu0
    %v1479 = vpop.f32.mrf.mxu0
    %v1480 = vadd.f32 %v153, %v1479
    %v1481 = vpop.f32.mrf.mxu0
    %1482 = vdwg.mxu0
    %v1483 = vsel %vm1206, %v1445, -inf
    %1484 = vmax.xlane.f32.xlu0 %v1483
    %v1485 = vpop.xlane.xlu0 %1484
    %v1486 = vsel %vm1206, %v1448, -inf
    %1487 = vmax.xlane.f32.xlu0 %v1486
    %v1488 = vpop.xlane.xlu0 %1487
    %v1489 = vsel %vm1206, %v1453, -inf
    %1490 = vmax.xlane.f32.xlu0 %v1489
    %v1491 = vpop.xlane.xlu0 %1490
    %v1492 = vsel %vm1206, %v1456, -inf
    %1493 = vmax.xlane.f32.xlu0 %v1492
    %v1494 = vpop.xlane.xlu0 %1493
    %v1495 = vsel %vm1206, %v1461, -inf
    %1496 = vmax.xlane.f32.xlu0 %v1495
    %v1497 = vpop.xlane.xlu0 %1496
    %v1498 = vsel %vm1206, %v1464, -inf
    %1499 = vmax.xlane.f32.xlu0 %v1498
    %v1500 = vpop.xlane.xlu0 %1499
    %v1501 = vsel %vm1206, %v1469, -inf
    %1502 = vmax.xlane.f32.xlu0 %v1501
    %v1503 = vpop.xlane.xlu0 %1502
    %v1504 = vsel %vm1206, %v1472, -inf
    %1505 = vmax.xlane.f32.xlu0 %v1504
    %v1506 = vpop.xlane.xlu0 %1505
    %v1507 = vsel %vm1206, %v1477, -inf
    %1508 = vmax.xlane.f32.xlu0 %v1507
    %v1509 = vpop.xlane.xlu0 %1508
    %v1510 = vsel %vm1206, %v1480, -inf
    %1511 = vmax.xlane.f32.xlu0 %v1510
    %v1512 = vpop.xlane.xlu0 %1511
    %v1513 = vsub.f32 %v1445, %v1485
    %v1514 = vsub.f32 %v1448, %v1488
    %v1515 = vsub.f32 %v1453, %v1491
    %v1516 = vsub.f32 %v1456, %v1494
    %v1517 = vsub.f32 %v1461, %v1497
    %v1518 = vsub.f32 %v1464, %v1500
    %v1519 = vsub.f32 %v1469, %v1503
    %v1520 = vsub.f32 %v1472, %v1506
    %v1521 = vsub.f32 %v1477, %v1509
    %v1522 = vsub.f32 %v1480, %v1512
    %v1523 = vmul.f32 %v1513, 1.442695
    %v1524 = vpow.pop %v1523
    %v1525 = vmul.f32 %v1514, 1.442695
    %v1526 = vpow.pop %v1525
    %v1527 = vmul.f32 %v1515, 1.442695
    %v1528 = vpow.pop %v1527
    %v1529 = vmul.f32 %v1516, 1.442695
    %v1530 = vpow.pop %v1529
    %v1531 = vmul.f32 %v1517, 1.442695
    %v1532 = vpow.pop %v1531
    %v1533 = vmul.f32 %v1518, 1.442695
    %v1534 = vpow.pop %v1533
    %v1535 = vmul.f32 %v1519, 1.442695
    %v1536 = vpow.pop %v1535
    %v1537 = vmul.f32 %v1520, 1.442695
    %v1538 = vpow.pop %v1537
    %v1539 = vmul.f32 %v1521, 1.442695
    %v1540 = vpow.pop %v1539
    %v1541 = vmul.f32 %v1522, 1.442695
    %v1542 = vpow.pop %v1541
    %v1543 = vsel %vm1206, %v1524, 0.0
    %1544 = vadd.xlane.f32.xlu0 %v1543
    %v1545 = vpop.xlane.xlu0 %1544
    %v1546 = vsel %vm1206, %v1526, 0.0
    %1547 = vadd.xlane.f32.xlu0 %v1546
    %v1548 = vpop.xlane.xlu0 %1547
    %v1549 = vsel %vm1206, %v1528, 0.0
    %1550 = vadd.xlane.f32.xlu0 %v1549
    %v1551 = vpop.xlane.xlu0 %1550
    %v1552 = vsel %vm1206, %v1530, 0.0
    %1553 = vadd.xlane.f32.xlu0 %v1552
    %v1554 = vpop.xlane.xlu0 %1553
    %v1555 = vsel %vm1206, %v1532, 0.0
    %1556 = vadd.xlane.f32.xlu0 %v1555
    %v1557 = vpop.xlane.xlu0 %1556
    %v1558 = vsel %vm1206, %v1534, 0.0
    %1559 = vadd.xlane.f32.xlu0 %v1558
    %v1560 = vpop.xlane.xlu0 %1559
    %v1561 = vsel %vm1206, %v1536, 0.0
    %1562 = vadd.xlane.f32.xlu0 %v1561
    %v1563 = vpop.xlane.xlu0 %1562
    %v1564 = vsel %vm1206, %v1538, 0.0
    %1565 = vadd.xlane.f32.xlu0 %v1564
    %v1566 = vpop.xlane.xlu0 %1565
    %v1567 = vsel %vm1206, %v1540, 0.0
    %1568 = vadd.xlane.f32.xlu0 %v1567
    %v1569 = vpop.xlane.xlu0 %1568
    %v1570 = vsel %vm1206, %v1542, 0.0
    %1571 = vadd.xlane.f32.xlu0 %v1570
    %v1572 = vpop.xlane.xlu0 %1571
    %v1573 = vrcp.pop %v1545
    %v1574 = vrcp.pop %v1548
    %v1575 = vrcp.pop %v1551
    %v1576 = vrcp.pop %v1554
    %v1577 = vrcp.pop %v1557
    %v1578 = vrcp.pop %v1560
    %v1579 = vrcp.pop %v1563
    %v1580 = vrcp.pop %v1566
    %v1581 = vrcp.pop %v1569
    %v1582 = vrcp.pop %v1572
    %v1583 = vmul.f32 %v1524, %v1573
    %v1584 = vmul.f32 %v1526, %v1574
    %v1585 = vmul.f32 %v1528, %v1575
    %v1586 = vmul.f32 %v1530, %v1576
    %v1587 = vmul.f32 %v1532, %v1577
    %v1588 = vmul.f32 %v1534, %v1578
    %v1589 = vmul.f32 %v1536, %v1579
    %v1590 = vmul.f32 %v1538, %v1580
    %v1591 = vmul.f32 %v1540, %v1581
    %v1592 = vmul.f32 %v1542, %v1582
    %v1593 = vpack.c.bf16 %v1584, %v1583
    %v1594 = vpack.c.bf16 %v1586, %v1585
    %v1595 = vpack.c.bf16 %v1588, %v1587
    %v1596 = vpack.c.bf16 %v1590, %v1589
    %v1597 = vpack.c.bf16 %v1592, %v1591
    %v1599 = vsel %vm1206, %v1593, 0
    %v1602 = vsel %vm1206, %v1594, 0
    %v1605 = vsel %vm1206, %v1595, 0
    %v1608 = vsel %vm1206, %v1596, 0
    %v1611 = vsel %vm1206, %v1597, 0
    %1613 = vmatprep.subr.bf16.mxu0 0
    %1614 = vmatpush1.bf16.msra.mxu0 0
    %1615 = vmatprep.subr.bf16.mxu0 0
    %1616 = vmatpush1.bf16.msra.mxu0 0
    %1617 = vmatprep.subr.bf16.mxu0 0
    %1618 = vmatpush1.bf16.msra.mxu0 0
    %1619 = vmatprep.subr.bf16.mxu0 0
    %1620 = vmatpush1.bf16.msra.mxu0 %v1132
    %1621 = vmatprep.subr.bf16.mxu0 0
    %1622 = vmatpush1.bf16.msra.mxu0 %v1130
    %1623 = vmatprep.subr.bf16.mxu0 0
    %1624 = vmatpush1.bf16.msra.mxu0 %v1128
    %1625 = vmatprep.subr.bf16.mxu0 0
    %1626 = vmatpush1.bf16.msra.mxu0 %v1126
    %1627 = vmatprep.subr.bf16.mxu0 0
    %1628 = vmatpush1.bf16.msra.mxu0 %v1124
    %1629 = vmatprep.subr.bf16.mxu0 0
    %1630 = vmatpush2.bf16.msra.mxu0 0
    %1631 = vmatprep.subr.bf16.mxu0 0
    %1632 = vmatpush2.bf16.msra.mxu0 0
    %1633 = vmatprep.subr.bf16.mxu0 0
    %1634 = vmatpush2.bf16.msra.mxu0 0
    %1635 = vmatprep.subr.bf16.mxu0 0
    %1636 = vmatpush2.bf16.msra.mxu0 0
    %1637 = vmatprep.subr.bf16.mxu0 0
    %1638 = vmatpush2.bf16.msra.mxu0 0
    %1639 = vmatprep.subr.bf16.mxu0 0
    %1640 = vmatpush2.bf16.msra.mxu0 0
    %1641 = vmatprep.subr.bf16.mxu0 0
    %1642 = vmatpush2.bf16.msra.mxu0 0
    %1643 = vmatprep.subr.bf16.mxu0 0
    %1644 = vmatpush2.bf16.msra.mxu0 0
    %1645 = vmatprep.mubr.bf16.mxu0 0
    %1646 = vmatmul.mubr.bf16.gmra.mxu0 %v1599
    %v1647 = vpop.f32.mrf.mxu0
    %v1648 = vadd.f32 0.0, %v1647
    %v1649 = vpop.f32.mrf.mxu0
    %v1650 = vpop.f32.mrf.mxu0
    %v1651 = vadd.f32 0.0, %v1650
    %v1652 = vpop.f32.mrf.mxu0
    %1653 = vmatprep.mubr.bf16.mxu0 0
    %1654 = vmatmul.mubr.bf16.gmra.mxu0 %v1602
    %v1655 = vpop.f32.mrf.mxu0
    %v1656 = vadd.f32 0.0, %v1655
    %v1657 = vpop.f32.mrf.mxu0
    %v1658 = vpop.f32.mrf.mxu0
    %v1659 = vadd.f32 0.0, %v1658
    %v1660 = vpop.f32.mrf.mxu0
    %1661 = vmatprep.mubr.bf16.mxu0 0
    %1662 = vmatmul.mubr.bf16.gmra.mxu0 %v1605
    %v1663 = vpop.f32.mrf.mxu0
    %v1664 = vadd.f32 0.0, %v1663
    %v1665 = vpop.f32.mrf.mxu0
    %v1666 = vpop.f32.mrf.mxu0
    %v1667 = vadd.f32 0.0, %v1666
    %v1668 = vpop.f32.mrf.mxu0
    %1669 = vmatprep.mubr.bf16.mxu0 0
    %1670 = vmatmul.mubr.bf16.gmra.mxu0 %v1608
    %v1671 = vpop.f32.mrf.mxu0
    %v1672 = vadd.f32 0.0, %v1671
    %v1673 = vpop.f32.mrf.mxu0
    %v1674 = vpop.f32.mrf.mxu0
    %v1675 = vadd.f32 0.0, %v1674
    %v1676 = vpop.f32.mrf.mxu0
    %1677 = vmatprep.mubr.bf16.mxu0 0
    %1678 = vmatmul.mubr.bf16.gmra.mxu0 %v1611
    %v1679 = vpop.f32.mrf.mxu0
    %v1680 = vadd.f32 0.0, %v1679
    %v1681 = vpop.f32.mrf.mxu0
    %v1682 = vpop.f32.mrf.mxu0
    %v1683 = vadd.f32 0.0, %v1682
    %v1684 = vpop.f32.mrf.mxu0
    %1685 = vdwg.mxu0
    %v1686 = vld [vmem:[#allocation10] sm:$0xf]
    %v1687 = vld [vmem:[#allocation10 + $0x4] sm:$0xf]
    %v1688 = vld [vmem:[#allocation10 + $0x8] sm:$0xf]
    %v1689 = vld [vmem:[#allocation10 + $0xc] sm:$0xf]
    %v1690 = vld [vmem:[#allocation10 + $0x10] sm:$0xf]
    %v1691 = vld [vmem:[#allocation10 + $0x14] sm:$0xf]
    %v1692 = vld [vmem:[#allocation10 + $0x18] sm:$0xf]
    %v1693 = vld [vmem:[#allocation10 + $0x1c] sm:$0xf]
    %v1694 = vld [vmem:[#allocation10 + $0x20] sm:$0xf]
    %v1695 = vld [vmem:[#allocation10 + $0x24] sm:$0xf]
    %v1696 = vld [vmem:[#allocation10 + $0x28] sm:$0xf]
    %v1697 = vld [vmem:[#allocation10 + $0x2c] sm:$0xf]
    %v1698 = vld [vmem:[#allocation10 + $0x30] sm:$0xf]
    %v1699 = vld [vmem:[#allocation10 + $0x34] sm:$0xf]
    %v1700 = vld [vmem:[#allocation10 + $0x38] sm:$0xf]
    %v1701 = vld [vmem:[#allocation10 + $0x3c] sm:$0xf]
    %v1702 = vld [vmem:[#allocation10 + $0x40] sm:$0xf]
    %v1703 = vld [vmem:[#allocation10 + $0x44] sm:$0xf]
    %v1704 = vld [vmem:[#allocation10 + $0x48] sm:$0xf]
    %v1705 = vld [vmem:[#allocation10 + $0x4c] sm:$0xf]
    %v1706 = vld [vmem:[#allocation10 + $0x50] sm:$0xf]
    %v1707 = vld [vmem:[#allocation10 + $0x54] sm:$0xf]
    %v1708 = vld [vmem:[#allocation10 + $0x58] sm:$0xf]
    %v1709 = vld [vmem:[#allocation10 + $0x5c] sm:$0xf]
    %v1710 = vld [vmem:[#allocation10 + $0x60] sm:$0xf]
    %v1711 = vld [vmem:[#allocation10 + $0x64] sm:$0xf]
    %v1712 = vld [vmem:[#allocation10 + $0x68] sm:$0xf]
    %v1713 = vld [vmem:[#allocation10 + $0x6c] sm:$0xf]
    %v1714 = vld [vmem:[#allocation10 + $0x70] sm:$0xf]
    %v1715 = vld [vmem:[#allocation10 + $0x74] sm:$0xf]
    %v1716 = vld [vmem:[#allocation10 + $0x78] sm:$0xf]
    %v1717 = vld [vmem:[#allocation10 + $0x7c] sm:$0xf]
    %v1718 = vpack.c.bf16 %v1375, %v1372
    %v1719 = vpack.c.bf16 %v1651, %v1648
    %v1720 = vpack.c.bf16 %v1383, %v1380
    %v1721 = vpack.c.bf16 %v1659, %v1656
    %v1722 = vpack.c.bf16 %v1391, %v1388
    %v1723 = vpack.c.bf16 %v1667, %v1664
    %v1724 = vpack.c.bf16 %v1399, %v1396
    %v1725 = vpack.c.bf16 %v1675, %v1672
    %v1726 = vpack.c.bf16 %v1407, %v1404
    %v1727 = vpack.c.bf16 %v1683, %v1680
    %v1728 = vlaneseq
    %v1729 = vshrl.u32 %v1728, 7
    %v1730 = vsub.s32 3, %v1729
    %v1731 = vrot.slane %v326, %v1730
    %v1764 = vunpack.c.l.b16 %v1686
    %v1765 = vunpack.c.l.b16 %v1687
    %v1766 = vunpack.c.l.b16 %v1688
    %v1767 = vunpack.c.l.b16 %v1689
    %v1768 = vunpack.c.l.b16 %v1690
    %v1769 = vunpack.c.l.b16 %v1691
    %v1770 = vunpack.c.l.b16 %v1692
    %v1771 = vunpack.c.l.b16 %v1693
    %v1772 = vunpack.c.l.b16 %v1694
    %v1773 = vunpack.c.l.b16 %v1695
    %v1774 = vunpack.c.l.b16 %v1696
    %v1775 = vunpack.c.l.b16 %v1697
    %v1776 = vunpack.c.l.b16 %v1698
    %v1777 = vunpack.c.l.b16 %v1699
    %v1778 = vunpack.c.l.b16 %v1700
    %v1779 = vunpack.c.l.b16 %v1701
    %v1780 = vunpack.c.l.b16 %v1702
    %v1781 = vunpack.c.l.b16 %v1703
    %v1782 = vunpack.c.l.b16 %v1704
    %v1783 = vunpack.c.l.b16 %v1705
    %v1784 = vunpack.c.l.b16 %v1706
    %v1785 = vunpack.c.l.b16 %v1707
    %v1786 = vunpack.c.l.b16 %v1708
    %v1787 = vunpack.c.l.b16 %v1709
    %v1788 = vunpack.c.l.b16 %v1710
    %v1789 = vunpack.c.l.b16 %v1711
    %v1790 = vunpack.c.l.b16 %v1712
    %v1791 = vunpack.c.l.b16 %v1713
    %v1792 = vunpack.c.l.b16 %v1714
    %v1793 = vunpack.c.l.b16 %v1715
    %v1794 = vunpack.c.l.b16 %v1716
    %v1795 = vunpack.c.l.b16 %v1717
    %v1796 = vpack.c.b16 %v1765, %v1764
    %v1797 = vpack.c.b16 %v1767, %v1766
    %v1798 = vpack.c.b16 %v1769, %v1768
    %v1799 = vpack.c.b16 %v1771, %v1770
    %v1800 = vpack.c.b16 %v1773, %v1772
    %v1801 = vpack.c.b16 %v1775, %v1774
    %v1802 = vpack.c.b16 %v1777, %v1776
    %v1803 = vpack.c.b16 %v1779, %v1778
    %v1804 = vpack.c.b16 %v1781, %v1780
    %v1805 = vpack.c.b16 %v1783, %v1782
    %v1806 = vpack.c.b16 %v1785, %v1784
    %v1807 = vpack.c.b16 %v1787, %v1786
    %v1808 = vpack.c.b16 %v1789, %v1788
    %v1809 = vpack.c.b16 %v1791, %v1790
    %v1810 = vpack.c.b16 %v1793, %v1792
    %v1811 = vpack.c.b16 %v1795, %v1794
    %1828 = vmatprep.subr.bf16.mxu0 0
    %1829 = vmatpush1.bf16.msra.mxu0 %v1803
    %1830 = vmatprep.subr.bf16.mxu0 0
    %1831 = vmatpush1.bf16.msra.mxu0 %v1802
    %1832 = vmatprep.subr.bf16.mxu0 0
    %1833 = vmatpush1.bf16.msra.mxu0 %v1801
    %1834 = vmatprep.subr.bf16.mxu0 0
    %1835 = vmatpush1.bf16.msra.mxu0 %v1800
    %1836 = vmatprep.subr.bf16.mxu0 0
    %1837 = vmatpush1.bf16.msra.mxu0 %v1799
    %1838 = vmatprep.subr.bf16.mxu0 0
    %1839 = vmatpush1.bf16.msra.mxu0 %v1798
    %1840 = vmatprep.subr.bf16.mxu0 0
    %1841 = vmatpush1.bf16.msra.mxu0 %v1797
    %1842 = vmatprep.subr.bf16.mxu0 0
    %1843 = vmatpush1.bf16.msra.mxu0 %v1796
    %1844 = vmatprep.subr.bf16.mxu0 0
    %1845 = vmatpush2.bf16.msra.mxu0 %v1811
    %1846 = vmatprep.subr.bf16.mxu0 0
    %1847 = vmatpush2.bf16.msra.mxu0 %v1810
    %1848 = vmatprep.subr.bf16.mxu0 0
    %1849 = vmatpush2.bf16.msra.mxu0 %v1809
    %1850 = vmatprep.subr.bf16.mxu0 0
    %1851 = vmatpush2.bf16.msra.mxu0 %v1808
    %1852 = vmatprep.subr.bf16.mxu0 0
    %1853 = vmatpush2.bf16.msra.mxu0 %v1807
    %1854 = vmatprep.subr.bf16.mxu0 0
    %1855 = vmatpush2.bf16.msra.mxu0 %v1806
    %1856 = vmatprep.subr.bf16.mxu0 0
    %1857 = vmatpush2.bf16.msra.mxu0 %v1805
    %1858 = vmatprep.subr.bf16.mxu0 0
    %1859 = vmatpush2.bf16.msra.mxu0 %v1804
    %1860 = vmatprep.mubr.bf16.mxu0 %v1719
    %1861 = vmatmul.mubr.bf16.gmra.mxu0 %v1718
    %v1862 = vpop.f32.mrf.mxu0
    %v1863 = vadd.f32 %v1731, %v1862
    %v1864 = vpop.f32.mrf.mxu0
    %v1865 = vpop.f32.mrf.mxu0
    %v1866 = vadd.f32 %v1731, %v1865
    %v1867 = vpop.f32.mrf.mxu0
    %1868 = vmatprep.mubr.bf16.mxu0 %v1721
    %1869 = vmatmul.mubr.bf16.gmra.mxu0 %v1720
    %v1870 = vpop.f32.mrf.mxu0
    %v1871 = vadd.f32 %v1731, %v1870
    %v1872 = vpop.f32.mrf.mxu0
    %v1873 = vpop.f32.mrf.mxu0
    %v1874 = vadd.f32 %v1731, %v1873
    %v1875 = vpop.f32.mrf.mxu0
    %1876 = vmatprep.mubr.bf16.mxu0 %v1723
    %1877 = vmatmul.mubr.bf16.gmra.mxu0 %v1722
    %v1878 = vpop.f32.mrf.mxu0
    %v1879 = vadd.f32 %v1731, %v1878
    %v1880 = vpop.f32.mrf.mxu0
    %v1881 = vpop.f32.mrf.mxu0
    %v1882 = vadd.f32 %v1731, %v1881
    %v1883 = vpop.f32.mrf.mxu0
    %1884 = vmatprep.mubr.bf16.mxu0 %v1725
    %1885 = vmatmul.mubr.bf16.gmra.mxu0 %v1724
    %v1886 = vpop.f32.mrf.mxu0
    %v1887 = vadd.f32 %v1731, %v1886
    %v1888 = vpop.f32.mrf.mxu0
    %v1889 = vpop.f32.mrf.mxu0
    %v1890 = vadd.f32 %v1731, %v1889
    %v1891 = vpop.f32.mrf.mxu0
    %1892 = vmatprep.mubr.bf16.mxu0 %v1727
    %1893 = vmatmul.mubr.bf16.gmra.mxu0 %v1726
    %v1894 = vpop.f32.mrf.mxu0
    %v1895 = vadd.f32 %v1731, %v1894
    %v1896 = vpop.f32.mrf.mxu0
    %v1897 = vpop.f32.mrf.mxu0
    %v1898 = vadd.f32 %v1731, %v1897
    %v1899 = vpop.f32.mrf.mxu0
    %1900 = vdwg.mxu0
    %v1901 = vadd.f32 %v306, %v1863
    %v1902 = vadd.f32 %v307, %v1866
    %v1903 = vadd.f32 %v308, %v1871
    %v1904 = vadd.f32 %v309, %v1874
    %v1905 = vadd.f32 %v310, %v1879
    %v1906 = vadd.f32 %v311, %v1882
    %v1907 = vadd.f32 %v312, %v1887
    %v1908 = vadd.f32 %v313, %v1890
    %v1909 = vadd.f32 %v314, %v1895
    %v1910 = vadd.f32 %v315, %v1898
    %1911 = vadd.xlane.f32.xlu0 %v1901
    %v1912 = vpop.xlane.xlu0 %1911
    %1913 = vadd.xlane.f32.xlu0 %v1902
    %v1914 = vpop.xlane.xlu0 %1913
    %1915 = vadd.xlane.f32.xlu0 %v1903
    %v1916 = vpop.xlane.xlu0 %1915
    %1917 = vadd.xlane.f32.xlu0 %v1904
    %v1918 = vpop.xlane.xlu0 %1917
    %1919 = vadd.xlane.f32.xlu0 %v1905
    %v1920 = vpop.xlane.xlu0 %1919
    %1921 = vadd.xlane.f32.xlu0 %v1906
    %v1922 = vpop.xlane.xlu0 %1921
    %1923 = vadd.xlane.f32.xlu0 %v1907
    %v1924 = vpop.xlane.xlu0 %1923
    %1925 = vadd.xlane.f32.xlu0 %v1908
    %v1926 = vpop.xlane.xlu0 %1925
    %1927 = vadd.xlane.f32.xlu0 %v1909
    %v1928 = vpop.xlane.xlu0 %1927
    %1929 = vadd.xlane.f32.xlu0 %v1910
    %v1930 = vpop.xlane.xlu0 %1929
    %v1931 = vmul.f32 %v1912, 0.03125
    %v1932 = vmul.f32 %v1914, 0.03125
    %v1933 = vmul.f32 %v1916, 0.03125
    %v1934 = vmul.f32 %v1918, 0.03125
    %v1935 = vmul.f32 %v1920, 0.03125
    %v1936 = vmul.f32 %v1922, 0.03125
    %v1937 = vmul.f32 %v1924, 0.03125
    %v1938 = vmul.f32 %v1926, 0.03125
    %v1939 = vmul.f32 %v1928, 0.03125
    %v1940 = vmul.f32 %v1930, 0.03125
    %v1941 = vsub.f32 %v1901, %v1931
    %v1942 = vsub.f32 %v1902, %v1932
    %v1943 = vsub.f32 %v1903, %v1933
    %v1944 = vsub.f32 %v1904, %v1934
    %v1945 = vsub.f32 %v1905, %v1935
    %v1946 = vsub.f32 %v1906, %v1936
    %v1947 = vsub.f32 %v1907, %v1937
    %v1948 = vsub.f32 %v1908, %v1938
    %v1949 = vsub.f32 %v1909, %v1939
    %v1950 = vsub.f32 %v1910, %v1940
    %v1951 = vsel %vm207, %v1941, 0.0
    %v1952 = vsel %vm207, %v1942, 0.0
    %v1953 = vsel %vm207, %v1943, 0.0
    %v1954 = vsel %vm207, %v1944, 0.0
    %v1955 = vsel %vm207, %v1945, 0.0
    %v1956 = vsel %vm207, %v1946, 0.0
    %v1957 = vsel %vm207, %v1947, 0.0
    %v1958 = vsel %vm207, %v1948, 0.0
    %v1959 = vsel %vm207, %v1949, 0.0
    %v1960 = vsel %vm207, %v1950, 0.0
    %v1961 = vmul.f32 %v1951, %v1951
    %v1962 = vmul.f32 %v1952, %v1952
    %v1963 = vmul.f32 %v1953, %v1953
    %v1964 = vmul.f32 %v1954, %v1954
    %v1965 = vmul.f32 %v1955, %v1955
    %v1966 = vmul.f32 %v1956, %v1956
    %v1967 = vmul.f32 %v1957, %v1957
    %v1968 = vmul.f32 %v1958, %v1958
    %v1969 = vmul.f32 %v1959, %v1959
    %v1970 = vmul.f32 %v1960, %v1960
    %1971 = vadd.xlane.f32.xlu0 %v1961
    %v1972 = vpop.xlane.xlu0 %1971
    %1973 = vadd.xlane.f32.xlu0 %v1962
    %v1974 = vpop.xlane.xlu0 %1973
    %1975 = vadd.xlane.f32.xlu0 %v1963
    %v1976 = vpop.xlane.xlu0 %1975
    %1977 = vadd.xlane.f32.xlu0 %v1964
    %v1978 = vpop.xlane.xlu0 %1977
    %1979 = vadd.xlane.f32.xlu0 %v1965
    %v1980 = vpop.xlane.xlu0 %1979
    %1981 = vadd.xlane.f32.xlu0 %v1966
    %v1982 = vpop.xlane.xlu0 %1981
    %1983 = vadd.xlane.f32.xlu0 %v1967
    %v1984 = vpop.xlane.xlu0 %1983
    %1985 = vadd.xlane.f32.xlu0 %v1968
    %v1986 = vpop.xlane.xlu0 %1985
    %1987 = vadd.xlane.f32.xlu0 %v1969
    %v1988 = vpop.xlane.xlu0 %1987
    %1989 = vadd.xlane.f32.xlu0 %v1970
    %v1990 = vpop.xlane.xlu0 %1989
    %v1991 = vmul.f32 %v1972, 0.03125
    %v1992 = vmul.f32 %v1974, 0.03125
    %v1993 = vmul.f32 %v1976, 0.03125
    %v1994 = vmul.f32 %v1978, 0.03125
    %v1995 = vmul.f32 %v1980, 0.03125
    %v1996 = vmul.f32 %v1982, 0.03125
    %v1997 = vmul.f32 %v1984, 0.03125
    %v1998 = vmul.f32 %v1986, 0.03125
    %v1999 = vmul.f32 %v1988, 0.03125
    %v2000 = vmul.f32 %v1990, 0.03125
    %v2001 = vadd.f32 %v1991, 1e-05
    %v2002 = vadd.f32 %v1992, 1e-05
    %v2003 = vadd.f32 %v1993, 1e-05
    %v2004 = vadd.f32 %v1994, 1e-05
    %v2005 = vadd.f32 %v1995, 1e-05
    %v2006 = vadd.f32 %v1996, 1e-05
    %v2007 = vadd.f32 %v1997, 1e-05
    %v2008 = vadd.f32 %v1998, 1e-05
    %v2009 = vadd.f32 %v1999, 1e-05
    %v2010 = vadd.f32 %v2000, 1e-05
    %v2011 = vrsqrt.pop %v2001
    %v2012 = vrsqrt.pop %v2002
    %v2013 = vrsqrt.pop %v2003
    %v2014 = vrsqrt.pop %v2004
    %v2015 = vrsqrt.pop %v2005
    %v2016 = vrsqrt.pop %v2006
    %v2017 = vrsqrt.pop %v2007
    %v2018 = vrsqrt.pop %v2008
    %v2019 = vrsqrt.pop %v2009
    %v2020 = vrsqrt.pop %v2010
    %v2021 = vmul.f32 %v1951, %v2011
    %v2022 = vmul.f32 %v1952, %v2012
    %v2023 = vmul.f32 %v1953, %v2013
    %v2024 = vmul.f32 %v1954, %v2014
    %v2025 = vmul.f32 %v1955, %v2015
    %v2026 = vmul.f32 %v1956, %v2016
    %v2027 = vmul.f32 %v1957, %v2017
    %v2028 = vmul.f32 %v1958, %v2018
    %v2029 = vmul.f32 %v1959, %v2019
    %v2030 = vmul.f32 %v1960, %v2020
    %v2031 = vlaneseq
    %v2032 = vshrl.u32 %v2031, 7
    %v2033 = vsub.s32 0, %v2032
    %v2034 = vrot.slane %v328, %v2033
    %v2035 = vmul.f32 %v2021, %v2034
    %v2036 = vmul.f32 %v2022, %v2034
    %v2037 = vmul.f32 %v2023, %v2034
    %v2038 = vmul.f32 %v2024, %v2034
    %v2039 = vmul.f32 %v2025, %v2034
    %v2040 = vmul.f32 %v2026, %v2034
    %v2041 = vmul.f32 %v2027, %v2034
    %v2042 = vmul.f32 %v2028, %v2034
    %v2043 = vmul.f32 %v2029, %v2034
    %v2044 = vmul.f32 %v2030, %v2034
    %v2045 = vlaneseq
    %v2046 = vshrl.u32 %v2045, 7
    %v2047 = vsub.s32 1, %v2046
    %v2048 = vrot.slane %v328, %v2047
    %v2049 = vadd.f32 %v2035, %v2048
    %v2050 = vadd.f32 %v2036, %v2048
    %v2051 = vadd.f32 %v2037, %v2048
    %v2052 = vadd.f32 %v2038, %v2048
    %v2053 = vadd.f32 %v2039, %v2048
    %v2054 = vadd.f32 %v2040, %v2048
    %v2055 = vadd.f32 %v2041, %v2048
    %v2056 = vadd.f32 %v2042, %v2048
    %v2057 = vadd.f32 %v2043, %v2048
    %v2058 = vadd.f32 %v2044, %v2048
    %v2059 = vld [vmem:[#allocation11] sm:$0xf]
    %v2060 = vld [vmem:[#allocation11 + $0x4] sm:$0xf]
    %v2061 = vld [vmem:[#allocation11 + $0x8] sm:$0xf]
    %v2062 = vld [vmem:[#allocation11 + $0xc] sm:$0xf]
    %v2063 = vld [vmem:[#allocation11 + $0x10] sm:$0xf]
    %v2064 = vld [vmem:[#allocation11 + $0x14] sm:$0xf]
    %v2065 = vld [vmem:[#allocation11 + $0x18] sm:$0xf]
    %v2066 = vld [vmem:[#allocation11 + $0x1c] sm:$0xf]
    %v2067 = vld [vmem:[#allocation11 + $0x20] sm:$0xf]
    %v2068 = vld [vmem:[#allocation11 + $0x24] sm:$0xf]
    %v2069 = vld [vmem:[#allocation11 + $0x28] sm:$0xf]
    %v2070 = vld [vmem:[#allocation11 + $0x2c] sm:$0xf]
    %v2071 = vld [vmem:[#allocation11 + $0x30] sm:$0xf]
    %v2072 = vld [vmem:[#allocation11 + $0x34] sm:$0xf]
    %v2073 = vld [vmem:[#allocation11 + $0x38] sm:$0xf]
    %v2074 = vld [vmem:[#allocation11 + $0x3c] sm:$0xf]
    %v2075 = vpack.c.bf16 %v2050, %v2049
    %v2076 = vpack.c.bf16 %v2052, %v2051
    %v2077 = vpack.c.bf16 %v2054, %v2053
    %v2078 = vpack.c.bf16 %v2056, %v2055
    %v2079 = vpack.c.bf16 %v2058, %v2057
    %v2080 = vlaneseq
    %v2081 = vshrl.u32 %v2080, 7
    %v2082 = vsub.s32 4, %v2081
    %v2083 = vrot.slane %v326, %v2082
    %v2100 = vunpack.c.l.b16 %v2059
    %v2101 = vunpack.c.l.b16 %v2060
    %v2102 = vunpack.c.l.b16 %v2061
    %v2103 = vunpack.c.l.b16 %v2062
    %v2104 = vunpack.c.l.b16 %v2063
    %v2105 = vunpack.c.l.b16 %v2064
    %v2106 = vunpack.c.l.b16 %v2065
    %v2107 = vunpack.c.l.b16 %v2066
    %v2108 = vunpack.c.l.b16 %v2067
    %v2109 = vunpack.c.l.b16 %v2068
    %v2110 = vunpack.c.l.b16 %v2069
    %v2111 = vunpack.c.l.b16 %v2070
    %v2112 = vunpack.c.l.b16 %v2071
    %v2113 = vunpack.c.l.b16 %v2072
    %v2114 = vunpack.c.l.b16 %v2073
    %v2115 = vunpack.c.l.b16 %v2074
    %v2116 = vpack.c.b16 %v2101, %v2100
    %v2117 = vpack.c.b16 %v2103, %v2102
    %v2118 = vpack.c.b16 %v2105, %v2104
    %v2119 = vpack.c.b16 %v2107, %v2106
    %v2120 = vpack.c.b16 %v2109, %v2108
    %v2121 = vpack.c.b16 %v2111, %v2110
    %v2122 = vpack.c.b16 %v2113, %v2112
    %v2123 = vpack.c.b16 %v2115, %v2114
    %2132 = vmatprep.subr.bf16.mxu0 0
    %2133 = vmatpush1.bf16.msra.mxu0 %v2123
    %2134 = vmatprep.subr.bf16.mxu0 0
    %2135 = vmatpush1.bf16.msra.mxu0 %v2122
    %2136 = vmatprep.subr.bf16.mxu0 0
    %2137 = vmatpush1.bf16.msra.mxu0 %v2121
    %2138 = vmatprep.subr.bf16.mxu0 0
    %2139 = vmatpush1.bf16.msra.mxu0 %v2120
    %2140 = vmatprep.subr.bf16.mxu0 0
    %2141 = vmatpush1.bf16.msra.mxu0 %v2119
    %2142 = vmatprep.subr.bf16.mxu0 0
    %2143 = vmatpush1.bf16.msra.mxu0 %v2118
    %2144 = vmatprep.subr.bf16.mxu0 0
    %2145 = vmatpush1.bf16.msra.mxu0 %v2117
    %2146 = vmatprep.subr.bf16.mxu0 0
    %2147 = vmatpush1.bf16.msra.mxu0 %v2116
    %2148 = vmatprep.subr.bf16.mxu0 0
    %2149 = vmatpush2.bf16.msra.mxu0 0
    %2150 = vmatprep.subr.bf16.mxu0 0
    %2151 = vmatpush2.bf16.msra.mxu0 0
    %2152 = vmatprep.subr.bf16.mxu0 0
    %2153 = vmatpush2.bf16.msra.mxu0 0
    %2154 = vmatprep.subr.bf16.mxu0 0
    %2155 = vmatpush2.bf16.msra.mxu0 0
    %2156 = vmatprep.subr.bf16.mxu0 0
    %2157 = vmatpush2.bf16.msra.mxu0 0
    %2158 = vmatprep.subr.bf16.mxu0 0
    %2159 = vmatpush2.bf16.msra.mxu0 0
    %2160 = vmatprep.subr.bf16.mxu0 0
    %2161 = vmatpush2.bf16.msra.mxu0 0
    %2162 = vmatprep.subr.bf16.mxu0 0
    %2163 = vmatpush2.bf16.msra.mxu0 0
    %2164 = vmatprep.mubr.bf16.mxu0 0
    %2165 = vmatmul.mubr.bf16.gmra.mxu0 %v2075
    %v2166 = vpop.f32.mrf.mxu0
    %v2167 = vadd.f32 %v2083, %v2166
    %v2168 = vpop.f32.mrf.mxu0
    %v2169 = vpop.f32.mrf.mxu0
    %v2170 = vadd.f32 %v2083, %v2169
    %v2171 = vpop.f32.mrf.mxu0
    %2172 = vmatprep.mubr.bf16.mxu0 0
    %2173 = vmatmul.mubr.bf16.gmra.mxu0 %v2076
    %v2174 = vpop.f32.mrf.mxu0
    %v2175 = vadd.f32 %v2083, %v2174
    %v2176 = vpop.f32.mrf.mxu0
    %v2177 = vpop.f32.mrf.mxu0
    %v2178 = vadd.f32 %v2083, %v2177
    %v2179 = vpop.f32.mrf.mxu0
    %2180 = vmatprep.mubr.bf16.mxu0 0
    %2181 = vmatmul.mubr.bf16.gmra.mxu0 %v2077
    %v2182 = vpop.f32.mrf.mxu0
    %v2183 = vadd.f32 %v2083, %v2182
    %v2184 = vpop.f32.mrf.mxu0
    %v2185 = vpop.f32.mrf.mxu0
    %v2186 = vadd.f32 %v2083, %v2185
    %v2187 = vpop.f32.mrf.mxu0
    %2188 = vmatprep.mubr.bf16.mxu0 0
    %2189 = vmatmul.mubr.bf16.gmra.mxu0 %v2078
    %v2190 = vpop.f32.mrf.mxu0
    %v2191 = vadd.f32 %v2083, %v2190
    %v2192 = vpop.f32.mrf.mxu0
    %v2193 = vpop.f32.mrf.mxu0
    %v2194 = vadd.f32 %v2083, %v2193
    %v2195 = vpop.f32.mrf.mxu0
    %2196 = vmatprep.mubr.bf16.mxu0 0
    %2197 = vmatmul.mubr.bf16.gmra.mxu0 %v2079
    %v2198 = vpop.f32.mrf.mxu0
    %v2199 = vadd.f32 %v2083, %v2198
    %v2200 = vpop.f32.mrf.mxu0
    %v2201 = vpop.f32.mrf.mxu0
    %v2202 = vadd.f32 %v2083, %v2201
    %v2203 = vpop.f32.mrf.mxu0
    %2204 = vdwg.mxu0
    %v2205 = vmul.f32 %v2167, 1.702
    %v2206 = vmul.f32 %v2170, 1.702
    %v2207 = vmul.f32 %v2175, 1.702
    %v2208 = vmul.f32 %v2178, 1.702
    %v2209 = vmul.f32 %v2183, 1.702
    %v2210 = vmul.f32 %v2186, 1.702
    %v2211 = vmul.f32 %v2191, 1.702
    %v2212 = vmul.f32 %v2194, 1.702
    %v2213 = vmul.f32 %v2199, 1.702
    %v2214 = vmul.f32 %v2202, 1.702
    %v2215 = vxor.u32 %v2205, 2147483648
    %v2216 = vxor.u32 %v2206, 2147483648
    %v2217 = vxor.u32 %v2207, 2147483648
    %v2218 = vxor.u32 %v2208, 2147483648
    %v2219 = vxor.u32 %v2209, 2147483648
    %v2220 = vxor.u32 %v2210, 2147483648
    %v2221 = vxor.u32 %v2211, 2147483648
    %v2222 = vxor.u32 %v2212, 2147483648
    %v2223 = vxor.u32 %v2213, 2147483648
    %v2224 = vxor.u32 %v2214, 2147483648
    %v2225 = vmul.f32 %v2215, 1.442695
    %v2226 = vpow.pop %v2225
    %v2227 = vmul.f32 %v2216, 1.442695
    %v2228 = vpow.pop %v2227
    %v2229 = vmul.f32 %v2217, 1.442695
    %v2230 = vpow.pop %v2229
    %v2231 = vmul.f32 %v2218, 1.442695
    %v2232 = vpow.pop %v2231
    %v2233 = vmul.f32 %v2219, 1.442695
    %v2234 = vpow.pop %v2233
    %v2235 = vmul.f32 %v2220, 1.442695
    %v2236 = vpow.pop %v2235
    %v2237 = vmul.f32 %v2221, 1.442695
    %v2238 = vpow.pop %v2237
    %v2239 = vmul.f32 %v2222, 1.442695
    %v2240 = vpow.pop %v2239
    %v2241 = vmul.f32 %v2223, 1.442695
    %v2242 = vpow.pop %v2241
    %v2243 = vmul.f32 %v2224, 1.442695
    %v2244 = vpow.pop %v2243
    %v2245 = vadd.f32 %v2226, 1.0
    %v2246 = vadd.f32 %v2228, 1.0
    %v2247 = vadd.f32 %v2230, 1.0
    %v2248 = vadd.f32 %v2232, 1.0
    %v2249 = vadd.f32 %v2234, 1.0
    %v2250 = vadd.f32 %v2236, 1.0
    %v2251 = vadd.f32 %v2238, 1.0
    %v2252 = vadd.f32 %v2240, 1.0
    %v2253 = vadd.f32 %v2242, 1.0
    %v2254 = vadd.f32 %v2244, 1.0
    %v2255 = vrcp.pop %v2245
    %v2256 = vmul.f32 1.0, %v2255
    %v2257 = vrcp.pop %v2246
    %v2258 = vmul.f32 1.0, %v2257
    %v2259 = vrcp.pop %v2247
    %v2260 = vmul.f32 1.0, %v2259
    %v2261 = vrcp.pop %v2248
    %v2262 = vmul.f32 1.0, %v2261
    %v2263 = vrcp.pop %v2249
    %v2264 = vmul.f32 1.0, %v2263
    %v2265 = vrcp.pop %v2250
    %v2266 = vmul.f32 1.0, %v2265
    %v2267 = vrcp.pop %v2251
    %v2268 = vmul.f32 1.0, %v2267
    %v2269 = vrcp.pop %v2252
    %v2270 = vmul.f32 1.0, %v2269
    %v2271 = vrcp.pop %v2253
    %v2272 = vmul.f32 1.0, %v2271
    %v2273 = vrcp.pop %v2254
    %v2274 = vmul.f32 1.0, %v2273
    %v2275 = vmul.f32 %v2167, %v2256
    %v2276 = vmul.f32 %v2170, %v2258
    %v2277 = vmul.f32 %v2175, %v2260
    %v2278 = vmul.f32 %v2178, %v2262
    %v2279 = vmul.f32 %v2183, %v2264
    %v2280 = vmul.f32 %v2186, %v2266
    %v2281 = vmul.f32 %v2191, %v2268
    %v2282 = vmul.f32 %v2194, %v2270
    %v2283 = vmul.f32 %v2199, %v2272
    %v2284 = vmul.f32 %v2202, %v2274
    %v2285 = vld [vmem:[#allocation13] sm:$0xf]
    %v2286 = vld [vmem:[#allocation13 + $0x4] sm:$0xf]
    %v2287 = vld [vmem:[#allocation13 + $0x8] sm:$0xf]
    %v2288 = vld [vmem:[#allocation13 + $0xc] sm:$0xf]
    %v2289 = vld [vmem:[#allocation13 + $0x10] sm:$0xf]
    %v2290 = vld [vmem:[#allocation13 + $0x14] sm:$0xf]
    %v2291 = vld [vmem:[#allocation13 + $0x18] sm:$0xf]
    %v2292 = vld [vmem:[#allocation13 + $0x1c] sm:$0xf]
    %v2293 = vld [vmem:[#allocation13 + $0x20] sm:$0xf]
    %v2294 = vld [vmem:[#allocation13 + $0x24] sm:$0xf]
    %v2295 = vld [vmem:[#allocation13 + $0x28] sm:$0xf]
    %v2296 = vld [vmem:[#allocation13 + $0x2c] sm:$0xf]
    %v2297 = vld [vmem:[#allocation13 + $0x30] sm:$0xf]
    %v2298 = vld [vmem:[#allocation13 + $0x34] sm:$0xf]
    %v2299 = vld [vmem:[#allocation13 + $0x38] sm:$0xf]
    %v2300 = vld [vmem:[#allocation13 + $0x3c] sm:$0xf]
    %v2301 = vpack.c.bf16 %v2276, %v2275
    %v2302 = vpack.c.bf16 %v2278, %v2277
    %v2303 = vpack.c.bf16 %v2280, %v2279
    %v2304 = vpack.c.bf16 %v2282, %v2281
    %v2305 = vpack.c.bf16 %v2284, %v2283
    %v2306 = vlaneseq
    %v2307 = vshrl.u32 %v2306, 7
    %v2308 = vsub.s32 5, %v2307
    %v2309 = vrot.slane %v326, %v2308
    %v2326 = vunpack.c.l.b16 %v2285
    %v2327 = vunpack.c.l.b16 %v2286
    %v2328 = vunpack.c.l.b16 %v2287
    %v2329 = vunpack.c.l.b16 %v2288
    %v2330 = vunpack.c.l.b16 %v2289
    %v2331 = vunpack.c.l.b16 %v2290
    %v2332 = vunpack.c.l.b16 %v2291
    %v2333 = vunpack.c.l.b16 %v2292
    %v2334 = vunpack.c.l.b16 %v2293
    %v2335 = vunpack.c.l.b16 %v2294
    %v2336 = vunpack.c.l.b16 %v2295
    %v2337 = vunpack.c.l.b16 %v2296
    %v2338 = vunpack.c.l.b16 %v2297
    %v2339 = vunpack.c.l.b16 %v2298
    %v2340 = vunpack.c.l.b16 %v2299
    %v2341 = vunpack.c.l.b16 %v2300
    %v2342 = vpack.c.b16 %v2327, %v2326
    %v2343 = vpack.c.b16 %v2329, %v2328
    %v2344 = vpack.c.b16 %v2331, %v2330
    %v2345 = vpack.c.b16 %v2333, %v2332
    %v2346 = vpack.c.b16 %v2335, %v2334
    %v2347 = vpack.c.b16 %v2337, %v2336
    %v2348 = vpack.c.b16 %v2339, %v2338
    %v2349 = vpack.c.b16 %v2341, %v2340
    %2358 = vmatprep.subr.bf16.mxu0 0
    %2359 = vmatpush1.bf16.msra.mxu0 %v2349
    %2360 = vmatprep.subr.bf16.mxu0 0
    %2361 = vmatpush1.bf16.msra.mxu0 %v2348
    %2362 = vmatprep.subr.bf16.mxu0 0
    %2363 = vmatpush1.bf16.msra.mxu0 %v2347
    %2364 = vmatprep.subr.bf16.mxu0 0
    %2365 = vmatpush1.bf16.msra.mxu0 %v2346
    %2366 = vmatprep.subr.bf16.mxu0 0
    %2367 = vmatpush1.bf16.msra.mxu0 %v2345
    %2368 = vmatprep.subr.bf16.mxu0 0
    %2369 = vmatpush1.bf16.msra.mxu0 %v2344
    %2370 = vmatprep.subr.bf16.mxu0 0
    %2371 = vmatpush1.bf16.msra.mxu0 %v2343
    %2372 = vmatprep.subr.bf16.mxu0 0
    %2373 = vmatpush1.bf16.msra.mxu0 %v2342
    %2374 = vmatprep.subr.bf16.mxu0 0
    %2375 = vmatpush2.bf16.msra.mxu0 0
    %2376 = vmatprep.subr.bf16.mxu0 0
    %2377 = vmatpush2.bf16.msra.mxu0 0
    %2378 = vmatprep.subr.bf16.mxu0 0
    %2379 = vmatpush2.bf16.msra.mxu0 0
    %2380 = vmatprep.subr.bf16.mxu0 0
    %2381 = vmatpush2.bf16.msra.mxu0 0
    %2382 = vmatprep.subr.bf16.mxu0 0
    %2383 = vmatpush2.bf16.msra.mxu0 0
    %2384 = vmatprep.subr.bf16.mxu0 0
    %2385 = vmatpush2.bf16.msra.mxu0 0
    %2386 = vmatprep.subr.bf16.mxu0 0
    %2387 = vmatpush2.bf16.msra.mxu0 0
    %2388 = vmatprep.subr.bf16.mxu0 0
    %2389 = vmatpush2.bf16.msra.mxu0 0
    %2390 = vmatprep.mubr.bf16.mxu0 0
    %2391 = vmatmul.mubr.bf16.gmra.mxu0 %v2301
    %v2392 = vpop.f32.mrf.mxu0
    %v2393 = vadd.f32 %v2309, %v2392
    %v2394 = vpop.f32.mrf.mxu0
    %v2395 = vpop.f32.mrf.mxu0
    %v2396 = vadd.f32 %v2309, %v2395
    %v2397 = vpop.f32.mrf.mxu0
    %2398 = vmatprep.mubr.bf16.mxu0 0
    %2399 = vmatmul.mubr.bf16.gmra.mxu0 %v2302
    %v2400 = vpop.f32.mrf.mxu0
    %v2401 = vadd.f32 %v2309, %v2400
    %v2402 = vpop.f32.mrf.mxu0
    %v2403 = vpop.f32.mrf.mxu0
    %v2404 = vadd.f32 %v2309, %v2403
    %v2405 = vpop.f32.mrf.mxu0
    %2406 = vmatprep.mubr.bf16.mxu0 0
    %2407 = vmatmul.mubr.bf16.gmra.mxu0 %v2303
    %v2408 = vpop.f32.mrf.mxu0
    %v2409 = vadd.f32 %v2309, %v2408
    %v2410 = vpop.f32.mrf.mxu0
    %v2411 = vpop.f32.mrf.mxu0
    %v2412 = vadd.f32 %v2309, %v2411
    %v2413 = vpop.f32.mrf.mxu0
    %2414 = vmatprep.mubr.bf16.mxu0 0
    %2415 = vmatmul.mubr.bf16.gmra.mxu0 %v2304
    %v2416 = vpop.f32.mrf.mxu0
    %v2417 = vadd.f32 %v2309, %v2416
    %v2418 = vpop.f32.mrf.mxu0
    %v2419 = vpop.f32.mrf.mxu0
    %v2420 = vadd.f32 %v2309, %v2419
    %v2421 = vpop.f32.mrf.mxu0
    %2422 = vmatprep.mubr.bf16.mxu0 0
    %2423 = vmatmul.mubr.bf16.gmra.mxu0 %v2305
    %v2424 = vpop.f32.mrf.mxu0
    %v2425 = vadd.f32 %v2309, %v2424
    %v2426 = vpop.f32.mrf.mxu0
    %v2427 = vpop.f32.mrf.mxu0
    %v2428 = vadd.f32 %v2309, %v2427
    %v2429 = vpop.f32.mrf.mxu0
    %2430 = vdwg.mxu0
    %v2431 = vadd.f32 %v1901, %v2393
    %v2432 = vadd.f32 %v1902, %v2396
    %v2433 = vadd.f32 %v1903, %v2401
    %v2434 = vadd.f32 %v1904, %v2404
    %v2435 = vadd.f32 %v1905, %v2409
    %v2436 = vadd.f32 %v1906, %v2412
    %v2437 = vadd.f32 %v1907, %v2417
    %v2438 = vadd.f32 %v1908, %v2420
    %v2439 = vadd.f32 %v1909, %v2425
    %v2440 = vadd.f32 %v1910, %v2428
    %s2441 = scalar_lea.vmem [#allocation16], 80
    %2442 = vst [vmem:[%s2441] sm:$0xff] %v2431
    %2443 = vst [vmem:[%s2441 + $0x8] sm:$0xff] %v2432
    %2444 = vst [vmem:[%s2441 + $0x10] sm:$0xff] %v2433
    %2445 = vst [vmem:[%s2441 + $0x18] sm:$0xff] %v2434
    %2446 = vst [vmem:[%s2441 + $0x20] sm:$0xff] %v2435
    %2447 = vst [vmem:[%s2441 + $0x28] sm:$0xff] %v2436
    %2448 = vst [vmem:[%s2441 + $0x30] sm:$0xff] %v2437
    %2449 = vst [vmem:[%s2441 + $0x38] sm:$0xff] %v2438
    %2450 = vst [vmem:[%s2441 + $0x40] sm:$0xff] %v2439
    %2451 = vst [vmem:[%s2441 + $0x48] sm:$0xff] %v2440
    %s2452 = scalar_lea.vmem [#allocation14], 32
    %v2453 = vld [vmem:[%s2452] sm:$0xff]
    %v2454 = vld [vmem:[%s2452 + $0x8] sm:$0xff]
    %v2455 = vld [vmem:[%s2452 + $0x10] sm:$0xff]
    %2456 = vadd.xlane.f32.xlu0 %v2431
    %v2457 = vpop.xlane.xlu0 %2456
    %2458 = vadd.xlane.f32.xlu0 %v2432
    %v2459 = vpop.xlane.xlu0 %2458
    %2460 = vadd.xlane.f32.xlu0 %v2433
    %v2461 = vpop.xlane.xlu0 %2460
    %2462 = vadd.xlane.f32.xlu0 %v2434
    %v2463 = vpop.xlane.xlu0 %2462
    %2464 = vadd.xlane.f32.xlu0 %v2435
    %v2465 = vpop.xlane.xlu0 %2464
    %2466 = vadd.xlane.f32.xlu0 %v2436
    %v2467 = vpop.xlane.xlu0 %2466
    %2468 = vadd.xlane.f32.xlu0 %v2437
    %v2469 = vpop.xlane.xlu0 %2468
    %2470 = vadd.xlane.f32.xlu0 %v2438
    %v2471 = vpop.xlane.xlu0 %2470
    %2472 = vadd.xlane.f32.xlu0 %v2439
    %v2473 = vpop.xlane.xlu0 %2472
    %2474 = vadd.xlane.f32.xlu0 %v2440
    %v2475 = vpop.xlane.xlu0 %2474
    %v2476 = vmul.f32 %v2457, 0.03125
    %v2477 = vmul.f32 %v2459, 0.03125
    %v2478 = vmul.f32 %v2461, 0.03125
    %v2479 = vmul.f32 %v2463, 0.03125
    %v2480 = vmul.f32 %v2465, 0.03125
    %v2481 = vmul.f32 %v2467, 0.03125
    %v2482 = vmul.f32 %v2469, 0.03125
    %v2483 = vmul.f32 %v2471, 0.03125
    %v2484 = vmul.f32 %v2473, 0.03125
    %v2485 = vmul.f32 %v2475, 0.03125
    %v2486 = vsub.f32 %v2431, %v2476
    %v2487 = vsub.f32 %v2432, %v2477
    %v2488 = vsub.f32 %v2433, %v2478
    %v2489 = vsub.f32 %v2434, %v2479
    %v2490 = vsub.f32 %v2435, %v2480
    %v2491 = vsub.f32 %v2436, %v2481
    %v2492 = vsub.f32 %v2437, %v2482
    %v2493 = vsub.f32 %v2438, %v2483
    %v2494 = vsub.f32 %v2439, %v2484
    %v2495 = vsub.f32 %v2440, %v2485
    %v2496 = vsel %vm207, %v2486, 0.0
    %v2497 = vsel %vm207, %v2487, 0.0
    %v2498 = vsel %vm207, %v2488, 0.0
    %v2499 = vsel %vm207, %v2489, 0.0
    %v2500 = vsel %vm207, %v2490, 0.0
    %v2501 = vsel %vm207, %v2491, 0.0
    %v2502 = vsel %vm207, %v2492, 0.0
    %v2503 = vsel %vm207, %v2493, 0.0
    %v2504 = vsel %vm207, %v2494, 0.0
    %v2505 = vsel %vm207, %v2495, 0.0
    %v2506 = vmul.f32 %v2496, %v2496
    %v2507 = vmul.f32 %v2497, %v2497
    %v2508 = vmul.f32 %v2498, %v2498
    %v2509 = vmul.f32 %v2499, %v2499
    %v2510 = vmul.f32 %v2500, %v2500
    %v2511 = vmul.f32 %v2501, %v2501
    %v2512 = vmul.f32 %v2502, %v2502
    %v2513 = vmul.f32 %v2503, %v2503
    %v2514 = vmul.f32 %v2504, %v2504
    %v2515 = vmul.f32 %v2505, %v2505
    %2516 = vadd.xlane.f32.xlu0 %v2506
    %v2517 = vpop.xlane.xlu0 %2516
    %2518 = vadd.xlane.f32.xlu0 %v2507
    %v2519 = vpop.xlane.xlu0 %2518
    %2520 = vadd.xlane.f32.xlu0 %v2508
    %v2521 = vpop.xlane.xlu0 %2520
    %2522 = vadd.xlane.f32.xlu0 %v2509
    %v2523 = vpop.xlane.xlu0 %2522
    %2524 = vadd.xlane.f32.xlu0 %v2510
    %v2525 = vpop.xlane.xlu0 %2524
    %2526 = vadd.xlane.f32.xlu0 %v2511
    %v2527 = vpop.xlane.xlu0 %2526
    %2528 = vadd.xlane.f32.xlu0 %v2512
    %v2529 = vpop.xlane.xlu0 %2528
    %2530 = vadd.xlane.f32.xlu0 %v2513
    %v2531 = vpop.xlane.xlu0 %2530
    %2532 = vadd.xlane.f32.xlu0 %v2514
    %v2533 = vpop.xlane.xlu0 %2532
    %2534 = vadd.xlane.f32.xlu0 %v2515
    %v2535 = vpop.xlane.xlu0 %2534
    %v2536 = vmul.f32 %v2517, 0.03125
    %v2537 = vmul.f32 %v2519, 0.03125
    %v2538 = vmul.f32 %v2521, 0.03125
    %v2539 = vmul.f32 %v2523, 0.03125
    %v2540 = vmul.f32 %v2525, 0.03125
    %v2541 = vmul.f32 %v2527, 0.03125
    %v2542 = vmul.f32 %v2529, 0.03125
    %v2543 = vmul.f32 %v2531, 0.03125
    %v2544 = vmul.f32 %v2533, 0.03125
    %v2545 = vmul.f32 %v2535, 0.03125
    %v2546 = vadd.f32 %v2536, 1e-05
    %v2547 = vadd.f32 %v2537, 1e-05
    %v2548 = vadd.f32 %v2538, 1e-05
    %v2549 = vadd.f32 %v2539, 1e-05
    %v2550 = vadd.f32 %v2540, 1e-05
    %v2551 = vadd.f32 %v2541, 1e-05
    %v2552 = vadd.f32 %v2542, 1e-05
    %v2553 = vadd.f32 %v2543, 1e-05
    %v2554 = vadd.f32 %v2544, 1e-05
    %v2555 = vadd.f32 %v2545, 1e-05
    %v2556 = vrsqrt.pop %v2546
    %v2557 = vrsqrt.pop %v2547
    %v2558 = vrsqrt.pop %v2548
    %v2559 = vrsqrt.pop %v2549
    %v2560 = vrsqrt.pop %v2550
    %v2561 = vrsqrt.pop %v2551
    %v2562 = vrsqrt.pop %v2552
    %v2563 = vrsqrt.pop %v2553
    %v2564 = vrsqrt.pop %v2554
    %v2565 = vrsqrt.pop %v2555
    %v2566 = vmul.f32 %v2496, %v2556
    %v2567 = vmul.f32 %v2497, %v2557
    %v2568 = vmul.f32 %v2498, %v2558
    %v2569 = vmul.f32 %v2499, %v2559
    %v2570 = vmul.f32 %v2500, %v2560
    %v2571 = vmul.f32 %v2501, %v2561
    %v2572 = vmul.f32 %v2502, %v2562
    %v2573 = vmul.f32 %v2503, %v2563
    %v2574 = vmul.f32 %v2504, %v2564
    %v2575 = vmul.f32 %v2505, %v2565
    %v2576 = vlaneseq
    %v2577 = vshrl.u32 %v2576, 7
    %v2578 = vsub.s32 6, %v2577
    %v2579 = vrot.slane %v2453, %v2578
    %v2580 = vmul.f32 %v2566, %v2579
    %v2581 = vmul.f32 %v2567, %v2579
    %v2582 = vmul.f32 %v2568, %v2579
    %v2583 = vmul.f32 %v2569, %v2579
    %v2584 = vmul.f32 %v2570, %v2579
    %v2585 = vmul.f32 %v2571, %v2579
    %v2586 = vmul.f32 %v2572, %v2579
    %v2587 = vmul.f32 %v2573, %v2579
    %v2588 = vmul.f32 %v2574, %v2579
    %v2589 = vmul.f32 %v2575, %v2579
    %v2590 = vlaneseq
    %v2591 = vshrl.u32 %v2590, 7
    %v2592 = vsub.s32 7, %v2591
    %v2593 = vrot.slane %v2453, %v2592
    %v2594 = vadd.f32 %v2580, %v2593
    %v2595 = vadd.f32 %v2581, %v2593
    %v2596 = vadd.f32 %v2582, %v2593
    %v2597 = vadd.f32 %v2583, %v2593
    %v2598 = vadd.f32 %v2584, %v2593
    %v2599 = vadd.f32 %v2585, %v2593
    %v2600 = vadd.f32 %v2586, %v2593
    %v2601 = vadd.f32 %v2587, %v2593
    %v2602 = vadd.f32 %v2588, %v2593
    %v2603 = vadd.f32 %v2589, %v2593
    %s2604 = scalar_lea.vmem [#allocation8], 384
    %v2605 = vld [vmem:[%s2604] sm:$0xff]
    %v2606 = vld [vmem:[%s2604 + $0x8] sm:$0xff]
    %v2607 = vld [vmem:[%s2604 + $0x10] sm:$0xff]
    %v2608 = vld [vmem:[%s2604 + $0x18] sm:$0xff]
    %v2609 = vld [vmem:[%s2604 + $0x20] sm:$0xff]
    %v2610 = vld [vmem:[%s2604 + $0x28] sm:$0xff]
    %v2611 = vld [vmem:[%s2604 + $0x30] sm:$0xff]
    %v2612 = vld [vmem:[%s2604 + $0x38] sm:$0xff]
    %v2613 = vld [vmem:[%s2604 + $0x40] sm:$0xff]
    %v2614 = vld [vmem:[%s2604 + $0x48] sm:$0xff]
    %v2615 = vld [vmem:[%s2604 + $0x50] sm:$0xff]
    %v2616 = vld [vmem:[%s2604 + $0x58] sm:$0xff]
    %v2617 = vld [vmem:[%s2604 + $0x60] sm:$0xff]
    %v2618 = vld [vmem:[%s2604 + $0x68] sm:$0xff]
    %v2619 = vld [vmem:[%s2604 + $0x70] sm:$0xff]
    %v2620 = vld [vmem:[%s2604 + $0x78] sm:$0xff]
    %v2621 = vld [vmem:[%s2604 + $0x80] sm:$0xff]
    %v2622 = vld [vmem:[%s2604 + $0x88] sm:$0xff]
    %v2623 = vld [vmem:[%s2604 + $0x90] sm:$0xff]
    %v2624 = vld [vmem:[%s2604 + $0x98] sm:$0xff]
    %v2625 = vld [vmem:[%s2604 + $0xa0] sm:$0xff]
    %v2626 = vld [vmem:[%s2604 + $0xa8] sm:$0xff]
    %v2627 = vld [vmem:[%s2604 + $0xb0] sm:$0xff]
    %v2628 = vld [vmem:[%s2604 + $0xb8] sm:$0xff]
    %v2629 = vld [vmem:[%s2604 + $0xc0] sm:$0xff]
    %v2630 = vld [vmem:[%s2604 + $0xc8] sm:$0xff]
    %v2631 = vld [vmem:[%s2604 + $0xd0] sm:$0xff]
    %v2632 = vld [vmem:[%s2604 + $0xd8] sm:$0xff]
    %v2633 = vld [vmem:[%s2604 + $0xe0] sm:$0xff]
    %v2634 = vld [vmem:[%s2604 + $0xe8] sm:$0xff]
    %v2635 = vld [vmem:[%s2604 + $0xf0] sm:$0xff]
    %v2636 = vld [vmem:[%s2604 + $0xf8] sm:$0xff]
    %v2637 = vld [vmem:[%s2604 + $0x100] sm:$0xff]
    %v2638 = vld [vmem:[%s2604 + $0x108] sm:$0xff]
    %v2639 = vld [vmem:[%s2604 + $0x110] sm:$0xff]
    %v2640 = vld [vmem:[%s2604 + $0x118] sm:$0xff]
    %v2641 = vld [vmem:[%s2604 + $0x120] sm:$0xff]
    %v2642 = vld [vmem:[%s2604 + $0x128] sm:$0xff]
    %v2643 = vld [vmem:[%s2604 + $0x130] sm:$0xff]
    %v2644 = vld [vmem:[%s2604 + $0x138] sm:$0xff]
    %v2645 = vld [vmem:[%s2604 + $0x140] sm:$0xff]
    %v2646 = vld [vmem:[%s2604 + $0x148] sm:$0xff]
    %v2647 = vld [vmem:[%s2604 + $0x150] sm:$0xff]
    %v2648 = vld [vmem:[%s2604 + $0x158] sm:$0xff]
    %v2649 = vld [vmem:[%s2604 + $0x160] sm:$0xff]
    %v2650 = vld [vmem:[%s2604 + $0x168] sm:$0xff]
    %v2651 = vld [vmem:[%s2604 + $0x170] sm:$0xff]
    %v2652 = vld [vmem:[%s2604 + $0x178] sm:$0xff]
    %v2653 = vpack.c.bf16 %v2595, %v2594
    %v2654 = vpack.c.bf16 %v2597, %v2596
    %v2655 = vpack.c.bf16 %v2599, %v2598
    %v2656 = vpack.c.bf16 %v2601, %v2600
    %v2657 = vpack.c.bf16 %v2603, %v2602
    %v2706 = vunpack.c.l.b16 %v2605
    %v2707 = vunpack.c.h.b16 %v2605
    %v2708 = vunpack.c.l.b16 %v2606
    %v2709 = vunpack.c.h.b16 %v2606
    %v2710 = vunpack.c.l.b16 %v2607
    %v2711 = vunpack.c.h.b16 %v2607
    %v2712 = vunpack.c.l.b16 %v2608
    %v2713 = vunpack.c.h.b16 %v2608
    %v2714 = vunpack.c.l.b16 %v2609
    %v2715 = vunpack.c.h.b16 %v2609
    %v2716 = vunpack.c.l.b16 %v2610
    %v2717 = vunpack.c.h.b16 %v2610
    %v2718 = vunpack.c.l.b16 %v2611
    %v2719 = vunpack.c.h.b16 %v2611
    %v2720 = vunpack.c.l.b16 %v2612
    %v2721 = vunpack.c.h.b16 %v2612
    %v2722 = vunpack.c.l.b16 %v2613
    %v2723 = vunpack.c.h.b16 %v2613
    %v2724 = vunpack.c.l.b16 %v2614
    %v2725 = vunpack.c.h.b16 %v2614
    %v2726 = vunpack.c.l.b16 %v2615
    %v2727 = vunpack.c.h.b16 %v2615
    %v2728 = vunpack.c.l.b16 %v2616
    %v2729 = vunpack.c.h.b16 %v2616
    %v2730 = vunpack.c.l.b16 %v2617
    %v2731 = vunpack.c.h.b16 %v2617
    %v2732 = vunpack.c.l.b16 %v2618
    %v2733 = vunpack.c.h.b16 %v2618
    %v2734 = vunpack.c.l.b16 %v2619
    %v2735 = vunpack.c.h.b16 %v2619
    %v2736 = vunpack.c.l.b16 %v2620
    %v2737 = vunpack.c.h.b16 %v2620
    %v2738 = vunpack.c.l.b16 %v2621
    %v2739 = vunpack.c.h.b16 %v2621
    %v2740 = vunpack.c.l.b16 %v2622
    %v2741 = vunpack.c.h.b16 %v2622
    %v2742 = vunpack.c.l.b16 %v2623
    %v2743 = vunpack.c.h.b16 %v2623
    %v2744 = vunpack.c.l.b16 %v2624
    %v2745 = vunpack.c.h.b16 %v2624
    %v2746 = vunpack.c.l.b16 %v2625
    %v2747 = vunpack.c.h.b16 %v2625
    %v2748 = vunpack.c.l.b16 %v2626
    %v2749 = vunpack.c.h.b16 %v2626
    %v2750 = vunpack.c.l.b16 %v2627
    %v2751 = vunpack.c.h.b16 %v2627
    %v2752 = vunpack.c.l.b16 %v2628
    %v2753 = vunpack.c.h.b16 %v2628
    %v2754 = vunpack.c.l.b16 %v2629
    %v2755 = vunpack.c.h.b16 %v2629
    %v2756 = vunpack.c.l.b16 %v2630
    %v2757 = vunpack.c.h.b16 %v2630
    %v2758 = vunpack.c.l.b16 %v2631
    %v2759 = vunpack.c.h.b16 %v2631
    %v2760 = vunpack.c.l.b16 %v2632
    %v2761 = vunpack.c.h.b16 %v2632
    %v2762 = vunpack.c.l.b16 %v2633
    %v2763 = vunpack.c.h.b16 %v2633
    %v2764 = vunpack.c.l.b16 %v2634
    %v2765 = vunpack.c.h.b16 %v2634
    %v2766 = vunpack.c.l.b16 %v2635
    %v2767 = vunpack.c.h.b16 %v2635
    %v2768 = vunpack.c.l.b16 %v2636
    %v2769 = vunpack.c.h.b16 %v2636
    %v2770 = vunpack.c.l.b16 %v2637
    %v2771 = vunpack.c.h.b16 %v2637
    %v2772 = vunpack.c.l.b16 %v2638
    %v2773 = vunpack.c.h.b16 %v2638
    %v2774 = vunpack.c.l.b16 %v2639
    %v2775 = vunpack.c.h.b16 %v2639
    %v2776 = vunpack.c.l.b16 %v2640
    %v2777 = vunpack.c.h.b16 %v2640
    %v2778 = vunpack.c.l.b16 %v2641
    %v2779 = vunpack.c.h.b16 %v2641
    %v2780 = vunpack.c.l.b16 %v2642
    %v2781 = vunpack.c.h.b16 %v2642
    %v2782 = vunpack.c.l.b16 %v2643
    %v2783 = vunpack.c.h.b16 %v2643
    %v2784 = vunpack.c.l.b16 %v2644
    %v2785 = vunpack.c.h.b16 %v2644
    %v2786 = vunpack.c.l.b16 %v2645
    %v2787 = vunpack.c.h.b16 %v2645
    %v2788 = vunpack.c.l.b16 %v2646
    %v2789 = vunpack.c.h.b16 %v2646
    %v2790 = vunpack.c.l.b16 %v2647
    %v2791 = vunpack.c.h.b16 %v2647
    %v2792 = vunpack.c.l.b16 %v2648
    %v2793 = vunpack.c.h.b16 %v2648
    %v2794 = vunpack.c.l.b16 %v2649
    %v2795 = vunpack.c.h.b16 %v2649
    %v2796 = vunpack.c.l.b16 %v2650
    %v2797 = vunpack.c.h.b16 %v2650
    %v2798 = vunpack.c.l.b16 %v2651
    %v2799 = vunpack.c.h.b16 %v2651
    %v2800 = vunpack.c.l.b16 %v2652
    %v2801 = vunpack.c.h.b16 %v2652
    %v2802 = vpack.c.b16 %v2712, %v2706
    %v2803 = vpack.c.b16 %v2713, %v2707
    %v2804 = vpack.c.b16 %v2714, %v2708
    %v2805 = vpack.c.b16 %v2715, %v2709
    %v2806 = vpack.c.b16 %v2716, %v2710
    %v2807 = vpack.c.b16 %v2717, %v2711
    %v2808 = vpack.c.b16 %v2724, %v2718
    %v2809 = vpack.c.b16 %v2725, %v2719
    %v2810 = vpack.c.b16 %v2726, %v2720
    %v2811 = vpack.c.b16 %v2727, %v2721
    %v2812 = vpack.c.b16 %v2728, %v2722
    %v2813 = vpack.c.b16 %v2729, %v2723
    %v2814 = vpack.c.b16 %v2736, %v2730
    %v2815 = vpack.c.b16 %v2737, %v2731
    %v2816 = vpack.c.b16 %v2738, %v2732
    %v2817 = vpack.c.b16 %v2739, %v2733
    %v2818 = vpack.c.b16 %v2740, %v2734
    %v2819 = vpack.c.b16 %v2741, %v2735
    %v2820 = vpack.c.b16 %v2748, %v2742
    %v2821 = vpack.c.b16 %v2749, %v2743
    %v2822 = vpack.c.b16 %v2750, %v2744
    %v2823 = vpack.c.b16 %v2751, %v2745
    %v2824 = vpack.c.b16 %v2752, %v2746
    %v2825 = vpack.c.b16 %v2753, %v2747
    %v2826 = vpack.c.b16 %v2760, %v2754
    %v2827 = vpack.c.b16 %v2761, %v2755
    %v2828 = vpack.c.b16 %v2762, %v2756
    %v2829 = vpack.c.b16 %v2763, %v2757
    %v2830 = vpack.c.b16 %v2764, %v2758
    %v2831 = vpack.c.b16 %v2765, %v2759
    %v2832 = vpack.c.b16 %v2772, %v2766
    %v2833 = vpack.c.b16 %v2773, %v2767
    %v2834 = vpack.c.b16 %v2774, %v2768
    %v2835 = vpack.c.b16 %v2775, %v2769
    %v2836 = vpack.c.b16 %v2776, %v2770
    %v2837 = vpack.c.b16 %v2777, %v2771
    %v2838 = vpack.c.b16 %v2784, %v2778
    %v2839 = vpack.c.b16 %v2785, %v2779
    %v2840 = vpack.c.b16 %v2786, %v2780
    %v2841 = vpack.c.b16 %v2787, %v2781
    %v2842 = vpack.c.b16 %v2788, %v2782
    %v2843 = vpack.c.b16 %v2789, %v2783
    %v2844 = vpack.c.b16 %v2796, %v2790
    %v2845 = vpack.c.b16 %v2797, %v2791
    %v2846 = vpack.c.b16 %v2798, %v2792
    %v2847 = vpack.c.b16 %v2799, %v2793
    %v2848 = vpack.c.b16 %v2800, %v2794
    %v2849 = vpack.c.b16 %v2801, %v2795
    %2898 = vmatprep.subr.bf16.mxu0 %v2845
    %2899 = vmatpush1.bf16.msra.mxu0 %v2844
    %2900 = vmatprep.subr.bf16.mxu0 %v2839
    %2901 = vmatpush1.bf16.msra.mxu0 %v2838
    %2902 = vmatprep.subr.bf16.mxu0 %v2833
    %2903 = vmatpush1.bf16.msra.mxu0 %v2832
    %2904 = vmatprep.subr.bf16.mxu0 %v2827
    %2905 = vmatpush1.bf16.msra.mxu0 %v2826
    %2906 = vmatprep.subr.bf16.mxu0 %v2821
    %2907 = vmatpush1.bf16.msra.mxu0 %v2820
    %2908 = vmatprep.subr.bf16.mxu0 %v2815
    %2909 = vmatpush1.bf16.msra.mxu0 %v2814
    %2910 = vmatprep.subr.bf16.mxu0 %v2809
    %2911 = vmatpush1.bf16.msra.mxu0 %v2808
    %2912 = vmatprep.subr.bf16.mxu0 %v2803
    %2913 = vmatpush1.bf16.msra.mxu0 %v2802
    %2914 = vmatprep.subr.bf16.mxu0 0
    %2915 = vmatpush2.bf16.msra.mxu0 0
    %2916 = vmatprep.subr.bf16.mxu0 0
    %2917 = vmatpush2.bf16.msra.mxu0 0
    %2918 = vmatprep.subr.bf16.mxu0 0
    %2919 = vmatpush2.bf16.msra.mxu0 0
    %2920 = vmatprep.subr.bf16.mxu0 0
    %2921 = vmatpush2.bf16.msra.mxu0 0
    %2922 = vmatprep.subr.bf16.mxu0 0
    %2923 = vmatpush2.bf16.msra.mxu0 0
    %2924 = vmatprep.subr.bf16.mxu0 0
    %2925 = vmatpush2.bf16.msra.mxu0 0
    %2926 = vmatprep.subr.bf16.mxu0 0
    %2927 = vmatpush2.bf16.msra.mxu0 0
    %2928 = vmatprep.subr.bf16.mxu0 0
    %2929 = vmatpush2.bf16.msra.mxu0 0
    %2930 = vmatprep.mubr.bf16.mxu0 0
    %2931 = vmatmul.mubr.bf16.gmra.mxu0 %v2653
    %v2932 = vpop.f32.mrf.mxu0
    %v2933 = vadd.f32 0.0, %v2932
    %v2934 = vpop.f32.mrf.mxu0
    %v2935 = vadd.f32 0.0, %v2934
    %v2936 = vpop.f32.mrf.mxu0
    %v2937 = vadd.f32 0.0, %v2936
    %v2938 = vpop.f32.mrf.mxu0
    %v2939 = vadd.f32 0.0, %v2938
    %2940 = vmatprep.mubr.bf16.mxu0 0
    %2941 = vmatmul.mubr.bf16.gmra.mxu0 %v2654
    %v2942 = vpop.f32.mrf.mxu0
    %v2943 = vadd.f32 0.0, %v2942
    %v2944 = vpop.f32.mrf.mxu0
    %v2945 = vadd.f32 0.0, %v2944
    %v2946 = vpop.f32.mrf.mxu0
    %v2947 = vadd.f32 0.0, %v2946
    %v2948 = vpop.f32.mrf.mxu0
    %v2949 = vadd.f32 0.0, %v2948
    %2950 = vmatprep.mubr.bf16.mxu0 0
    %2951 = vmatmul.mubr.bf16.gmra.mxu0 %v2655
    %v2952 = vpop.f32.mrf.mxu0
    %v2953 = vadd.f32 0.0, %v2952
    %v2954 = vpop.f32.mrf.mxu0
    %v2955 = vadd.f32 0.0, %v2954
    %v2956 = vpop.f32.mrf.mxu0
    %v2957 = vadd.f32 0.0, %v2956
    %v2958 = vpop.f32.mrf.mxu0
    %v2959 = vadd.f32 0.0, %v2958
    %2960 = vmatprep.mubr.bf16.mxu0 0
    %2961 = vmatmul.mubr.bf16.gmra.mxu0 %v2656
    %v2962 = vpop.f32.mrf.mxu0
    %v2963 = vadd.f32 0.0, %v2962
    %v2964 = vpop.f32.mrf.mxu0
    %v2965 = vadd.f32 0.0, %v2964
    %v2966 = vpop.f32.mrf.mxu0
    %v2967 = vadd.f32 0.0, %v2966
    %v2968 = vpop.f32.mrf.mxu0
    %v2969 = vadd.f32 0.0, %v2968
    %2970 = vmatprep.mubr.bf16.mxu0 0
    %2971 = vmatmul.mubr.bf16.gmra.mxu0 %v2657
    %v2972 = vpop.f32.mrf.mxu0
    %v2973 = vadd.f32 0.0, %v2972
    %v2974 = vpop.f32.mrf.mxu0
    %v2975 = vadd.f32 0.0, %v2974
    %v2976 = vpop.f32.mrf.mxu0
    %v2977 = vadd.f32 0.0, %v2976
    %v2978 = vpop.f32.mrf.mxu0
    %v2979 = vadd.f32 0.0, %v2978
    %2980 = vdwg.mxu0
    %2981 = vmatprep.subr.bf16.mxu0 %v2847
    %2982 = vmatpush1.bf16.msra.mxu0 %v2846
    %2983 = vmatprep.subr.bf16.mxu0 %v2841
    %2984 = vmatpush1.bf16.msra.mxu0 %v2840
    %2985 = vmatprep.subr.bf16.mxu0 %v2835
    %2986 = vmatpush1.bf16.msra.mxu0 %v2834
    %2987 = vmatprep.subr.bf16.mxu0 %v2829
    %2988 = vmatpush1.bf16.msra.mxu0 %v2828
    %2989 = vmatprep.subr.bf16.mxu0 %v2823
    %2990 = vmatpush1.bf16.msra.mxu0 %v2822
    %2991 = vmatprep.subr.bf16.mxu0 %v2817
    %2992 = vmatpush1.bf16.msra.mxu0 %v2816
    %2993 = vmatprep.subr.bf16.mxu0 %v2811
    %2994 = vmatpush1.bf16.msra.mxu0 %v2810
    %2995 = vmatprep.subr.bf16.mxu0 %v2805
    %2996 = vmatpush1.bf16.msra.mxu0 %v2804
    %2997 = vmatprep.subr.bf16.mxu0 0
    %2998 = vmatpush2.bf16.msra.mxu0 0
    %2999 = vmatprep.subr.bf16.mxu0 0
    %3000 = vmatpush2.bf16.msra.mxu0 0
    %3001 = vmatprep.subr.bf16.mxu0 0
    %3002 = vmatpush2.bf16.msra.mxu0 0
    %3003 = vmatprep.subr.bf16.mxu0 0
    %3004 = vmatpush2.bf16.msra.mxu0 0
    %3005 = vmatprep.subr.bf16.mxu0 0
    %3006 = vmatpush2.bf16.msra.mxu0 0
    %3007 = vmatprep.subr.bf16.mxu0 0
    %3008 = vmatpush2.bf16.msra.mxu0 0
    %3009 = vmatprep.subr.bf16.mxu0 0
    %3010 = vmatpush2.bf16.msra.mxu0 0
    %3011 = vmatprep.subr.bf16.mxu0 0
    %3012 = vmatpush2.bf16.msra.mxu0 0
    %3013 = vmatprep.mubr.bf16.mxu0 0
    %3014 = vmatmul.mubr.bf16.gmra.mxu0 %v2653
    %v3015 = vpop.f32.mrf.mxu0
    %v3016 = vadd.f32 0.0, %v3015
    %v3017 = vpop.f32.mrf.mxu0
    %v3018 = vadd.f32 0.0, %v3017
    %v3019 = vpop.f32.mrf.mxu0
    %v3020 = vadd.f32 0.0, %v3019
    %v3021 = vpop.f32.mrf.mxu0
    %v3022 = vadd.f32 0.0, %v3021
    %3023 = vmatprep.mubr.bf16.mxu0 0
    %3024 = vmatmul.mubr.bf16.gmra.mxu0 %v2654
    %v3025 = vpop.f32.mrf.mxu0
    %v3026 = vadd.f32 0.0, %v3025
    %v3027 = vpop.f32.mrf.mxu0
    %v3028 = vadd.f32 0.0, %v3027
    %v3029 = vpop.f32.mrf.mxu0
    %v3030 = vadd.f32 0.0, %v3029
    %v3031 = vpop.f32.mrf.mxu0
    %v3032 = vadd.f32 0.0, %v3031
    %3033 = vmatprep.mubr.bf16.mxu0 0
    %3034 = vmatmul.mubr.bf16.gmra.mxu0 %v2655
    %v3035 = vpop.f32.mrf.mxu0
    %v3036 = vadd.f32 0.0, %v3035
    %v3037 = vpop.f32.mrf.mxu0
    %v3038 = vadd.f32 0.0, %v3037
    %v3039 = vpop.f32.mrf.mxu0
    %v3040 = vadd.f32 0.0, %v3039
    %v3041 = vpop.f32.mrf.mxu0
    %v3042 = vadd.f32 0.0, %v3041
    %3043 = vmatprep.mubr.bf16.mxu0 0
    %3044 = vmatmul.mubr.bf16.gmra.mxu0 %v2656
    %v3045 = vpop.f32.mrf.mxu0
    %v3046 = vadd.f32 0.0, %v3045
    %v3047 = vpop.f32.mrf.mxu0
    %v3048 = vadd.f32 0.0, %v3047
    %v3049 = vpop.f32.mrf.mxu0
    %v3050 = vadd.f32 0.0, %v3049
    %v3051 = vpop.f32.mrf.mxu0
    %v3052 = vadd.f32 0.0, %v3051
    %3053 = vmatprep.mubr.bf16.mxu0 0
    %3054 = vmatmul.mubr.bf16.gmra.mxu0 %v2657
    %v3055 = vpop.f32.mrf.mxu0
    %v3056 = vadd.f32 0.0, %v3055
    %v3057 = vpop.f32.mrf.mxu0
    %v3058 = vadd.f32 0.0, %v3057
    %v3059 = vpop.f32.mrf.mxu0
    %v3060 = vadd.f32 0.0, %v3059
    %v3061 = vpop.f32.mrf.mxu0
    %v3062 = vadd.f32 0.0, %v3061
    %3063 = vdwg.mxu0
    %3064 = vmatprep.subr.bf16.mxu0 %v2849
    %3065 = vmatpush1.bf16.msra.mxu0 %v2848
    %3066 = vmatprep.subr.bf16.mxu0 %v2843
    %3067 = vmatpush1.bf16.msra.mxu0 %v2842
    %3068 = vmatprep.subr.bf16.mxu0 %v2837
    %3069 = vmatpush1.bf16.msra.mxu0 %v2836
    %3070 = vmatprep.subr.bf16.mxu0 %v2831
    %3071 = vmatpush1.bf16.msra.mxu0 %v2830
    %3072 = vmatprep.subr.bf16.mxu0 %v2825
    %3073 = vmatpush1.bf16.msra.mxu0 %v2824
    %3074 = vmatprep.subr.bf16.mxu0 %v2819
    %3075 = vmatpush1.bf16.msra.mxu0 %v2818
    %3076 = vmatprep.subr.bf16.mxu0 %v2813
    %3077 = vmatpush1.bf16.msra.mxu0 %v2812
    %3078 = vmatprep.subr.bf16.mxu0 %v2807
    %3079 = vmatpush1.bf16.msra.mxu0 %v2806
    %3080 = vmatprep.subr.bf16.mxu0 0
    %3081 = vmatpush2.bf16.msra.mxu0 0
    %3082 = vmatprep.subr.bf16.mxu0 0
    %3083 = vmatpush2.bf16.msra.mxu0 0
    %3084 = vmatprep.subr.bf16.mxu0 0
    %3085 = vmatpush2.bf16.msra.mxu0 0
    %3086 = vmatprep.subr.bf16.mxu0 0
    %3087 = vmatpush2.bf16.msra.mxu0 0
    %3088 = vmatprep.subr.bf16.mxu0 0
    %3089 = vmatpush2.bf16.msra.mxu0 0
    %3090 = vmatprep.subr.bf16.mxu0 0
    %3091 = vmatpush2.bf16.msra.mxu0 0
    %3092 = vmatprep.subr.bf16.mxu0 0
    %3093 = vmatpush2.bf16.msra.mxu0 0
    %3094 = vmatprep.subr.bf16.mxu0 0
    %3095 = vmatpush2.bf16.msra.mxu0 0
    %3096 = vmatprep.mubr.bf16.mxu0 0
    %3097 = vmatmul.mubr.bf16.gmra.mxu0 %v2653
    %v3098 = vpop.f32.mrf.mxu0
    %v3099 = vadd.f32 0.0, %v3098
    %v3100 = vpop.f32.mrf.mxu0
    %v3101 = vadd.f32 0.0, %v3100
    %v3102 = vpop.f32.mrf.mxu0
    %v3103 = vadd.f32 0.0, %v3102
    %v3104 = vpop.f32.mrf.mxu0
    %v3105 = vadd.f32 0.0, %v3104
    %3106 = vmatprep.mubr.bf16.mxu0 0
    %3107 = vmatmul.mubr.bf16.gmra.mxu0 %v2654
    %v3108 = vpop.f32.mrf.mxu0
    %v3109 = vadd.f32 0.0, %v3108
    %v3110 = vpop.f32.mrf.mxu0
    %v3111 = vadd.f32 0.0, %v3110
    %v3112 = vpop.f32.mrf.mxu0
    %v3113 = vadd.f32 0.0, %v3112
    %v3114 = vpop.f32.mrf.mxu0
    %v3115 = vadd.f32 0.0, %v3114
    %3116 = vmatprep.mubr.bf16.mxu0 0
    %3117 = vmatmul.mubr.bf16.gmra.mxu0 %v2655
    %v3118 = vpop.f32.mrf.mxu0
    %v3119 = vadd.f32 0.0, %v3118
    %v3120 = vpop.f32.mrf.mxu0
    %v3121 = vadd.f32 0.0, %v3120
    %v3122 = vpop.f32.mrf.mxu0
    %v3123 = vadd.f32 0.0, %v3122
    %v3124 = vpop.f32.mrf.mxu0
    %v3125 = vadd.f32 0.0, %v3124
    %3126 = vmatprep.mubr.bf16.mxu0 0
    %3127 = vmatmul.mubr.bf16.gmra.mxu0 %v2656
    %v3128 = vpop.f32.mrf.mxu0
    %v3129 = vadd.f32 0.0, %v3128
    %v3130 = vpop.f32.mrf.mxu0
    %v3131 = vadd.f32 0.0, %v3130
    %v3132 = vpop.f32.mrf.mxu0
    %v3133 = vadd.f32 0.0, %v3132
    %v3134 = vpop.f32.mrf.mxu0
    %v3135 = vadd.f32 0.0, %v3134
    %3136 = vmatprep.mubr.bf16.mxu0 0
    %3137 = vmatmul.mubr.bf16.gmra.mxu0 %v2657
    %v3138 = vpop.f32.mrf.mxu0
    %v3139 = vadd.f32 0.0, %v3138
    %v3140 = vpop.f32.mrf.mxu0
    %v3141 = vadd.f32 0.0, %v3140
    %v3142 = vpop.f32.mrf.mxu0
    %v3143 = vadd.f32 0.0, %v3142
    %v3144 = vpop.f32.mrf.mxu0
    %v3145 = vadd.f32 0.0, %v3144
    %3146 = vdwg.mxu0
    %v3147 = vlaneseq
    %v3148 = vshrl.u32 %v3147, 7
    %v3149 = vsub.s32 0, %v3148
    %v3150 = vrot.slane %v2453, %v3149
    %v3151 = vlaneseq
    %v3152 = vshrl.u32 %v3151, 7
    %v3153 = vsub.s32 0, %v3152
    %v3154 = vrot.slane %v2454, %v3153
    %v3155 = vadd.f32 %v2933, %v3150
    %v3156 = vadd.f32 %v2935, %v3154
    %v3157 = vadd.f32 %v2937, %v3150
    %v3158 = vadd.f32 %v2939, %v3154
    %v3159 = vadd.f32 %v2943, %v3150
    %v3160 = vadd.f32 %v2945, %v3154
    %v3161 = vadd.f32 %v2947, %v3150
    %v3162 = vadd.f32 %v2949, %v3154
    %v3163 = vadd.f32 %v2953, %v3150
    %v3164 = vadd.f32 %v2955, %v3154
    %v3165 = vadd.f32 %v2957, %v3150
    %v3166 = vadd.f32 %v2959, %v3154
    %v3167 = vadd.f32 %v2963, %v3150
    %v3168 = vadd.f32 %v2965, %v3154
    %v3169 = vadd.f32 %v2967, %v3150
    %v3170 = vadd.f32 %v2969, %v3154
    %v3171 = vadd.f32 %v2973, %v3150
    %v3172 = vadd.f32 %v2975, %v3154
    %v3173 = vadd.f32 %v2977, %v3150
    %v3174 = vadd.f32 %v2979, %v3154
    %v3175 = vpack.c.bf16 %v3157, %v3155
    %v3176 = vpack.c.bf16 %v3158, %v3156
    %v3177 = vpack.c.bf16 %v3161, %v3159
    %v3178 = vpack.c.bf16 %v3162, %v3160
    %v3179 = vpack.c.bf16 %v3165, %v3163
    %v3180 = vpack.c.bf16 %v3166, %v3164
    %v3181 = vpack.c.bf16 %v3169, %v3167
    %v3182 = vpack.c.bf16 %v3170, %v3168
    %v3183 = vpack.c.bf16 %v3173, %v3171
    %v3184 = vpack.c.bf16 %v3174, %v3172
    %v3185 = vlaneseq
    %v3186 = vshrl.u32 %v3185, 7
    %v3187 = vsub.s32 1, %v3186
    %v3188 = vrot.slane %v2453, %v3187
    %v3189 = vlaneseq
    %v3190 = vshrl.u32 %v3189, 7
    %v3191 = vsub.s32 1, %v3190
    %v3192 = vrot.slane %v2454, %v3191
    %v3193 = vadd.f32 %v3016, %v3188
    %v3194 = vadd.f32 %v3018, %v3192
    %v3195 = vadd.f32 %v3020, %v3188
    %v3196 = vadd.f32 %v3022, %v3192
    %v3197 = vadd.f32 %v3026, %v3188
    %v3198 = vadd.f32 %v3028, %v3192
    %v3199 = vadd.f32 %v3030, %v3188
    %v3200 = vadd.f32 %v3032, %v3192
    %v3201 = vadd.f32 %v3036, %v3188
    %v3202 = vadd.f32 %v3038, %v3192
    %v3203 = vadd.f32 %v3040, %v3188
    %v3204 = vadd.f32 %v3042, %v3192
    %v3205 = vadd.f32 %v3046, %v3188
    %v3206 = vadd.f32 %v3048, %v3192
    %v3207 = vadd.f32 %v3050, %v3188
    %v3208 = vadd.f32 %v3052, %v3192
    %v3209 = vadd.f32 %v3056, %v3188
    %v3210 = vadd.f32 %v3058, %v3192
    %v3211 = vadd.f32 %v3060, %v3188
    %v3212 = vadd.f32 %v3062, %v3192
    %v3213 = vpack.c.bf16 %v3195, %v3193
    %v3214 = vpack.c.bf16 %v3196, %v3194
    %v3215 = vpack.c.bf16 %v3199, %v3197
    %v3216 = vpack.c.bf16 %v3200, %v3198
    %v3217 = vpack.c.bf16 %v3203, %v3201
    %v3218 = vpack.c.bf16 %v3204, %v3202
    %v3219 = vpack.c.bf16 %v3207, %v3205
    %v3220 = vpack.c.bf16 %v3208, %v3206
    %v3221 = vpack.c.bf16 %v3211, %v3209
    %v3222 = vpack.c.bf16 %v3212, %v3210
    %v3223 = vlaneseq
    %v3224 = vshrl.u32 %v3223, 7
    %v3225 = vsub.s32 2, %v3224
    %v3226 = vrot.slane %v2453, %v3225
    %v3227 = vlaneseq
    %v3228 = vshrl.u32 %v3227, 7
    %v3229 = vsub.s32 2, %v3228
    %v3230 = vrot.slane %v2454, %v3229
    %v3231 = vadd.f32 %v3099, %v3226
    %v3232 = vadd.f32 %v3101, %v3230
    %v3233 = vadd.f32 %v3103, %v3226
    %v3234 = vadd.f32 %v3105, %v3230
    %v3235 = vadd.f32 %v3109, %v3226
    %v3236 = vadd.f32 %v3111, %v3230
    %v3237 = vadd.f32 %v3113, %v3226
    %v3238 = vadd.f32 %v3115, %v3230
    %v3239 = vadd.f32 %v3119, %v3226
    %v3240 = vadd.f32 %v3121, %v3230
    %v3241 = vadd.f32 %v3123, %v3226
    %v3242 = vadd.f32 %v3125, %v3230
    %v3243 = vadd.f32 %v3129, %v3226
    %v3244 = vadd.f32 %v3131, %v3230
    %v3245 = vadd.f32 %v3133, %v3226
    %v3246 = vadd.f32 %v3135, %v3230
    %v3247 = vadd.f32 %v3139, %v3226
    %v3248 = vadd.f32 %v3141, %v3230
    %v3249 = vadd.f32 %v3143, %v3226
    %v3250 = vadd.f32 %v3145, %v3230
    %v3251 = vpack.c.bf16 %v3233, %v3231
    %v3252 = vpack.c.bf16 %v3234, %v3232
    %v3253 = vpack.c.bf16 %v3237, %v3235
    %v3254 = vpack.c.bf16 %v3238, %v3236
    %v3255 = vpack.c.bf16 %v3241, %v3239
    %v3256 = vpack.c.bf16 %v3242, %v3240
    %v3257 = vpack.c.bf16 %v3245, %v3243
    %v3258 = vpack.c.bf16 %v3246, %v3244
    %v3259 = vpack.c.bf16 %v3249, %v3247
    %v3260 = vpack.c.bf16 %v3250, %v3248
    %3261 = vmatprep.subr.bf16.mxu0 0
    %3262 = vmatpush1.bf16.xpose.msra.mxu0 0
    %3263 = vmatprep.subr.bf16.mxu0 0
    %3264 = vmatpush1.bf16.xpose.msra.mxu0 0
    %3265 = vmatprep.subr.bf16.mxu0 0
    %3266 = vmatpush1.bf16.xpose.msra.mxu0 0
    %3267 = vmatprep.subr.bf16.mxu0 0
    %3268 = vmatpush1.bf16.xpose.msra.mxu0 %v3221
    %3269 = vmatprep.subr.bf16.mxu0 0
    %3270 = vmatpush1.bf16.xpose.msra.mxu0 %v3219
    %3271 = vmatprep.subr.bf16.mxu0 0
    %3272 = vmatpush1.bf16.xpose.msra.mxu0 %v3217
    %3273 = vmatprep.subr.bf16.mxu0 0
    %3274 = vmatpush1.bf16.xpose.msra.mxu0 %v3215
    %3275 = vmatprep.subr.bf16.mxu0 0
    %3276 = vmatpush1.bf16.xpose.msra.mxu0 %v3213
    %3277 = vmatprep.subr.bf16.mxu0 0
    %3278 = vmatpush2.bf16.xpose.msra.mxu0 0
    %3279 = vmatprep.subr.bf16.mxu0 0
    %3280 = vmatpush2.bf16.xpose.msra.mxu0 0
    %3281 = vmatprep.subr.bf16.mxu0 0
    %3282 = vmatpush2.bf16.xpose.msra.mxu0 0
    %3283 = vmatprep.subr.bf16.mxu0 0
    %3284 = vmatpush2.bf16.xpose.msra.mxu0 0
    %3285 = vmatprep.subr.bf16.mxu0 0
    %3286 = vmatpush2.bf16.xpose.msra.mxu0 0
    %3287 = vmatprep.subr.bf16.mxu0 0
    %3288 = vmatpush2.bf16.xpose.msra.mxu0 0
    %3289 = vmatprep.subr.bf16.mxu0 0
    %3290 = vmatpush2.bf16.xpose.msra.mxu0 0
    %3291 = vmatprep.subr.bf16.mxu0 0
    %3292 = vmatpush2.bf16.xpose.msra.mxu0 0
    %3293 = vmatprep.mubr.bf16.mxu0 0
    %3294 = vmatmul.mubr.bf16.gmra.mxu0 %v3175
    %v3295 = vpop.f32.mrf.mxu0
    %v3296 = vadd.f32 %v144, %v3295
    %v3297 = vpop.f32.mrf.mxu0
    %v3298 = vpop.f32.mrf.mxu0
    %v3299 = vadd.f32 %v145, %v3298
    %v3300 = vpop.f32.mrf.mxu0
    %3301 = vmatprep.mubr.bf16.mxu0 0
    %3302 = vmatmul.mubr.bf16.gmra.mxu0 %v3177
    %v3303 = vpop.f32.mrf.mxu0
    %v3304 = vadd.f32 %v146, %v3303
    %v3305 = vpop.f32.mrf.mxu0
    %v3306 = vpop.f32.mrf.mxu0
    %v3307 = vadd.f32 %v147, %v3306
    %v3308 = vpop.f32.mrf.mxu0
    %3309 = vmatprep.mubr.bf16.mxu0 0
    %3310 = vmatmul.mubr.bf16.gmra.mxu0 %v3179
    %v3311 = vpop.f32.mrf.mxu0
    %v3312 = vadd.f32 %v148, %v3311
    %v3313 = vpop.f32.mrf.mxu0
    %v3314 = vpop.f32.mrf.mxu0
    %v3315 = vadd.f32 %v149, %v3314
    %v3316 = vpop.f32.mrf.mxu0
    %3317 = vmatprep.mubr.bf16.mxu0 0
    %3318 = vmatmul.mubr.bf16.gmra.mxu0 %v3181
    %v3319 = vpop.f32.mrf.mxu0
    %v3320 = vadd.f32 %v150, %v3319
    %v3321 = vpop.f32.mrf.mxu0
    %v3322 = vpop.f32.mrf.mxu0
    %v3323 = vadd.f32 %v151, %v3322
    %v3324 = vpop.f32.mrf.mxu0
    %3325 = vmatprep.mubr.bf16.mxu0 0
    %3326 = vmatmul.mubr.bf16.gmra.mxu0 %v3183
    %v3327 = vpop.f32.mrf.mxu0
    %v3328 = vadd.f32 %v152, %v3327
    %v3329 = vpop.f32.mrf.mxu0
    %v3330 = vpop.f32.mrf.mxu0
    %v3331 = vadd.f32 %v153, %v3330
    %v3332 = vpop.f32.mrf.mxu0
    %3333 = vdwg.mxu0
    %v3334 = vsel %vm1206, %v3296, -inf
    %3335 = vmax.xlane.f32.xlu0 %v3334
    %v3336 = vpop.xlane.xlu0 %3335
    %v3337 = vsel %vm1206, %v3299, -inf
    %3338 = vmax.xlane.f32.xlu0 %v3337
    %v3339 = vpop.xlane.xlu0 %3338
    %v3340 = vsel %vm1206, %v3304, -inf
    %3341 = vmax.xlane.f32.xlu0 %v3340
    %v3342 = vpop.xlane.xlu0 %3341
    %v3343 = vsel %vm1206, %v3307, -inf
    %3344 = vmax.xlane.f32.xlu0 %v3343
    %v3345 = vpop.xlane.xlu0 %3344
    %v3346 = vsel %vm1206, %v3312, -inf
    %3347 = vmax.xlane.f32.xlu0 %v3346
    %v3348 = vpop.xlane.xlu0 %3347
    %v3349 = vsel %vm1206, %v3315, -inf
    %3350 = vmax.xlane.f32.xlu0 %v3349
    %v3351 = vpop.xlane.xlu0 %3350
    %v3352 = vsel %vm1206, %v3320, -inf
    %3353 = vmax.xlane.f32.xlu0 %v3352
    %v3354 = vpop.xlane.xlu0 %3353
    %v3355 = vsel %vm1206, %v3323, -inf
    %3356 = vmax.xlane.f32.xlu0 %v3355
    %v3357 = vpop.xlane.xlu0 %3356
    %v3358 = vsel %vm1206, %v3328, -inf
    %3359 = vmax.xlane.f32.xlu0 %v3358
    %v3360 = vpop.xlane.xlu0 %3359
    %v3361 = vsel %vm1206, %v3331, -inf
    %3362 = vmax.xlane.f32.xlu0 %v3361
    %v3363 = vpop.xlane.xlu0 %3362
    %v3364 = vsub.f32 %v3296, %v3336
    %v3365 = vsub.f32 %v3299, %v3339
    %v3366 = vsub.f32 %v3304, %v3342
    %v3367 = vsub.f32 %v3307, %v3345
    %v3368 = vsub.f32 %v3312, %v3348
    %v3369 = vsub.f32 %v3315, %v3351
    %v3370 = vsub.f32 %v3320, %v3354
    %v3371 = vsub.f32 %v3323, %v3357
    %v3372 = vsub.f32 %v3328, %v3360
    %v3373 = vsub.f32 %v3331, %v3363
    %v3374 = vmul.f32 %v3364, 1.442695
    %v3375 = vpow.pop %v3374
    %v3376 = vmul.f32 %v3365, 1.442695
    %v3377 = vpow.pop %v3376
    %v3378 = vmul.f32 %v3366, 1.442695
    %v3379 = vpow.pop %v3378
    %v3380 = vmul.f32 %v3367, 1.442695
    %v3381 = vpow.pop %v3380
    %v3382 = vmul.f32 %v3368, 1.442695
    %v3383 = vpow.pop %v3382
    %v3384 = vmul.f32 %v3369, 1.442695
    %v3385 = vpow.pop %v3384
    %v3386 = vmul.f32 %v3370, 1.442695
    %v3387 = vpow.pop %v3386
    %v3388 = vmul.f32 %v3371, 1.442695
    %v3389 = vpow.pop %v3388
    %v3390 = vmul.f32 %v3372, 1.442695
    %v3391 = vpow.pop %v3390
    %v3392 = vmul.f32 %v3373, 1.442695
    %v3393 = vpow.pop %v3392
    %v3394 = vsel %vm1206, %v3375, 0.0
    %3395 = vadd.xlane.f32.xlu0 %v3394
    %v3396 = vpop.xlane.xlu0 %3395
    %v3397 = vsel %vm1206, %v3377, 0.0
    %3398 = vadd.xlane.f32.xlu0 %v3397
    %v3399 = vpop.xlane.xlu0 %3398
    %v3400 = vsel %vm1206, %v3379, 0.0
    %3401 = vadd.xlane.f32.xlu0 %v3400
    %v3402 = vpop.xlane.xlu0 %3401
    %v3403 = vsel %vm1206, %v3381, 0.0
    %3404 = vadd.xlane.f32.xlu0 %v3403
    %v3405 = vpop.xlane.xlu0 %3404
    %v3406 = vsel %vm1206, %v3383, 0.0
    %3407 = vadd.xlane.f32.xlu0 %v3406
    %v3408 = vpop.xlane.xlu0 %3407
    %v3409 = vsel %vm1206, %v3385, 0.0
    %3410 = vadd.xlane.f32.xlu0 %v3409
    %v3411 = vpop.xlane.xlu0 %3410
    %v3412 = vsel %vm1206, %v3387, 0.0
    %3413 = vadd.xlane.f32.xlu0 %v3412
    %v3414 = vpop.xlane.xlu0 %3413
    %v3415 = vsel %vm1206, %v3389, 0.0
    %3416 = vadd.xlane.f32.xlu0 %v3415
    %v3417 = vpop.xlane.xlu0 %3416
    %v3418 = vsel %vm1206, %v3391, 0.0
    %3419 = vadd.xlane.f32.xlu0 %v3418
    %v3420 = vpop.xlane.xlu0 %3419
    %v3421 = vsel %vm1206, %v3393, 0.0
    %3422 = vadd.xlane.f32.xlu0 %v3421
    %v3423 = vpop.xlane.xlu0 %3422
    %v3424 = vrcp.pop %v3396
    %v3425 = vrcp.pop %v3399
    %v3426 = vrcp.pop %v3402
    %v3427 = vrcp.pop %v3405
    %v3428 = vrcp.pop %v3408
    %v3429 = vrcp.pop %v3411
    %v3430 = vrcp.pop %v3414
    %v3431 = vrcp.pop %v3417
    %v3432 = vrcp.pop %v3420
    %v3433 = vrcp.pop %v3423
    %v3434 = vmul.f32 %v3375, %v3424
    %v3435 = vmul.f32 %v3377, %v3425
    %v3436 = vmul.f32 %v3379, %v3426
    %v3437 = vmul.f32 %v3381, %v3427
    %v3438 = vmul.f32 %v3383, %v3428
    %v3439 = vmul.f32 %v3385, %v3429
    %v3440 = vmul.f32 %v3387, %v3430
    %v3441 = vmul.f32 %v3389, %v3431
    %v3442 = vmul.f32 %v3391, %v3432
    %v3443 = vmul.f32 %v3393, %v3433
    %v3444 = vpack.c.bf16 %v3435, %v3434
    %v3445 = vpack.c.bf16 %v3437, %v3436
    %v3446 = vpack.c.bf16 %v3439, %v3438
    %v3447 = vpack.c.bf16 %v3441, %v3440
    %v3448 = vpack.c.bf16 %v3443, %v3442
    %v3450 = vsel %vm1206, %v3444, 0
    %v3453 = vsel %vm1206, %v3445, 0
    %v3456 = vsel %vm1206, %v3446, 0
    %v3459 = vsel %vm1206, %v3447, 0
    %v3462 = vsel %vm1206, %v3448, 0
    %3464 = vmatprep.subr.bf16.mxu0 0
    %3465 = vmatpush1.bf16.msra.mxu0 0
    %3466 = vmatprep.subr.bf16.mxu0 0
    %3467 = vmatpush1.bf16.msra.mxu0 0
    %3468 = vmatprep.subr.bf16.mxu0 0
    %3469 = vmatpush1.bf16.msra.mxu0 0
    %3470 = vmatprep.subr.bf16.mxu0 0
    %3471 = vmatpush1.bf16.msra.mxu0 %v3259
    %3472 = vmatprep.subr.bf16.mxu0 0
    %3473 = vmatpush1.bf16.msra.mxu0 %v3257
    %3474 = vmatprep.subr.bf16.mxu0 0
    %3475 = vmatpush1.bf16.msra.mxu0 %v3255
    %3476 = vmatprep.subr.bf16.mxu0 0
    %3477 = vmatpush1.bf16.msra.mxu0 %v3253
    %3478 = vmatprep.subr.bf16.mxu0 0
    %3479 = vmatpush1.bf16.msra.mxu0 %v3251
    %3480 = vmatprep.subr.bf16.mxu0 0
    %3481 = vmatpush2.bf16.msra.mxu0 0
    %3482 = vmatprep.subr.bf16.mxu0 0
    %3483 = vmatpush2.bf16.msra.mxu0 0
    %3484 = vmatprep.subr.bf16.mxu0 0
    %3485 = vmatpush2.bf16.msra.mxu0 0
    %3486 = vmatprep.subr.bf16.mxu0 0
    %3487 = vmatpush2.bf16.msra.mxu0 0
    %3488 = vmatprep.subr.bf16.mxu0 0
    %3489 = vmatpush2.bf16.msra.mxu0 0
    %3490 = vmatprep.subr.bf16.mxu0 0
    %3491 = vmatpush2.bf16.msra.mxu0 0
    %3492 = vmatprep.subr.bf16.mxu0 0
    %3493 = vmatpush2.bf16.msra.mxu0 0
    %3494 = vmatprep.subr.bf16.mxu0 0
    %3495 = vmatpush2.bf16.msra.mxu0 0
    %3496 = vmatprep.mubr.bf16.mxu0 0
    %3497 = vmatmul.mubr.bf16.gmra.mxu0 %v3450
    %v3498 = vpop.f32.mrf.mxu0
    %v3499 = vadd.f32 0.0, %v3498
    %v3500 = vpop.f32.mrf.mxu0
    %v3501 = vpop.f32.mrf.mxu0
    %v3502 = vadd.f32 0.0, %v3501
    %v3503 = vpop.f32.mrf.mxu0
    %3504 = vmatprep.mubr.bf16.mxu0 0
    %3505 = vmatmul.mubr.bf16.gmra.mxu0 %v3453
    %v3506 = vpop.f32.mrf.mxu0
    %v3507 = vadd.f32 0.0, %v3506
    %v3508 = vpop.f32.mrf.mxu0
    %v3509 = vpop.f32.mrf.mxu0
    %v3510 = vadd.f32 0.0, %v3509
    %v3511 = vpop.f32.mrf.mxu0
    %3512 = vmatprep.mubr.bf16.mxu0 0
    %3513 = vmatmul.mubr.bf16.gmra.mxu0 %v3456
    %v3514 = vpop.f32.mrf.mxu0
    %v3515 = vadd.f32 0.0, %v3514
    %v3516 = vpop.f32.mrf.mxu0
    %v3517 = vpop.f32.mrf.mxu0
    %v3518 = vadd.f32 0.0, %v3517
    %v3519 = vpop.f32.mrf.mxu0
    %3520 = vmatprep.mubr.bf16.mxu0 0
    %3521 = vmatmul.mubr.bf16.gmra.mxu0 %v3459
    %v3522 = vpop.f32.mrf.mxu0
    %v3523 = vadd.f32 0.0, %v3522
    %v3524 = vpop.f32.mrf.mxu0
    %v3525 = vpop.f32.mrf.mxu0
    %v3526 = vadd.f32 0.0, %v3525
    %v3527 = vpop.f32.mrf.mxu0
    %3528 = vmatprep.mubr.bf16.mxu0 0
    %3529 = vmatmul.mubr.bf16.gmra.mxu0 %v3462
    %v3530 = vpop.f32.mrf.mxu0
    %v3531 = vadd.f32 0.0, %v3530
    %v3532 = vpop.f32.mrf.mxu0
    %v3533 = vpop.f32.mrf.mxu0
    %v3534 = vadd.f32 0.0, %v3533
    %v3535 = vpop.f32.mrf.mxu0
    %3536 = vdwg.mxu0
    %3537 = vmatprep.subr.bf16.mxu0 0
    %3538 = vmatpush1.bf16.xpose.msra.mxu0 0
    %3539 = vmatprep.subr.bf16.mxu0 0
    %3540 = vmatpush1.bf16.xpose.msra.mxu0 0
    %3541 = vmatprep.subr.bf16.mxu0 0
    %3542 = vmatpush1.bf16.xpose.msra.mxu0 0
    %3543 = vmatprep.subr.bf16.mxu0 0
    %3544 = vmatpush1.bf16.xpose.msra.mxu0 %v3222
    %3545 = vmatprep.subr.bf16.mxu0 0
    %3546 = vmatpush1.bf16.xpose.msra.mxu0 %v3220
    %3547 = vmatprep.subr.bf16.mxu0 0
    %3548 = vmatpush1.bf16.xpose.msra.mxu0 %v3218
    %3549 = vmatprep.subr.bf16.mxu0 0
    %3550 = vmatpush1.bf16.xpose.msra.mxu0 %v3216
    %3551 = vmatprep.subr.bf16.mxu0 0
    %3552 = vmatpush1.bf16.xpose.msra.mxu0 %v3214
    %3553 = vmatprep.subr.bf16.mxu0 0
    %3554 = vmatpush2.bf16.xpose.msra.mxu0 0
    %3555 = vmatprep.subr.bf16.mxu0 0
    %3556 = vmatpush2.bf16.xpose.msra.mxu0 0
    %3557 = vmatprep.subr.bf16.mxu0 0
    %3558 = vmatpush2.bf16.xpose.msra.mxu0 0
    %3559 = vmatprep.subr.bf16.mxu0 0
    %3560 = vmatpush2.bf16.xpose.msra.mxu0 0
    %3561 = vmatprep.subr.bf16.mxu0 0
    %3562 = vmatpush2.bf16.xpose.msra.mxu0 0
    %3563 = vmatprep.subr.bf16.mxu0 0
    %3564 = vmatpush2.bf16.xpose.msra.mxu0 0
    %3565 = vmatprep.subr.bf16.mxu0 0
    %3566 = vmatpush2.bf16.xpose.msra.mxu0 0
    %3567 = vmatprep.subr.bf16.mxu0 0
    %3568 = vmatpush2.bf16.xpose.msra.mxu0 0
    %3569 = vmatprep.mubr.bf16.mxu0 0
    %3570 = vmatmul.mubr.bf16.gmra.mxu0 %v3176
    %v3571 = vpop.f32.mrf.mxu0
    %v3572 = vadd.f32 %v144, %v3571
    %v3573 = vpop.f32.mrf.mxu0
    %v3574 = vpop.f32.mrf.mxu0
    %v3575 = vadd.f32 %v145, %v3574
    %v3576 = vpop.f32.mrf.mxu0
    %3577 = vmatprep.mubr.bf16.mxu0 0
    %3578 = vmatmul.mubr.bf16.gmra.mxu0 %v3178
    %v3579 = vpop.f32.mrf.mxu0
    %v3580 = vadd.f32 %v146, %v3579
    %v3581 = vpop.f32.mrf.mxu0
    %v3582 = vpop.f32.mrf.mxu0
    %v3583 = vadd.f32 %v147, %v3582
    %v3584 = vpop.f32.mrf.mxu0
    %3585 = vmatprep.mubr.bf16.mxu0 0
    %3586 = vmatmul.mubr.bf16.gmra.mxu0 %v3180
    %v3587 = vpop.f32.mrf.mxu0
    %v3588 = vadd.f32 %v148, %v3587
    %v3589 = vpop.f32.mrf.mxu0
    %v3590 = vpop.f32.mrf.mxu0
    %v3591 = vadd.f32 %v149, %v3590
    %v3592 = vpop.f32.mrf.mxu0
    %3593 = vmatprep.mubr.bf16.mxu0 0
    %3594 = vmatmul.mubr.bf16.gmra.mxu0 %v3182
    %v3595 = vpop.f32.mrf.mxu0
    %v3596 = vadd.f32 %v150, %v3595
    %v3597 = vpop.f32.mrf.mxu0
    %v3598 = vpop.f32.mrf.mxu0
    %v3599 = vadd.f32 %v151, %v3598
    %v3600 = vpop.f32.mrf.mxu0
    %3601 = vmatprep.mubr.bf16.mxu0 0
    %3602 = vmatmul.mubr.bf16.gmra.mxu0 %v3184
    %v3603 = vpop.f32.mrf.mxu0
    %v3604 = vadd.f32 %v152, %v3603
    %v3605 = vpop.f32.mrf.mxu0
    %v3606 = vpop.f32.mrf.mxu0
    %v3607 = vadd.f32 %v153, %v3606
    %v3608 = vpop.f32.mrf.mxu0
    %3609 = vdwg.mxu0
    %v3610 = vsel %vm1206, %v3572, -inf
    %3611 = vmax.xlane.f32.xlu0 %v3610
    %v3612 = vpop.xlane.xlu0 %3611
    %v3613 = vsel %vm1206, %v3575, -inf
    %3614 = vmax.xlane.f32.xlu0 %v3613
    %v3615 = vpop.xlane.xlu0 %3614
    %v3616 = vsel %vm1206, %v3580, -inf
    %3617 = vmax.xlane.f32.xlu0 %v3616
    %v3618 = vpop.xlane.xlu0 %3617
    %v3619 = vsel %vm1206, %v3583, -inf
    %3620 = vmax.xlane.f32.xlu0 %v3619
    %v3621 = vpop.xlane.xlu0 %3620
    %v3622 = vsel %vm1206, %v3588, -inf
    %3623 = vmax.xlane.f32.xlu0 %v3622
    %v3624 = vpop.xlane.xlu0 %3623
    %v3625 = vsel %vm1206, %v3591, -inf
    %3626 = vmax.xlane.f32.xlu0 %v3625
    %v3627 = vpop.xlane.xlu0 %3626
    %v3628 = vsel %vm1206, %v3596, -inf
    %3629 = vmax.xlane.f32.xlu0 %v3628
    %v3630 = vpop.xlane.xlu0 %3629
    %v3631 = vsel %vm1206, %v3599, -inf
    %3632 = vmax.xlane.f32.xlu0 %v3631
    %v3633 = vpop.xlane.xlu0 %3632
    %v3634 = vsel %vm1206, %v3604, -inf
    %3635 = vmax.xlane.f32.xlu0 %v3634
    %v3636 = vpop.xlane.xlu0 %3635
    %v3637 = vsel %vm1206, %v3607, -inf
    %3638 = vmax.xlane.f32.xlu0 %v3637
    %v3639 = vpop.xlane.xlu0 %3638
    %v3640 = vsub.f32 %v3572, %v3612
    %v3641 = vsub.f32 %v3575, %v3615
    %v3642 = vsub.f32 %v3580, %v3618
    %v3643 = vsub.f32 %v3583, %v3621
    %v3644 = vsub.f32 %v3588, %v3624
    %v3645 = vsub.f32 %v3591, %v3627
    %v3646 = vsub.f32 %v3596, %v3630
    %v3647 = vsub.f32 %v3599, %v3633
    %v3648 = vsub.f32 %v3604, %v3636
    %v3649 = vsub.f32 %v3607, %v3639
    %v3650 = vmul.f32 %v3640, 1.442695
    %v3651 = vpow.pop %v3650
    %v3652 = vmul.f32 %v3641, 1.442695
    %v3653 = vpow.pop %v3652
    %v3654 = vmul.f32 %v3642, 1.442695
    %v3655 = vpow.pop %v3654
    %v3656 = vmul.f32 %v3643, 1.442695
    %v3657 = vpow.pop %v3656
    %v3658 = vmul.f32 %v3644, 1.442695
    %v3659 = vpow.pop %v3658
    %v3660 = vmul.f32 %v3645, 1.442695
    %v3661 = vpow.pop %v3660
    %v3662 = vmul.f32 %v3646, 1.442695
    %v3663 = vpow.pop %v3662
    %v3664 = vmul.f32 %v3647, 1.442695
    %v3665 = vpow.pop %v3664
    %v3666 = vmul.f32 %v3648, 1.442695
    %v3667 = vpow.pop %v3666
    %v3668 = vmul.f32 %v3649, 1.442695
    %v3669 = vpow.pop %v3668
    %v3670 = vsel %vm1206, %v3651, 0.0
    %3671 = vadd.xlane.f32.xlu0 %v3670
    %v3672 = vpop.xlane.xlu0 %3671
    %v3673 = vsel %vm1206, %v3653, 0.0
    %3674 = vadd.xlane.f32.xlu0 %v3673
    %v3675 = vpop.xlane.xlu0 %3674
    %v3676 = vsel %vm1206, %v3655, 0.0
    %3677 = vadd.xlane.f32.xlu0 %v3676
    %v3678 = vpop.xlane.xlu0 %3677
    %v3679 = vsel %vm1206, %v3657, 0.0
    %3680 = vadd.xlane.f32.xlu0 %v3679
    %v3681 = vpop.xlane.xlu0 %3680
    %v3682 = vsel %vm1206, %v3659, 0.0
    %3683 = vadd.xlane.f32.xlu0 %v3682
    %v3684 = vpop.xlane.xlu0 %3683
    %v3685 = vsel %vm1206, %v3661, 0.0
    %3686 = vadd.xlane.f32.xlu0 %v3685
    %v3687 = vpop.xlane.xlu0 %3686
    %v3688 = vsel %vm1206, %v3663, 0.0
    %3689 = vadd.xlane.f32.xlu0 %v3688
    %v3690 = vpop.xlane.xlu0 %3689
    %v3691 = vsel %vm1206, %v3665, 0.0
    %3692 = vadd.xlane.f32.xlu0 %v3691
    %v3693 = vpop.xlane.xlu0 %3692
    %v3694 = vsel %vm1206, %v3667, 0.0
    %3695 = vadd.xlane.f32.xlu0 %v3694
    %v3696 = vpop.xlane.xlu0 %3695
    %v3697 = vsel %vm1206, %v3669, 0.0
    %3698 = vadd.xlane.f32.xlu0 %v3697
    %v3699 = vpop.xlane.xlu0 %3698
    %v3700 = vrcp.pop %v3672
    %v3701 = vrcp.pop %v3675
    %v3702 = vrcp.pop %v3678
    %v3703 = vrcp.pop %v3681
    %v3704 = vrcp.pop %v3684
    %v3705 = vrcp.pop %v3687
    %v3706 = vrcp.pop %v3690
    %v3707 = vrcp.pop %v3693
    %v3708 = vrcp.pop %v3696
    %v3709 = vrcp.pop %v3699
    %v3710 = vmul.f32 %v3651, %v3700
    %v3711 = vmul.f32 %v3653, %v3701
    %v3712 = vmul.f32 %v3655, %v3702
    %v3713 = vmul.f32 %v3657, %v3703
    %v3714 = vmul.f32 %v3659, %v3704
    %v3715 = vmul.f32 %v3661, %v3705
    %v3716 = vmul.f32 %v3663, %v3706
    %v3717 = vmul.f32 %v3665, %v3707
    %v3718 = vmul.f32 %v3667, %v3708
    %v3719 = vmul.f32 %v3669, %v3709
    %v3720 = vpack.c.bf16 %v3711, %v3710
    %v3721 = vpack.c.bf16 %v3713, %v3712
    %v3722 = vpack.c.bf16 %v3715, %v3714
    %v3723 = vpack.c.bf16 %v3717, %v3716
    %v3724 = vpack.c.bf16 %v3719, %v3718
    %v3726 = vsel %vm1206, %v3720, 0
    %v3729 = vsel %vm1206, %v3721, 0
    %v3732 = vsel %vm1206, %v3722, 0
    %v3735 = vsel %vm1206, %v3723, 0
    %v3738 = vsel %vm1206, %v3724, 0
    %3740 = vmatprep.subr.bf16.mxu0 0
    %3741 = vmatpush1.bf16.msra.mxu0 0
    %3742 = vmatprep.subr.bf16.mxu0 0
    %3743 = vmatpush1.bf16.msra.mxu0 0
    %3744 = vmatprep.subr.bf16.mxu0 0
    %3745 = vmatpush1.bf16.msra.mxu0 0
    %3746 = vmatprep.subr.bf16.mxu0 0
    %3747 = vmatpush1.bf16.msra.mxu0 %v3260
    %3748 = vmatprep.subr.bf16.mxu0 0
    %3749 = vmatpush1.bf16.msra.mxu0 %v3258
    %3750 = vmatprep.subr.bf16.mxu0 0
    %3751 = vmatpush1.bf16.msra.mxu0 %v3256
    %3752 = vmatprep.subr.bf16.mxu0 0
    %3753 = vmatpush1.bf16.msra.mxu0 %v3254
    %3754 = vmatprep.subr.bf16.mxu0 0
    %3755 = vmatpush1.bf16.msra.mxu0 %v3252
    %3756 = vmatprep.subr.bf16.mxu0 0
    %3757 = vmatpush2.bf16.msra.mxu0 0
    %3758 = vmatprep.subr.bf16.mxu0 0
    %3759 = vmatpush2.bf16.msra.mxu0 0
    %3760 = vmatprep.subr.bf16.mxu0 0
    %3761 = vmatpush2.bf16.msra.mxu0 0
    %3762 = vmatprep.subr.bf16.mxu0 0
    %3763 = vmatpush2.bf16.msra.mxu0 0
    %3764 = vmatprep.subr.bf16.mxu0 0
    %3765 = vmatpush2.bf16.msra.mxu0 0
    %3766 = vmatprep.subr.bf16.mxu0 0
    %3767 = vmatpush2.bf16.msra.mxu0 0
    %3768 = vmatprep.subr.bf16.mxu0 0
    %3769 = vmatpush2.bf16.msra.mxu0 0
    %3770 = vmatprep.subr.bf16.mxu0 0
    %3771 = vmatpush2.bf16.msra.mxu0 0
    %3772 = vmatprep.mubr.bf16.mxu0 0
    %3773 = vmatmul.mubr.bf16.gmra.mxu0 %v3726
    %v3774 = vpop.f32.mrf.mxu0
    %v3775 = vadd.f32 0.0, %v3774
    %v3776 = vpop.f32.mrf.mxu0
    %v3777 = vpop.f32.mrf.mxu0
    %v3778 = vadd.f32 0.0, %v3777
    %v3779 = vpop.f32.mrf.mxu0
    %3780 = vmatprep.mubr.bf16.mxu0 0
    %3781 = vmatmul.mubr.bf16.gmra.mxu0 %v3729
    %v3782 = vpop.f32.mrf.mxu0
    %v3783 = vadd.f32 0.0, %v3782
    %v3784 = vpop.f32.mrf.mxu0
    %v3785 = vpop.f32.mrf.mxu0
    %v3786 = vadd.f32 0.0, %v3785
    %v3787 = vpop.f32.mrf.mxu0
    %3788 = vmatprep.mubr.bf16.mxu0 0
    %3789 = vmatmul.mubr.bf16.gmra.mxu0 %v3732
    %v3790 = vpop.f32.mrf.mxu0
    %v3791 = vadd.f32 0.0, %v3790
    %v3792 = vpop.f32.mrf.mxu0
    %v3793 = vpop.f32.mrf.mxu0
    %v3794 = vadd.f32 0.0, %v3793
    %v3795 = vpop.f32.mrf.mxu0
    %3796 = vmatprep.mubr.bf16.mxu0 0
    %3797 = vmatmul.mubr.bf16.gmra.mxu0 %v3735
    %v3798 = vpop.f32.mrf.mxu0
    %v3799 = vadd.f32 0.0, %v3798
    %v3800 = vpop.f32.mrf.mxu0
    %v3801 = vpop.f32.mrf.mxu0
    %v3802 = vadd.f32 0.0, %v3801
    %v3803 = vpop.f32.mrf.mxu0
    %3804 = vmatprep.mubr.bf16.mxu0 0
    %3805 = vmatmul.mubr.bf16.gmra.mxu0 %v3738
    %v3806 = vpop.f32.mrf.mxu0
    %v3807 = vadd.f32 0.0, %v3806
    %v3808 = vpop.f32.mrf.mxu0
    %v3809 = vpop.f32.mrf.mxu0
    %v3810 = vadd.f32 0.0, %v3809
    %v3811 = vpop.f32.mrf.mxu0
    %3812 = vdwg.mxu0
    %s3813 = scalar_lea.vmem [#allocation10], 128
    %v3814 = vld [vmem:[%s3813] sm:$0xf]
    %v3815 = vld [vmem:[%s3813 + $0x4] sm:$0xf]
    %v3816 = vld [vmem:[%s3813 + $0x8] sm:$0xf]
    %v3817 = vld [vmem:[%s3813 + $0xc] sm:$0xf]
    %v3818 = vld [vmem:[%s3813 + $0x10] sm:$0xf]
    %v3819 = vld [vmem:[%s3813 + $0x14] sm:$0xf]
    %v3820 = vld [vmem:[%s3813 + $0x18] sm:$0xf]
    %v3821 = vld [vmem:[%s3813 + $0x1c] sm:$0xf]
    %v3822 = vld [vmem:[%s3813 + $0x20] sm:$0xf]
    %v3823 = vld [vmem:[%s3813 + $0x24] sm:$0xf]
    %v3824 = vld [vmem:[%s3813 + $0x28] sm:$0xf]
    %v3825 = vld [vmem:[%s3813 + $0x2c] sm:$0xf]
    %v3826 = vld [vmem:[%s3813 + $0x30] sm:$0xf]
    %v3827 = vld [vmem:[%s3813 + $0x34] sm:$0xf]
    %v3828 = vld [vmem:[%s3813 + $0x38] sm:$0xf]
    %v3829 = vld [vmem:[%s3813 + $0x3c] sm:$0xf]
    %v3830 = vld [vmem:[%s3813 + $0x40] sm:$0xf]
    %v3831 = vld [vmem:[%s3813 + $0x44] sm:$0xf]
    %v3832 = vld [vmem:[%s3813 + $0x48] sm:$0xf]
    %v3833 = vld [vmem:[%s3813 + $0x4c] sm:$0xf]
    %v3834 = vld [vmem:[%s3813 + $0x50] sm:$0xf]
    %v3835 = vld [vmem:[%s3813 + $0x54] sm:$0xf]
    %v3836 = vld [vmem:[%s3813 + $0x58] sm:$0xf]
    %v3837 = vld [vmem:[%s3813 + $0x5c] sm:$0xf]
    %v3838 = vld [vmem:[%s3813 + $0x60] sm:$0xf]
    %v3839 = vld [vmem:[%s3813 + $0x64] sm:$0xf]
    %v3840 = vld [vmem:[%s3813 + $0x68] sm:$0xf]
    %v3841 = vld [vmem:[%s3813 + $0x6c] sm:$0xf]
    %v3842 = vld [vmem:[%s3813 + $0x70] sm:$0xf]
    %v3843 = vld [vmem:[%s3813 + $0x74] sm:$0xf]
    %v3844 = vld [vmem:[%s3813 + $0x78] sm:$0xf]
    %v3845 = vld [vmem:[%s3813 + $0x7c] sm:$0xf]
    %v3846 = vpack.c.bf16 %v3502, %v3499
    %v3847 = vpack.c.bf16 %v3778, %v3775
    %v3848 = vpack.c.bf16 %v3510, %v3507
    %v3849 = vpack.c.bf16 %v3786, %v3783
    %v3850 = vpack.c.bf16 %v3518, %v3515
    %v3851 = vpack.c.bf16 %v3794, %v3791
    %v3852 = vpack.c.bf16 %v3526, %v3523
    %v3853 = vpack.c.bf16 %v3802, %v3799
    %v3854 = vpack.c.bf16 %v3534, %v3531
    %v3855 = vpack.c.bf16 %v3810, %v3807
    %v3856 = vlaneseq
    %v3857 = vshrl.u32 %v3856, 7
    %v3858 = vsub.s32 3, %v3857
    %v3859 = vrot.slane %v2453, %v3858
    %v3892 = vunpack.c.l.b16 %v3814
    %v3893 = vunpack.c.l.b16 %v3815
    %v3894 = vunpack.c.l.b16 %v3816
    %v3895 = vunpack.c.l.b16 %v3817
    %v3896 = vunpack.c.l.b16 %v3818
    %v3897 = vunpack.c.l.b16 %v3819
    %v3898 = vunpack.c.l.b16 %v3820
    %v3899 = vunpack.c.l.b16 %v3821
    %v3900 = vunpack.c.l.b16 %v3822
    %v3901 = vunpack.c.l.b16 %v3823
    %v3902 = vunpack.c.l.b16 %v3824
    %v3903 = vunpack.c.l.b16 %v3825
    %v3904 = vunpack.c.l.b16 %v3826
    %v3905 = vunpack.c.l.b16 %v3827
    %v3906 = vunpack.c.l.b16 %v3828
    %v3907 = vunpack.c.l.b16 %v3829
    %v3908 = vunpack.c.l.b16 %v3830
    %v3909 = vunpack.c.l.b16 %v3831
    %v3910 = vunpack.c.l.b16 %v3832
    %v3911 = vunpack.c.l.b16 %v3833
    %v3912 = vunpack.c.l.b16 %v3834
    %v3913 = vunpack.c.l.b16 %v3835
    %v3914 = vunpack.c.l.b16 %v3836
    %v3915 = vunpack.c.l.b16 %v3837
    %v3916 = vunpack.c.l.b16 %v3838
    %v3917 = vunpack.c.l.b16 %v3839
    %v3918 = vunpack.c.l.b16 %v3840
    %v3919 = vunpack.c.l.b16 %v3841
    %v3920 = vunpack.c.l.b16 %v3842
    %v3921 = vunpack.c.l.b16 %v3843
    %v3922 = vunpack.c.l.b16 %v3844
    %v3923 = vunpack.c.l.b16 %v3845
    %v3924 = vpack.c.b16 %v3893, %v3892
    %v3925 = vpack.c.b16 %v3895, %v3894
    %v3926 = vpack.c.b16 %v3897, %v3896
    %v3927 = vpack.c.b16 %v3899, %v3898
    %v3928 = vpack.c.b16 %v3901, %v3900
    %v3929 = vpack.c.b16 %v3903, %v3902
    %v3930 = vpack.c.b16 %v3905, %v3904
    %v3931 = vpack.c.b16 %v3907, %v3906
    %v3932 = vpack.c.b16 %v3909, %v3908
    %v3933 = vpack.c.b16 %v3911, %v3910
    %v3934 = vpack.c.b16 %v3913, %v3912
    %v3935 = vpack.c.b16 %v3915, %v3914
    %v3936 = vpack.c.b16 %v3917, %v3916
    %v3937 = vpack.c.b16 %v3919, %v3918
    %v3938 = vpack.c.b16 %v3921, %v3920
    %v3939 = vpack.c.b16 %v3923, %v3922
    %3956 = vmatprep.subr.bf16.mxu0 0
    %3957 = vmatpush1.bf16.msra.mxu0 %v3931
    %3958 = vmatprep.subr.bf16.mxu0 0
    %3959 = vmatpush1.bf16.msra.mxu0 %v3930
    %3960 = vmatprep.subr.bf16.mxu0 0
    %3961 = vmatpush1.bf16.msra.mxu0 %v3929
    %3962 = vmatprep.subr.bf16.mxu0 0
    %3963 = vmatpush1.bf16.msra.mxu0 %v3928
    %3964 = vmatprep.subr.bf16.mxu0 0
    %3965 = vmatpush1.bf16.msra.mxu0 %v3927
    %3966 = vmatprep.subr.bf16.mxu0 0
    %3967 = vmatpush1.bf16.msra.mxu0 %v3926
    %3968 = vmatprep.subr.bf16.mxu0 0
    %3969 = vmatpush1.bf16.msra.mxu0 %v3925
    %3970 = vmatprep.subr.bf16.mxu0 0
    %3971 = vmatpush1.bf16.msra.mxu0 %v3924
    %3972 = vmatprep.subr.bf16.mxu0 0
    %3973 = vmatpush2.bf16.msra.mxu0 %v3939
    %3974 = vmatprep.subr.bf16.mxu0 0
    %3975 = vmatpush2.bf16.msra.mxu0 %v3938
    %3976 = vmatprep.subr.bf16.mxu0 0
    %3977 = vmatpush2.bf16.msra.mxu0 %v3937
    %3978 = vmatprep.subr.bf16.mxu0 0
    %3979 = vmatpush2.bf16.msra.mxu0 %v3936
    %3980 = vmatprep.subr.bf16.mxu0 0
    %3981 = vmatpush2.bf16.msra.mxu0 %v3935
    %3982 = vmatprep.subr.bf16.mxu0 0
    %3983 = vmatpush2.bf16.msra.mxu0 %v3934
    %3984 = vmatprep.subr.bf16.mxu0 0
    %3985 = vmatpush2.bf16.msra.mxu0 %v3933
    %3986 = vmatprep.subr.bf16.mxu0 0
    %3987 = vmatpush2.bf16.msra.mxu0 %v3932
    %3988 = vmatprep.mubr.bf16.mxu0 %v3847
    %3989 = vmatmul.mubr.bf16.gmra.mxu0 %v3846
    %v3990 = vpop.f32.mrf.mxu0
    %v3991 = vadd.f32 %v3859, %v3990
    %v3992 = vpop.f32.mrf.mxu0
    %v3993 = vpop.f32.mrf.mxu0
    %v3994 = vadd.f32 %v3859, %v3993
    %v3995 = vpop.f32.mrf.mxu0
    %3996 = vmatprep.mubr.bf16.mxu0 %v3849
    %3997 = vmatmul.mubr.bf16.gmra.mxu0 %v3848
    %v3998 = vpop.f32.mrf.mxu0
    %v3999 = vadd.f32 %v3859, %v3998
    %v4000 = vpop.f32.mrf.mxu0
    %v4001 = vpop.f32.mrf.mxu0
    %v4002 = vadd.f32 %v3859, %v4001
    %v4003 = vpop.f32.mrf.mxu0
    %4004 = vmatprep.mubr.bf16.mxu0 %v3851
    %4005 = vmatmul.mubr.bf16.gmra.mxu0 %v3850
    %v4006 = vpop.f32.mrf.mxu0
    %v4007 = vadd.f32 %v3859, %v4006
    %v4008 = vpop.f32.mrf.mxu0
    %v4009 = vpop.f32.mrf.mxu0
    %v4010 = vadd.f32 %v3859, %v4009
    %v4011 = vpop.f32.mrf.mxu0
    %4012 = vmatprep.mubr.bf16.mxu0 %v3853
    %4013 = vmatmul.mubr.bf16.gmra.mxu0 %v3852
    %v4014 = vpop.f32.mrf.mxu0
    %v4015 = vadd.f32 %v3859, %v4014
    %v4016 = vpop.f32.mrf.mxu0
    %v4017 = vpop.f32.mrf.mxu0
    %v4018 = vadd.f32 %v3859, %v4017
    %v4019 = vpop.f32.mrf.mxu0
    %4020 = vmatprep.mubr.bf16.mxu0 %v3855
    %4021 = vmatmul.mubr.bf16.gmra.mxu0 %v3854
    %v4022 = vpop.f32.mrf.mxu0
    %v4023 = vadd.f32 %v3859, %v4022
    %v4024 = vpop.f32.mrf.mxu0
    %v4025 = vpop.f32.mrf.mxu0
    %v4026 = vadd.f32 %v3859, %v4025
    %v4027 = vpop.f32.mrf.mxu0
    %4028 = vdwg.mxu0
    %v4029 = vadd.f32 %v2431, %v3991
    %v4030 = vadd.f32 %v2432, %v3994
    %v4031 = vadd.f32 %v2433, %v3999
    %v4032 = vadd.f32 %v2434, %v4002
    %v4033 = vadd.f32 %v2435, %v4007
    %v4034 = vadd.f32 %v2436, %v4010
    %v4035 = vadd.f32 %v2437, %v4015
    %v4036 = vadd.f32 %v2438, %v4018
    %v4037 = vadd.f32 %v2439, %v4023
    %v4038 = vadd.f32 %v2440, %v4026
    %4039 = vadd.xlane.f32.xlu0 %v4029
    %v4040 = vpop.xlane.xlu0 %4039
    %4041 = vadd.xlane.f32.xlu0 %v4030
    %v4042 = vpop.xlane.xlu0 %4041
    %4043 = vadd.xlane.f32.xlu0 %v4031
    %v4044 = vpop.xlane.xlu0 %4043
    %4045 = vadd.xlane.f32.xlu0 %v4032
    %v4046 = vpop.xlane.xlu0 %4045
    %4047 = vadd.xlane.f32.xlu0 %v4033
    %v4048 = vpop.xlane.xlu0 %4047
    %4049 = vadd.xlane.f32.xlu0 %v4034
    %v4050 = vpop.xlane.xlu0 %4049
    %4051 = vadd.xlane.f32.xlu0 %v4035
    %v4052 = vpop.xlane.xlu0 %4051
    %4053 = vadd.xlane.f32.xlu0 %v4036
    %v4054 = vpop.xlane.xlu0 %4053
    %4055 = vadd.xlane.f32.xlu0 %v4037
    %v4056 = vpop.xlane.xlu0 %4055
    %4057 = vadd.xlane.f32.xlu0 %v4038
    %v4058 = vpop.xlane.xlu0 %4057
    %v4059 = vmul.f32 %v4040, 0.03125
    %v4060 = vmul.f32 %v4042, 0.03125
    %v4061 = vmul.f32 %v4044, 0.03125
    %v4062 = vmul.f32 %v4046, 0.03125
    %v4063 = vmul.f32 %v4048, 0.03125
    %v4064 = vmul.f32 %v4050, 0.03125
    %v4065 = vmul.f32 %v4052, 0.03125
    %v4066 = vmul.f32 %v4054, 0.03125
    %v4067 = vmul.f32 %v4056, 0.03125
    %v4068 = vmul.f32 %v4058, 0.03125
    %v4069 = vsub.f32 %v4029, %v4059
    %v4070 = vsub.f32 %v4030, %v4060
    %v4071 = vsub.f32 %v4031, %v4061
    %v4072 = vsub.f32 %v4032, %v4062
    %v4073 = vsub.f32 %v4033, %v4063
    %v4074 = vsub.f32 %v4034, %v4064
    %v4075 = vsub.f32 %v4035, %v4065
    %v4076 = vsub.f32 %v4036, %v4066
    %v4077 = vsub.f32 %v4037, %v4067
    %v4078 = vsub.f32 %v4038, %v4068
    %v4079 = vsel %vm207, %v4069, 0.0
    %v4080 = vsel %vm207, %v4070, 0.0
    %v4081 = vsel %vm207, %v4071, 0.0
    %v4082 = vsel %vm207, %v4072, 0.0
    %v4083 = vsel %vm207, %v4073, 0.0
    %v4084 = vsel %vm207, %v4074, 0.0
    %v4085 = vsel %vm207, %v4075, 0.0
    %v4086 = vsel %vm207, %v4076, 0.0
    %v4087 = vsel %vm207, %v4077, 0.0
    %v4088 = vsel %vm207, %v4078, 0.0
    %v4089 = vmul.f32 %v4079, %v4079
    %v4090 = vmul.f32 %v4080, %v4080
    %v4091 = vmul.f32 %v4081, %v4081
    %v4092 = vmul.f32 %v4082, %v4082
    %v4093 = vmul.f32 %v4083, %v4083
    %v4094 = vmul.f32 %v4084, %v4084
    %v4095 = vmul.f32 %v4085, %v4085
    %v4096 = vmul.f32 %v4086, %v4086
    %v4097 = vmul.f32 %v4087, %v4087
    %v4098 = vmul.f32 %v4088, %v4088
    %4099 = vadd.xlane.f32.xlu0 %v4089
    %v4100 = vpop.xlane.xlu0 %4099
    %4101 = vadd.xlane.f32.xlu0 %v4090
    %v4102 = vpop.xlane.xlu0 %4101
    %4103 = vadd.xlane.f32.xlu0 %v4091
    %v4104 = vpop.xlane.xlu0 %4103
    %4105 = vadd.xlane.f32.xlu0 %v4092
    %v4106 = vpop.xlane.xlu0 %4105
    %4107 = vadd.xlane.f32.xlu0 %v4093
    %v4108 = vpop.xlane.xlu0 %4107
    %4109 = vadd.xlane.f32.xlu0 %v4094
    %v4110 = vpop.xlane.xlu0 %4109
    %4111 = vadd.xlane.f32.xlu0 %v4095
    %v4112 = vpop.xlane.xlu0 %4111
    %4113 = vadd.xlane.f32.xlu0 %v4096
    %v4114 = vpop.xlane.xlu0 %4113
    %4115 = vadd.xlane.f32.xlu0 %v4097
    %v4116 = vpop.xlane.xlu0 %4115
    %4117 = vadd.xlane.f32.xlu0 %v4098
    %v4118 = vpop.xlane.xlu0 %4117
    %v4119 = vmul.f32 %v4100, 0.03125
    %v4120 = vmul.f32 %v4102, 0.03125
    %v4121 = vmul.f32 %v4104, 0.03125
    %v4122 = vmul.f32 %v4106, 0.03125
    %v4123 = vmul.f32 %v4108, 0.03125
    %v4124 = vmul.f32 %v4110, 0.03125
    %v4125 = vmul.f32 %v4112, 0.03125
    %v4126 = vmul.f32 %v4114, 0.03125
    %v4127 = vmul.f32 %v4116, 0.03125
    %v4128 = vmul.f32 %v4118, 0.03125
    %v4129 = vadd.f32 %v4119, 1e-05
    %v4130 = vadd.f32 %v4120, 1e-05
    %v4131 = vadd.f32 %v4121, 1e-05
    %v4132 = vadd.f32 %v4122, 1e-05
    %v4133 = vadd.f32 %v4123, 1e-05
    %v4134 = vadd.f32 %v4124, 1e-05
    %v4135 = vadd.f32 %v4125, 1e-05
    %v4136 = vadd.f32 %v4126, 1e-05
    %v4137 = vadd.f32 %v4127, 1e-05
    %v4138 = vadd.f32 %v4128, 1e-05
    %v4139 = vrsqrt.pop %v4129
    %v4140 = vrsqrt.pop %v4130
    %v4141 = vrsqrt.pop %v4131
    %v4142 = vrsqrt.pop %v4132
    %v4143 = vrsqrt.pop %v4133
    %v4144 = vrsqrt.pop %v4134
    %v4145 = vrsqrt.pop %v4135
    %v4146 = vrsqrt.pop %v4136
    %v4147 = vrsqrt.pop %v4137
    %v4148 = vrsqrt.pop %v4138
    %v4149 = vmul.f32 %v4079, %v4139
    %v4150 = vmul.f32 %v4080, %v4140
    %v4151 = vmul.f32 %v4081, %v4141
    %v4152 = vmul.f32 %v4082, %v4142
    %v4153 = vmul.f32 %v4083, %v4143
    %v4154 = vmul.f32 %v4084, %v4144
    %v4155 = vmul.f32 %v4085, %v4145
    %v4156 = vmul.f32 %v4086, %v4146
    %v4157 = vmul.f32 %v4087, %v4147
    %v4158 = vmul.f32 %v4088, %v4148
    %v4159 = vlaneseq
    %v4160 = vshrl.u32 %v4159, 7
    %v4161 = vsub.s32 0, %v4160
    %v4162 = vrot.slane %v2455, %v4161
    %v4163 = vmul.f32 %v4149, %v4162
    %v4164 = vmul.f32 %v4150, %v4162
    %v4165 = vmul.f32 %v4151, %v4162
    %v4166 = vmul.f32 %v4152, %v4162
    %v4167 = vmul.f32 %v4153, %v4162
    %v4168 = vmul.f32 %v4154, %v4162
    %v4169 = vmul.f32 %v4155, %v4162
    %v4170 = vmul.f32 %v4156, %v4162
    %v4171 = vmul.f32 %v4157, %v4162
    %v4172 = vmul.f32 %v4158, %v4162
    %v4173 = vlaneseq
    %v4174 = vshrl.u32 %v4173, 7
    %v4175 = vsub.s32 1, %v4174
    %v4176 = vrot.slane %v2455, %v4175
    %v4177 = vadd.f32 %v4163, %v4176
    %v4178 = vadd.f32 %v4164, %v4176
    %v4179 = vadd.f32 %v4165, %v4176
    %v4180 = vadd.f32 %v4166, %v4176
    %v4181 = vadd.f32 %v4167, %v4176
    %v4182 = vadd.f32 %v4168, %v4176
    %v4183 = vadd.f32 %v4169, %v4176
    %v4184 = vadd.f32 %v4170, %v4176
    %v4185 = vadd.f32 %v4171, %v4176
    %v4186 = vadd.f32 %v4172, %v4176
    %s4187 = scalar_lea.vmem [#allocation11], 64
    %v4188 = vld [vmem:[%s4187] sm:$0xf]
    %v4189 = vld [vmem:[%s4187 + $0x4] sm:$0xf]
    %v4190 = vld [vmem:[%s4187 + $0x8] sm:$0xf]
    %v4191 = vld [vmem:[%s4187 + $0xc] sm:$0xf]
    %v4192 = vld [vmem:[%s4187 + $0x10] sm:$0xf]
    %v4193 = vld [vmem:[%s4187 + $0x14] sm:$0xf]
    %v4194 = vld [vmem:[%s4187 + $0x18] sm:$0xf]
    %v4195 = vld [vmem:[%s4187 + $0x1c] sm:$0xf]
    %v4196 = vld [vmem:[%s4187 + $0x20] sm:$0xf]
    %v4197 = vld [vmem:[%s4187 + $0x24] sm:$0xf]
    %v4198 = vld [vmem:[%s4187 + $0x28] sm:$0xf]
    %v4199 = vld [vmem:[%s4187 + $0x2c] sm:$0xf]
    %v4200 = vld [vmem:[%s4187 + $0x30] sm:$0xf]
    %v4201 = vld [vmem:[%s4187 + $0x34] sm:$0xf]
    %v4202 = vld [vmem:[%s4187 + $0x38] sm:$0xf]
    %v4203 = vld [vmem:[%s4187 + $0x3c] sm:$0xf]
    %v4204 = vpack.c.bf16 %v4178, %v4177
    %v4205 = vpack.c.bf16 %v4180, %v4179
    %v4206 = vpack.c.bf16 %v4182, %v4181
    %v4207 = vpack.c.bf16 %v4184, %v4183
    %v4208 = vpack.c.bf16 %v4186, %v4185
    %v4209 = vlaneseq
    %v4210 = vshrl.u32 %v4209, 7
    %v4211 = vsub.s32 4, %v4210
    %v4212 = vrot.slane %v2453, %v4211
    %v4229 = vunpack.c.l.b16 %v4188
    %v4230 = vunpack.c.l.b16 %v4189
    %v4231 = vunpack.c.l.b16 %v4190
    %v4232 = vunpack.c.l.b16 %v4191
    %v4233 = vunpack.c.l.b16 %v4192
    %v4234 = vunpack.c.l.b16 %v4193
    %v4235 = vunpack.c.l.b16 %v4194
    %v4236 = vunpack.c.l.b16 %v4195
    %v4237 = vunpack.c.l.b16 %v4196
    %v4238 = vunpack.c.l.b16 %v4197
    %v4239 = vunpack.c.l.b16 %v4198
    %v4240 = vunpack.c.l.b16 %v4199
    %v4241 = vunpack.c.l.b16 %v4200
    %v4242 = vunpack.c.l.b16 %v4201
    %v4243 = vunpack.c.l.b16 %v4202
    %v4244 = vunpack.c.l.b16 %v4203
    %v4245 = vpack.c.b16 %v4230, %v4229
    %v4246 = vpack.c.b16 %v4232, %v4231
    %v4247 = vpack.c.b16 %v4234, %v4233
    %v4248 = vpack.c.b16 %v4236, %v4235
    %v4249 = vpack.c.b16 %v4238, %v4237
    %v4250 = vpack.c.b16 %v4240, %v4239
    %v4251 = vpack.c.b16 %v4242, %v4241
    %v4252 = vpack.c.b16 %v4244, %v4243
    %4261 = vmatprep.subr.bf16.mxu0 0
    %4262 = vmatpush1.bf16.msra.mxu0 %v4252
    %4263 = vmatprep.subr.bf16.mxu0 0
    %4264 = vmatpush1.bf16.msra.mxu0 %v4251
    %4265 = vmatprep.subr.bf16.mxu0 0
    %4266 = vmatpush1.bf16.msra.mxu0 %v4250
    %4267 = vmatprep.subr.bf16.mxu0 0
    %4268 = vmatpush1.bf16.msra.mxu0 %v4249
    %4269 = vmatprep.subr.bf16.mxu0 0
    %4270 = vmatpush1.bf16.msra.mxu0 %v4248
    %4271 = vmatprep.subr.bf16.mxu0 0
    %4272 = vmatpush1.bf16.msra.mxu0 %v4247
    %4273 = vmatprep.subr.bf16.mxu0 0
    %4274 = vmatpush1.bf16.msra.mxu0 %v4246
    %4275 = vmatprep.subr.bf16.mxu0 0
    %4276 = vmatpush1.bf16.msra.mxu0 %v4245
    %4277 = vmatprep.subr.bf16.mxu0 0
    %4278 = vmatpush2.bf16.msra.mxu0 0
    %4279 = vmatprep.subr.bf16.mxu0 0
    %4280 = vmatpush2.bf16.msra.mxu0 0
    %4281 = vmatprep.subr.bf16.mxu0 0
    %4282 = vmatpush2.bf16.msra.mxu0 0
    %4283 = vmatprep.subr.bf16.mxu0 0
    %4284 = vmatpush2.bf16.msra.mxu0 0
    %4285 = vmatprep.subr.bf16.mxu0 0
    %4286 = vmatpush2.bf16.msra.mxu0 0
    %4287 = vmatprep.subr.bf16.mxu0 0
    %4288 = vmatpush2.bf16.msra.mxu0 0
    %4289 = vmatprep.subr.bf16.mxu0 0
    %4290 = vmatpush2.bf16.msra.mxu0 0
    %4291 = vmatprep.subr.bf16.mxu0 0
    %4292 = vmatpush2.bf16.msra.mxu0 0
    %4293 = vmatprep.mubr.bf16.mxu0 0
    %4294 = vmatmul.mubr.bf16.gmra.mxu0 %v4204
    %v4295 = vpop.f32.mrf.mxu0
    %v4296 = vadd.f32 %v4212, %v4295
    %v4297 = vpop.f32.mrf.mxu0
    %v4298 = vpop.f32.mrf.mxu0
    %v4299 = vadd.f32 %v4212, %v4298
    %v4300 = vpop.f32.mrf.mxu0
    %4301 = vmatprep.mubr.bf16.mxu0 0
    %4302 = vmatmul.mubr.bf16.gmra.mxu0 %v4205
    %v4303 = vpop.f32.mrf.mxu0
    %v4304 = vadd.f32 %v4212, %v4303
    %v4305 = vpop.f32.mrf.mxu0
    %v4306 = vpop.f32.mrf.mxu0
    %v4307 = vadd.f32 %v4212, %v4306
    %v4308 = vpop.f32.mrf.mxu0
    %4309 = vmatprep.mubr.bf16.mxu0 0
    %4310 = vmatmul.mubr.bf16.gmra.mxu0 %v4206
    %v4311 = vpop.f32.mrf.mxu0
    %v4312 = vadd.f32 %v4212, %v4311
    %v4313 = vpop.f32.mrf.mxu0
    %v4314 = vpop.f32.mrf.mxu0
    %v4315 = vadd.f32 %v4212, %v4314
    %v4316 = vpop.f32.mrf.mxu0
    %4317 = vmatprep.mubr.bf16.mxu0 0
    %4318 = vmatmul.mubr.bf16.gmra.mxu0 %v4207
    %v4319 = vpop.f32.mrf.mxu0
    %v4320 = vadd.f32 %v4212, %v4319
    %v4321 = vpop.f32.mrf.mxu0
    %v4322 = vpop.f32.mrf.mxu0
    %v4323 = vadd.f32 %v4212, %v4322
    %v4324 = vpop.f32.mrf.mxu0
    %4325 = vmatprep.mubr.bf16.mxu0 0
    %4326 = vmatmul.mubr.bf16.gmra.mxu0 %v4208
    %v4327 = vpop.f32.mrf.mxu0
    %v4328 = vadd.f32 %v4212, %v4327
    %v4329 = vpop.f32.mrf.mxu0
    %v4330 = vpop.f32.mrf.mxu0
    %v4331 = vadd.f32 %v4212, %v4330
    %v4332 = vpop.f32.mrf.mxu0
    %4333 = vdwg.mxu0
    %v4334 = vmul.f32 %v4296, 1.702
    %v4335 = vmul.f32 %v4299, 1.702
    %v4336 = vmul.f32 %v4304, 1.702
    %v4337 = vmul.f32 %v4307, 1.702
    %v4338 = vmul.f32 %v4312, 1.702
    %v4339 = vmul.f32 %v4315, 1.702
    %v4340 = vmul.f32 %v4320, 1.702
    %v4341 = vmul.f32 %v4323, 1.702
    %v4342 = vmul.f32 %v4328, 1.702
    %v4343 = vmul.f32 %v4331, 1.702
    %v4344 = vxor.u32 %v4334, 2147483648
    %v4345 = vxor.u32 %v4335, 2147483648
    %v4346 = vxor.u32 %v4336, 2147483648
    %v4347 = vxor.u32 %v4337, 2147483648
    %v4348 = vxor.u32 %v4338, 2147483648
    %v4349 = vxor.u32 %v4339, 2147483648
    %v4350 = vxor.u32 %v4340, 2147483648
    %v4351 = vxor.u32 %v4341, 2147483648
    %v4352 = vxor.u32 %v4342, 2147483648
    %v4353 = vxor.u32 %v4343, 2147483648
    %v4354 = vmul.f32 %v4344, 1.442695
    %v4355 = vpow.pop %v4354
    %v4356 = vmul.f32 %v4345, 1.442695
    %v4357 = vpow.pop %v4356
    %v4358 = vmul.f32 %v4346, 1.442695
    %v4359 = vpow.pop %v4358
    %v4360 = vmul.f32 %v4347, 1.442695
    %v4361 = vpow.pop %v4360
    %v4362 = vmul.f32 %v4348, 1.442695
    %v4363 = vpow.pop %v4362
    %v4364 = vmul.f32 %v4349, 1.442695
    %v4365 = vpow.pop %v4364
    %v4366 = vmul.f32 %v4350, 1.442695
    %v4367 = vpow.pop %v4366
    %v4368 = vmul.f32 %v4351, 1.442695
    %v4369 = vpow.pop %v4368
    %v4370 = vmul.f32 %v4352, 1.442695
    %v4371 = vpow.pop %v4370
    %v4372 = vmul.f32 %v4353, 1.442695
    %v4373 = vpow.pop %v4372
    %v4374 = vadd.f32 %v4355, 1.0
    %v4375 = vadd.f32 %v4357, 1.0
    %v4376 = vadd.f32 %v4359, 1.0
    %v4377 = vadd.f32 %v4361, 1.0
    %v4378 = vadd.f32 %v4363, 1.0
    %v4379 = vadd.f32 %v4365, 1.0
    %v4380 = vadd.f32 %v4367, 1.0
    %v4381 = vadd.f32 %v4369, 1.0
    %v4382 = vadd.f32 %v4371, 1.0
    %v4383 = vadd.f32 %v4373, 1.0
    %v4384 = vrcp.pop %v4374
    %v4385 = vmul.f32 1.0, %v4384
    %v4386 = vrcp.pop %v4375
    %v4387 = vmul.f32 1.0, %v4386
    %v4388 = vrcp.pop %v4376
    %v4389 = vmul.f32 1.0, %v4388
    %v4390 = vrcp.pop %v4377
    %v4391 = vmul.f32 1.0, %v4390
    %v4392 = vrcp.pop %v4378
    %v4393 = vmul.f32 1.0, %v4392
    %v4394 = vrcp.pop %v4379
    %v4395 = vmul.f32 1.0, %v4394
    %v4396 = vrcp.pop %v4380
    %v4397 = vmul.f32 1.0, %v4396
    %v4398 = vrcp.pop %v4381
    %v4399 = vmul.f32 1.0, %v4398
    %v4400 = vrcp.pop %v4382
    %v4401 = vmul.f32 1.0, %v4400
    %v4402 = vrcp.pop %v4383
    %v4403 = vmul.f32 1.0, %v4402
    %v4404 = vmul.f32 %v4296, %v4385
    %v4405 = vmul.f32 %v4299, %v4387
    %v4406 = vmul.f32 %v4304, %v4389
    %v4407 = vmul.f32 %v4307, %v4391
    %v4408 = vmul.f32 %v4312, %v4393
    %v4409 = vmul.f32 %v4315, %v4395
    %v4410 = vmul.f32 %v4320, %v4397
    %v4411 = vmul.f32 %v4323, %v4399
    %v4412 = vmul.f32 %v4328, %v4401
    %v4413 = vmul.f32 %v4331, %v4403
    %s4414 = scalar_lea.vmem [#allocation13], 64
    %v4415 = vld [vmem:[%s4414] sm:$0xf]
    %v4416 = vld [vmem:[%s4414 + $0x4] sm:$0xf]
    %v4417 = vld [vmem:[%s4414 + $0x8] sm:$0xf]
    %v4418 = vld [vmem:[%s4414 + $0xc] sm:$0xf]
    %v4419 = vld [vmem:[%s4414 + $0x10] sm:$0xf]
    %v4420 = vld [vmem:[%s4414 + $0x14] sm:$0xf]
    %v4421 = vld [vmem:[%s4414 + $0x18] sm:$0xf]
    %v4422 = vld [vmem:[%s4414 + $0x1c] sm:$0xf]
    %v4423 = vld [vmem:[%s4414 + $0x20] sm:$0xf]
    %v4424 = vld [vmem:[%s4414 + $0x24] sm:$0xf]
    %v4425 = vld [vmem:[%s4414 + $0x28] sm:$0xf]
    %v4426 = vld [vmem:[%s4414 + $0x2c] sm:$0xf]
    %v4427 = vld [vmem:[%s4414 + $0x30] sm:$0xf]
    %v4428 = vld [vmem:[%s4414 + $0x34] sm:$0xf]
    %v4429 = vld [vmem:[%s4414 + $0x38] sm:$0xf]
    %v4430 = vld [vmem:[%s4414 + $0x3c] sm:$0xf]
    %v4431 = vpack.c.bf16 %v4405, %v4404
    %v4432 = vpack.c.bf16 %v4407, %v4406
    %v4433 = vpack.c.bf16 %v4409, %v4408
    %v4434 = vpack.c.bf16 %v4411, %v4410
    %v4435 = vpack.c.bf16 %v4413, %v4412
    %v4436 = vlaneseq
    %v4437 = vshrl.u32 %v4436, 7
    %v4438 = vsub.s32 5, %v4437
    %v4439 = vrot.slane %v2453, %v4438
    %v4456 = vunpack.c.l.b16 %v4415
    %v4457 = vunpack.c.l.b16 %v4416
    %v4458 = vunpack.c.l.b16 %v4417
    %v4459 = vunpack.c.l.b16 %v4418
    %v4460 = vunpack.c.l.b16 %v4419
    %v4461 = vunpack.c.l.b16 %v4420
    %v4462 = vunpack.c.l.b16 %v4421
    %v4463 = vunpack.c.l.b16 %v4422
    %v4464 = vunpack.c.l.b16 %v4423
    %v4465 = vunpack.c.l.b16 %v4424
    %v4466 = vunpack.c.l.b16 %v4425
    %v4467 = vunpack.c.l.b16 %v4426
    %v4468 = vunpack.c.l.b16 %v4427
    %v4469 = vunpack.c.l.b16 %v4428
    %v4470 = vunpack.c.l.b16 %v4429
    %v4471 = vunpack.c.l.b16 %v4430
    %v4472 = vpack.c.b16 %v4457, %v4456
    %v4473 = vpack.c.b16 %v4459, %v4458
    %v4474 = vpack.c.b16 %v4461, %v4460
    %v4475 = vpack.c.b16 %v4463, %v4462
    %v4476 = vpack.c.b16 %v4465, %v4464
    %v4477 = vpack.c.b16 %v4467, %v4466
    %v4478 = vpack.c.b16 %v4469, %v4468
    %v4479 = vpack.c.b16 %v4471, %v4470
    %4488 = vmatprep.subr.bf16.mxu0 0
    %4489 = vmatpush1.bf16.msra.mxu0 %v4479
    %4490 = vmatprep.subr.bf16.mxu0 0
    %4491 = vmatpush1.bf16.msra.mxu0 %v4478
    %4492 = vmatprep.subr.bf16.mxu0 0
    %4493 = vmatpush1.bf16.msra.mxu0 %v4477
    %4494 = vmatprep.subr.bf16.mxu0 0
    %4495 = vmatpush1.bf16.msra.mxu0 %v4476
    %4496 = vmatprep.subr.bf16.mxu0 0
    %4497 = vmatpush1.bf16.msra.mxu0 %v4475
    %4498 = vmatprep.subr.bf16.mxu0 0
    %4499 = vmatpush1.bf16.msra.mxu0 %v4474
    %4500 = vmatprep.subr.bf16.mxu0 0
    %4501 = vmatpush1.bf16.msra.mxu0 %v4473
    %4502 = vmatprep.subr.bf16.mxu0 0
    %4503 = vmatpush1.bf16.msra.mxu0 %v4472
    %4504 = vmatprep.subr.bf16.mxu0 0
    %4505 = vmatpush2.bf16.msra.mxu0 0
    %4506 = vmatprep.subr.bf16.mxu0 0
    %4507 = vmatpush2.bf16.msra.mxu0 0
    %4508 = vmatprep.subr.bf16.mxu0 0
    %4509 = vmatpush2.bf16.msra.mxu0 0
    %4510 = vmatprep.subr.bf16.mxu0 0
    %4511 = vmatpush2.bf16.msra.mxu0 0
    %4512 = vmatprep.subr.bf16.mxu0 0
    %4513 = vmatpush2.bf16.msra.mxu0 0
    %4514 = vmatprep.subr.bf16.mxu0 0
    %4515 = vmatpush2.bf16.msra.mxu0 0
    %4516 = vmatprep.subr.bf16.mxu0 0
    %4517 = vmatpush2.bf16.msra.mxu0 0
    %4518 = vmatprep.subr.bf16.mxu0 0
    %4519 = vmatpush2.bf16.msra.mxu0 0
    %4520 = vmatprep.mubr.bf16.mxu0 0
    %4521 = vmatmul.mubr.bf16.gmra.mxu0 %v4431
    %v4522 = vpop.f32.mrf.mxu0
    %v4523 = vadd.f32 %v4439, %v4522
    %v4524 = vpop.f32.mrf.mxu0
    %v4525 = vpop.f32.mrf.mxu0
    %v4526 = vadd.f32 %v4439, %v4525
    %v4527 = vpop.f32.mrf.mxu0
    %4528 = vmatprep.mubr.bf16.mxu0 0
    %4529 = vmatmul.mubr.bf16.gmra.mxu0 %v4432
    %v4530 = vpop.f32.mrf.mxu0
    %v4531 = vadd.f32 %v4439, %v4530
    %v4532 = vpop.f32.mrf.mxu0
    %v4533 = vpop.f32.mrf.mxu0
    %v4534 = vadd.f32 %v4439, %v4533
    %v4535 = vpop.f32.mrf.mxu0
    %4536 = vmatprep.mubr.bf16.mxu0 0
    %4537 = vmatmul.mubr.bf16.gmra.mxu0 %v4433
    %v4538 = vpop.f32.mrf.mxu0
    %v4539 = vadd.f32 %v4439, %v4538
    %v4540 = vpop.f32.mrf.mxu0
    %v4541 = vpop.f32.mrf.mxu0
    %v4542 = vadd.f32 %v4439, %v4541
    %v4543 = vpop.f32.mrf.mxu0
    %4544 = vmatprep.mubr.bf16.mxu0 0
    %4545 = vmatmul.mubr.bf16.gmra.mxu0 %v4434
    %v4546 = vpop.f32.mrf.mxu0
    %v4547 = vadd.f32 %v4439, %v4546
    %v4548 = vpop.f32.mrf.mxu0
    %v4549 = vpop.f32.mrf.mxu0
    %v4550 = vadd.f32 %v4439, %v4549
    %v4551 = vpop.f32.mrf.mxu0
    %4552 = vmatprep.mubr.bf16.mxu0 0
    %4553 = vmatmul.mubr.bf16.gmra.mxu0 %v4435
    %v4554 = vpop.f32.mrf.mxu0
    %v4555 = vadd.f32 %v4439, %v4554
    %v4556 = vpop.f32.mrf.mxu0
    %v4557 = vpop.f32.mrf.mxu0
    %v4558 = vadd.f32 %v4439, %v4557
    %v4559 = vpop.f32.mrf.mxu0
    %4560 = vdwg.mxu0
    %v4561 = vadd.f32 %v4029, %v4523
    %v4562 = vadd.f32 %v4030, %v4526
    %v4563 = vadd.f32 %v4031, %v4531
    %v4564 = vadd.f32 %v4032, %v4534
    %v4565 = vadd.f32 %v4033, %v4539
    %v4566 = vadd.f32 %v4034, %v4542
    %v4567 = vadd.f32 %v4035, %v4547
    %v4568 = vadd.f32 %v4036, %v4550
    %v4569 = vadd.f32 %v4037, %v4555
    %v4570 = vadd.f32 %v4038, %v4558
    %s4571 = scalar_lea.vmem [#allocation16], 160
    %4572 = vst [vmem:[%s4571] sm:$0xff] %v4561
    %4573 = vst [vmem:[%s4571 + $0x8] sm:$0xff] %v4562
    %4574 = vst [vmem:[%s4571 + $0x10] sm:$0xff] %v4563
    %4575 = vst [vmem:[%s4571 + $0x18] sm:$0xff] %v4564
    %4576 = vst [vmem:[%s4571 + $0x20] sm:$0xff] %v4565
    %4577 = vst [vmem:[%s4571 + $0x28] sm:$0xff] %v4566
    %4578 = vst [vmem:[%s4571 + $0x30] sm:$0xff] %v4567
    %4579 = vst [vmem:[%s4571 + $0x38] sm:$0xff] %v4568
    %4580 = vst [vmem:[%s4571 + $0x40] sm:$0xff] %v4569
    %4581 = vst [vmem:[%s4571 + $0x48] sm:$0xff] %v4570
    %v4583 = vrot.slane %v4566, 7
    %vm4585 = vcmask 1040384
    %v4586 = vsel %vm4585, %v4561, %v4583
    %v4587 = vld [vmem:[#allocation7 + $0x2] sm:$0x1]
    %v4588 = vld [vmem:[#allocation7 + $0x3] sm:$0x1]
    %vm4589 = vcmask 1041408
    %v4590 = vsel %vm4589, %v4586, 0.0
    %4591 = vadd.xlane.f32.xlu0 %v4590
    %v4592 = vpop.xlane.xlu0 %4591
    %v4593 = vmul.f32 %v4592, 0.03125
    %v4594 = vsub.f32 %v4586, %v4593
    %v4595 = vsel %vm207, %v4594, 0.0
    %v4596 = vmul.f32 %v4595, %v4595
    %v4597 = vsel %vm4589, %v4596, 0.0
    %4598 = vadd.xlane.f32.xlu0 %v4597
    %v4599 = vpop.xlane.xlu0 %4598
    %v4600 = vmul.f32 %v4599, 0.03125
    %v4601 = vadd.f32 %v4600, 1e-05
    %v4602 = vrsqrt.pop %v4601
    %v4603 = vmul.f32 %v4595, %v4602
    %v4604 = vlaneseq
    %v4605 = vshrl.u32 %v4604, 7
    %v4606 = vsub.s32 0, %v4605
    %v4607 = vrot.slane %v4587, %v4606
    %v4608 = vmul.f32 %v4603, %v4607
    %v4609 = vlaneseq
    %v4610 = vshrl.u32 %v4609, 7
    %v4611 = vsub.s32 0, %v4610
    %v4612 = vrot.slane %v4588, %v4611
    %v4613 = vadd.f32 %v4608, %v4612
    %4614 = vst [vmem:[#allocation17] sm:$0x3] %v4613
    // Predicated region
    $region66: #{tpu_custom_call.1} parent=1 // pred_check
      _
    $region67: #{tpu_custom_call.1} parent=1 // pred_check_branch
      %4616 = sbr.rel (0) target = $region69
    $region68: #{tpu_custom_call.1} parent=1 // pred_region
      %s4618 = ssub.s32 3840, 3840
      %4619 = vsyncadd [#allocation4], %s4618
      %s4620 = sshll.u32 [#allocation16], 4
      %s4621 = int_to_ptr.vmem [resolvable:$true] %s4620
      %4626 = dma.vmem_to_hbm [thread:$0]  %s4621, 3840, %s8, [#allocation4], 128, 128, 8
    $region69: #{tpu_custom_call.1} parent=1 // pred_fallthru
      _
    // Predicated region
    $region70: #{tpu_custom_call.1} parent=1 // pred_check
      _
    $region71: #{tpu_custom_call.1} parent=1 // pred_check_branch
      %4628 = sbr.rel (0) target = $region73
    $region72: #{tpu_custom_call.1} parent=1 // pred_region
      %s4630 = ssub.s32 32, 32
      %4631 = vsyncadd [#allocation18], %s4630
      %s4633 = sshll.u32 [#allocation17], 4
      %s4634 = int_to_ptr.vmem [resolvable:$true] %s4633
      %4636 = dma.vmem_to_hbm [thread:$0]  %s4634, 32, %s9, [#allocation18]
    $region73: #{tpu_custom_call.1} parent=1 // pred_fallthru
      _
    // Predicated region
    $region74: #{tpu_custom_call.1} parent=1 // pred_check
      _
    $region75: #{tpu_custom_call.1} parent=1 // pred_check_branch
      %4638 = sbr.rel (0) target = $region77
    $region76: #{tpu_custom_call.1} parent=1 // pred_region
      %4639 = dma.done [#allocation4], 3840
    $region77: #{tpu_custom_call.1} parent=1 // pred_fallthru
      _
    // Predicated region
    $region78: #{tpu_custom_call.1} parent=1 // pred_check
      _
    $region79: #{tpu_custom_call.1} parent=1 // pred_check_branch
      %4641 = sbr.rel (0) target = $region81
    $region80: #{tpu_custom_call.1} parent=1 // pred_region
      %4642 = dma.done [#allocation18], 32
    $region81: #{tpu_custom_call.1} parent=1 // pred_fallthru
      _
    %4643 = vsyncpa [#allocation3], 1
    %4644 = vsyncpa [#allocation6], 1
    %4645 = vsyncpa [#allocation9], 1
    %4646 = vsyncpa [#allocation12], 1
    %4647 = vsyncpa [#allocation15], 1
    %4648 = vsyncpa [#allocation4], 1
    %4649 = vsyncpa [#allocation18], 1

</llo_original>
